<compile_context>
chip_gen: v7x
topology: tpu7x:2x2x1
jax: 0.10.0
libtpu: 0.0.40
codegen_flags: <defaults>
</compile_context>

<pallas_src>
import jax
import jax.numpy as jnp
import numpy as np
from jax import lax
from jax.experimental import pallas as pl
from jax.experimental.pallas import tpu as pltpu


def _make_attention_kernel(num_heads: int, head_dim: int, dim: int):
    H, D, C = num_heads, head_dim, dim

    def kernel(x_ref, wqkv_ref, bqkv_ref, wp_ref, bp_ref, kbias_ref,
               o_ref, cat_ref):
        x = x_ref[0]                                     # (n_pad, C) bf16

        # --- fused QKV projection: one wide MXU matmul, f32 accumulation ---
        # (softmax scale already folded into the Q columns on the host)
        qkv = jnp.dot(x, wqkv_ref[...],
                      preferred_element_type=jnp.float32) + bqkv_ref[...]
        qkv = qkv.astype(jnp.bfloat16)                   # single cast pass

        kbias = kbias_ref[...]                           # (1, n_pad) f32 additive pad mask

        # --- per-head attention; outputs concatenated head-major in VMEM ---
        for h in range(H):                               # static unroll (H small)
            qh = qkv[:, h * D:(h + 1) * D]
            kh = qkv[:, C + h * D:C + (h + 1) * D]
            vh = qkv[:, 2 * C + h * D:2 * C + (h + 1) * D]

            # scores: contract last dim of q and k (no k.T copy) -> (n_pad, n_pad) f32
            s = lax.dot_general(qh, kh, (((1,), (1,)), ((), ())),
                                preferred_element_type=jnp.float32)
            s = s + kbias                                # mask padded key columns

            # numerically stable softmax, kept in f32
            m = jnp.max(s, axis=-1, keepdims=True)
            e = jnp.exp(s - m)
            denom = jnp.sum(e, axis=-1, keepdims=True)
            p = e * pl.reciprocal(denom, approx=True)

            oh = jnp.dot(p.astype(jnp.bfloat16), vh,
                         preferred_element_type=jnp.float32)   # (n_pad, D)
            cat_ref[:, h * D:(h + 1) * D] = oh.astype(jnp.bfloat16)

        # --- single full-depth output projection (K = C) + bias ---
        out = jnp.dot(cat_ref[...], wp_ref[...],
                      preferred_element_type=jnp.float32) + bp_ref[...]
        o_ref[0] = out.astype(o_ref.dtype)

    return kernel


def attention_pallas(x, w_qkv, b_qkv, w_proj, b_proj, *, num_heads, qk_scale=None):
    """x: (B,N,C); w_qkv: (C,3C) [in,out]; b_qkv: (3C,); w_proj: (C,C) [in,out]; b_proj: (C,)."""
    B, N, C = x.shape
    H = num_heads
    D = C // H
    scale = qk_scale if qk_scale is not None else D ** (-0.5)
    out_dtype = x.dtype

    # --- host-side parameter prep (done once; free relative to the kernel) ---
    # Fold the softmax scale into the Q columns of the fused QKV weight/bias.
    w_fused = jnp.asarray(w_qkv, jnp.float32)
    w_fused = w_fused.at[:, :C].multiply(scale)
    b_fused = jnp.asarray(b_qkv, jnp.float32)
    b_fused = b_fused.at[:C].multiply(scale)
    w_fused = w_fused.astype(jnp.bfloat16)               # (C, 3C) bf16, resident
    b_fused = b_fused.reshape(1, 3 * C)                  # (1, 3C) f32

    wp = jnp.asarray(w_proj, jnp.bfloat16)                # (C, C) bf16, resident
    bp = jnp.asarray(b_proj, jnp.float32).reshape(1, C)   # (1, C) f32

    x_in = x.astype(jnp.bfloat16)

    # Pad N to a multiple of 128 (lane dim) so score/softmax tiles are
    # lane-dense; padded key columns are masked via the additive bias row.
    n_pad = ((N + 127) // 128) * 128
    if n_pad != N:
        x_in = jnp.pad(x_in, ((0, 0), (0, n_pad - N), (0, 0)))
    key_bias = jnp.where(jnp.arange(n_pad) < N, 0.0, -1e30)
    key_bias = key_bias.astype(jnp.float32).reshape(1, n_pad)

    kernel = _make_attention_kernel(H, D, C)

    out = pl.pallas_call(
        kernel,
        out_shape=jax.ShapeDtypeStruct((B, n_pad, C), out_dtype),
        grid_spec=pltpu.PrefetchScalarGridSpec(
            num_scalar_prefetch=0,
            grid=(B,),
            in_specs=[
                pl.BlockSpec((1, n_pad, C), lambda b: (b, 0, 0)),   # x (per batch elem)
                pl.BlockSpec((C, 3 * C), lambda b: (0, 0)),         # fused W_qkv (resident)
                pl.BlockSpec((1, 3 * C), lambda b: (0, 0)),         # fused b_qkv (resident)
                pl.BlockSpec((C, C), lambda b: (0, 0)),             # W_proj (resident)
                pl.BlockSpec((1, C), lambda b: (0, 0)),             # b_proj (resident)
                pl.BlockSpec((1, n_pad), lambda b: (0, 0)),         # key-pad additive bias
            ],
            out_specs=pl.BlockSpec((1, n_pad, C), lambda b: (b, 0, 0)),
            scratch_shapes=[pltpu.VMEM((n_pad, C), jnp.bfloat16)],  # head-concat scratch
        ),
        compiler_params=pltpu.CompilerParams(
            dimension_semantics=("parallel",)),
    )(x_in, w_fused, b_fused, wp, bp, key_bias)

    if n_pad != N:
        out = out[:, :N, :]
    return out


def attention_reference(x, w_qkv, b_qkv, w_proj, b_proj, *, num_heads):
    """Pure-JAX f32 reference mirroring the PyTorch forward."""
    B, N, C = x.shape
    head_dim = C // num_heads
    scale = head_dim ** (-0.5)
    qkv = x @ w_qkv + b_qkv                               # (B, N, 3C)
    qkv = qkv.reshape(B, N, 3, num_heads, head_dim).transpose(2, 0, 3, 1, 4)
    q, k, v = qkv[0], qkv[1], qkv[2]                      # (B, H, N, D)
    attn = jnp.einsum("bhnd,bhmd->bhnm", q, k) * scale
    attn = jax.nn.softmax(attn, axis=-1)
    out = jnp.einsum("bhnm,bhmd->bhnd", attn, v)          # (B, H, N, D)
    out = out.transpose(0, 2, 1, 3).reshape(B, N, C)
    return out @ w_proj + b_proj


if __name__ == "__main__":
    B, N, C = 2, 8, 32
    num_heads = 8

    key = jax.random.PRNGKey(0)
    kx, kw1, kb1, kw2, kb2 = jax.random.split(key, 5)

    x = jax.random.normal(kx, (B, N, C), dtype=jnp.float32)
    # Deterministic parameter init (mimics nn.Linear scale, stored as [in, out]).
    w_qkv = jax.random.normal(kw1, (C, 3 * C), dtype=jnp.float32) * (1.0 / np.sqrt(C))
    b_qkv = jax.random.normal(kb1, (3 * C,), dtype=jnp.float32) * 0.01
    w_proj = jax.random.normal(kw2, (C, C), dtype=jnp.float32) * (1.0 / np.sqrt(C))
    b_proj = jax.random.normal(kb2, (C,), dtype=jnp.float32) * 0.01

    out = attention_pallas(x, w_qkv, b_qkv, w_proj, b_proj, num_heads=num_heads)
    out = jax.block_until_ready(out)

    ref = attention_reference(x, w_qkv, b_qkv, w_proj, b_proj, num_heads=num_heads)
    # bf16 MXU operands (with f32 accumulation) loosen the tolerance vs the
    # pure-f32 reference; ~1e-2 relative error is expected.
    np.testing.assert_allclose(np.asarray(out), np.asarray(ref), rtol=5e-2, atol=5e-2)

    print("KERNEL_OK")
</pallas_src>

<mosaic_0001>
module attributes {stable_mosaic.version = 11 : i64} {
  func.func @kernel(%arg0: i32, %arg1: memref<1x128x32xbf16, #tpu.memory_space<vmem>>, %arg2: memref<32x96xbf16, #tpu.memory_space<vmem>>, %arg3: memref<1x96xf32, #tpu.memory_space<vmem>>, %arg4: memref<32x32xbf16, #tpu.memory_space<vmem>>, %arg5: memref<1x32xf32, #tpu.memory_space<vmem>>, %arg6: memref<1x128xf32, #tpu.memory_space<vmem>>, %arg7: memref<1x128x32xf32, #tpu.memory_space<vmem>>, %arg8: memref<128x32xbf16, #tpu.memory_space<vmem>>) attributes {dimension_semantics = [#tpu.dimension_semantics<parallel>], iteration_bounds = array<i64: 2>, scalar_prefetch = 0 : i64, scratch_operands = 1 : i64, tpu.core_type = #tpu.core_type<tc>, window_params = [{transform_indices = @transform_0, window_bounds = array<i64: 1, 128, 32>}, {pipeline_mode = #tpu.pipeline_mode<synchronous>, transform_indices = @transform_1, window_bounds = array<i64: 32, 96>}, {pipeline_mode = #tpu.pipeline_mode<synchronous>, transform_indices = @transform_2, window_bounds = array<i64: 1, 96>}, {pipeline_mode = #tpu.pipeline_mode<synchronous>, transform_indices = @transform_3, window_bounds = array<i64: 32, 32>}, {pipeline_mode = #tpu.pipeline_mode<synchronous>, transform_indices = @transform_4, window_bounds = array<i64: 1, 32>}, {pipeline_mode = #tpu.pipeline_mode<synchronous>, transform_indices = @transform_5, window_bounds = array<i64: 1, 128>}, {transform_indices = @transform_6, window_bounds = array<i64: 1, 128, 32>}]} {
    %c0 = arith.constant 0 : index
    %c0_0 = arith.constant 0 : index
    %c0_1 = arith.constant 0 : index
    %0 = vector.load %arg1[%c0, %c0_0, %c0_1] : memref<1x128x32xbf16, #tpu.memory_space<vmem>>, vector<1x128x32xbf16>
    %1 = vector.shape_cast %0 : vector<1x128x32xbf16> to vector<128x32xbf16>
    %c0_2 = arith.constant 0 : index
    %c0_3 = arith.constant 0 : index
    %2 = vector.load %arg2[%c0_2, %c0_3] : memref<32x96xbf16, #tpu.memory_space<vmem>>, vector<32x96xbf16>
    %cst = arith.constant dense<0.000000e+00> : vector<128x96xf32>
    %3 = tpu.matmul %1, %2, %cst {dimension_numbers = #tpu.dot_dimension_numbers<[1], [0], [0], [1], [0, 0, 1, 1], [], []>} : vector<128x32xbf16>, vector<32x96xbf16>, vector<128x96xf32> -> vector<128x96xf32>
    %c0_4 = arith.constant 0 : index
    %c0_5 = arith.constant 0 : index
    %4 = vector.load %arg3[%c0_4, %c0_5] : memref<1x96xf32, #tpu.memory_space<vmem>>, vector<1x96xf32>
    %5 = vector.broadcast %4 : vector<1x96xf32> to vector<128x96xf32>
    %6 = arith.addf %3, %5 : vector<128x96xf32>
    %7 = arith.truncf %6 : vector<128x96xf32> to vector<128x96xbf16>
    %c0_6 = arith.constant 0 : index
    %c0_7 = arith.constant 0 : index
    %8 = vector.load %arg6[%c0_6, %c0_7] : memref<1x128xf32, #tpu.memory_space<vmem>>, vector<1x128xf32>
    %9 = vector.extract_strided_slice %7 {offsets = [0, 0], sizes = [128, 4], strides = [1, 1]} : vector<128x96xbf16> to vector<128x4xbf16>
    %10 = vector.extract_strided_slice %7 {offsets = [0, 32], sizes = [128, 4], strides = [1, 1]} : vector<128x96xbf16> to vector<128x4xbf16>
    %11 = vector.extract_strided_slice %7 {offsets = [0, 64], sizes = [128, 4], strides = [1, 1]} : vector<128x96xbf16> to vector<128x4xbf16>
    %cst_8 = arith.constant dense<0.000000e+00> : vector<128x128xf32>
    %12 = tpu.matmul %9, %10, %cst_8 {dimension_numbers = #tpu.dot_dimension_numbers<[1], [1], [0], [0], [0, 0, 1, 0], [], []>} : vector<128x4xbf16>, vector<128x4xbf16>, vector<128x128xf32> -> vector<128x128xf32>
    %13 = vector.broadcast %8 : vector<1x128xf32> to vector<128x128xf32>
    %14 = arith.addf %12, %13 : vector<128x128xf32>
    %cst_9 = arith.constant dense<0xFF800000> : vector<128xf32>
    %15 = vector.multi_reduction <maximumf>, %14, %cst_9 [1] : vector<128x128xf32> to vector<128xf32>
    %16 = vector.shape_cast %15 : vector<128xf32> to vector<128x1xf32>
    %17 = vector.broadcast %16 : vector<128x1xf32> to vector<128x128xf32>
    %18 = arith.subf %14, %17 : vector<128x128xf32>
    %19 = math.exp %18 : vector<128x128xf32>
    %cst_10 = arith.constant dense<0.000000e+00> : vector<128xf32>
    %20 = vector.multi_reduction <add>, %19, %cst_10 [1] : vector<128x128xf32> to vector<128xf32>
    %21 = vector.shape_cast %20 : vector<128xf32> to vector<128x1xf32>
    %22 = tpu.reciprocal %21 {approx = true} : vector<128x1xf32> -> vector<128x1xf32>
    %23 = vector.broadcast %22 : vector<128x1xf32> to vector<128x128xf32>
    %24 = arith.mulf %19, %23 : vector<128x128xf32>
    %25 = arith.truncf %24 : vector<128x128xf32> to vector<128x128xbf16>
    %cst_11 = arith.constant dense<0.000000e+00> : vector<128x4xf32>
    %26 = tpu.matmul %25, %11, %cst_11 {dimension_numbers = #tpu.dot_dimension_numbers<[1], [0], [0], [1], [0, 0, 1, 1], [], []>} : vector<128x128xbf16>, vector<128x4xbf16>, vector<128x4xf32> -> vector<128x4xf32>
    %27 = arith.truncf %26 : vector<128x4xf32> to vector<128x4xbf16>
    %c0_12 = arith.constant 0 : index
    %c0_13 = arith.constant 0 : index
    %28 = vector.load %arg8[%c0_12, %c0_13] : memref<128x32xbf16, #tpu.memory_space<vmem>>, vector<128x4xbf16>
    tpu.vector_store %arg8[%c0_12, %c0_13], %27 {strides = array<i32>} : memref<128x32xbf16, #tpu.memory_space<vmem>>, vector<128x4xbf16>,
    %29 = vector.extract_strided_slice %7 {offsets = [0, 4], sizes = [128, 4], strides = [1, 1]} : vector<128x96xbf16> to vector<128x4xbf16>
    %30 = vector.extract_strided_slice %7 {offsets = [0, 36], sizes = [128, 4], strides = [1, 1]} : vector<128x96xbf16> to vector<128x4xbf16>
    %31 = vector.extract_strided_slice %7 {offsets = [0, 68], sizes = [128, 4], strides = [1, 1]} : vector<128x96xbf16> to vector<128x4xbf16>
    %cst_14 = arith.constant dense<0.000000e+00> : vector<128x128xf32>
    %32 = tpu.matmul %29, %30, %cst_14 {dimension_numbers = #tpu.dot_dimension_numbers<[1], [1], [0], [0], [0, 0, 1, 0], [], []>} : vector<128x4xbf16>, vector<128x4xbf16>, vector<128x128xf32> -> vector<128x128xf32>
    %33 = vector.broadcast %8 : vector<1x128xf32> to vector<128x128xf32>
    %34 = arith.addf %32, %33 : vector<128x128xf32>
    %cst_15 = arith.constant dense<0xFF800000> : vector<128xf32>
    %35 = vector.multi_reduction <maximumf>, %34, %cst_15 [1] : vector<128x128xf32> to vector<128xf32>
    %36 = vector.shape_cast %35 : vector<128xf32> to vector<128x1xf32>
    %37 = vector.broadcast %36 : vector<128x1xf32> to vector<128x128xf32>
    %38 = arith.subf %34, %37 : vector<128x128xf32>
    %39 = math.exp %38 : vector<128x128xf32>
    %cst_16 = arith.constant dense<0.000000e+00> : vector<128xf32>
    %40 = vector.multi_reduction <add>, %39, %cst_16 [1] : vector<128x128xf32> to vector<128xf32>
    %41 = vector.shape_cast %40 : vector<128xf32> to vector<128x1xf32>
    %42 = tpu.reciprocal %41 {approx = true} : vector<128x1xf32> -> vector<128x1xf32>
    %43 = vector.broadcast %42 : vector<128x1xf32> to vector<128x128xf32>
    %44 = arith.mulf %39, %43 : vector<128x128xf32>
    %45 = arith.truncf %44 : vector<128x128xf32> to vector<128x128xbf16>
    %cst_17 = arith.constant dense<0.000000e+00> : vector<128x4xf32>
    %46 = tpu.matmul %45, %31, %cst_17 {dimension_numbers = #tpu.dot_dimension_numbers<[1], [0], [0], [1], [0, 0, 1, 1], [], []>} : vector<128x128xbf16>, vector<128x4xbf16>, vector<128x4xf32> -> vector<128x4xf32>
    %47 = arith.truncf %46 : vector<128x4xf32> to vector<128x4xbf16>
    %c0_18 = arith.constant 0 : index
    %c4 = arith.constant 4 : index
    %48 = vector.load %arg8[%c0_18, %c4] : memref<128x32xbf16, #tpu.memory_space<vmem>>, vector<128x4xbf16>
    tpu.vector_store %arg8[%c0_18, %c4], %47 {strides = array<i32>} : memref<128x32xbf16, #tpu.memory_space<vmem>>, vector<128x4xbf16>,
    %49 = vector.extract_strided_slice %7 {offsets = [0, 8], sizes = [128, 4], strides = [1, 1]} : vector<128x96xbf16> to vector<128x4xbf16>
    %50 = vector.extract_strided_slice %7 {offsets = [0, 40], sizes = [128, 4], strides = [1, 1]} : vector<128x96xbf16> to vector<128x4xbf16>
    %51 = vector.extract_strided_slice %7 {offsets = [0, 72], sizes = [128, 4], strides = [1, 1]} : vector<128x96xbf16> to vector<128x4xbf16>
    %cst_19 = arith.constant dense<0.000000e+00> : vector<128x128xf32>
    %52 = tpu.matmul %49, %50, %cst_19 {dimension_numbers = #tpu.dot_dimension_numbers<[1], [1], [0], [0], [0, 0, 1, 0], [], []>} : vector<128x4xbf16>, vector<128x4xbf16>, vector<128x128xf32> -> vector<128x128xf32>
    %53 = vector.broadcast %8 : vector<1x128xf32> to vector<128x128xf32>
    %54 = arith.addf %52, %53 : vector<128x128xf32>
    %cst_20 = arith.constant dense<0xFF800000> : vector<128xf32>
    %55 = vector.multi_reduction <maximumf>, %54, %cst_20 [1] : vector<128x128xf32> to vector<128xf32>
    %56 = vector.shape_cast %55 : vector<128xf32> to vector<128x1xf32>
    %57 = vector.broadcast %56 : vector<128x1xf32> to vector<128x128xf32>
    %58 = arith.subf %54, %57 : vector<128x128xf32>
    %59 = math.exp %58 : vector<128x128xf32>
    %cst_21 = arith.constant dense<0.000000e+00> : vector<128xf32>
    %60 = vector.multi_reduction <add>, %59, %cst_21 [1] : vector<128x128xf32> to vector<128xf32>
    %61 = vector.shape_cast %60 : vector<128xf32> to vector<128x1xf32>
    %62 = tpu.reciprocal %61 {approx = true} : vector<128x1xf32> -> vector<128x1xf32>
    %63 = vector.broadcast %62 : vector<128x1xf32> to vector<128x128xf32>
    %64 = arith.mulf %59, %63 : vector<128x128xf32>
    %65 = arith.truncf %64 : vector<128x128xf32> to vector<128x128xbf16>
    %cst_22 = arith.constant dense<0.000000e+00> : vector<128x4xf32>
    %66 = tpu.matmul %65, %51, %cst_22 {dimension_numbers = #tpu.dot_dimension_numbers<[1], [0], [0], [1], [0, 0, 1, 1], [], []>} : vector<128x128xbf16>, vector<128x4xbf16>, vector<128x4xf32> -> vector<128x4xf32>
    %67 = arith.truncf %66 : vector<128x4xf32> to vector<128x4xbf16>
    %c0_23 = arith.constant 0 : index
    %c8 = arith.constant 8 : index
    %68 = vector.load %arg8[%c0_23, %c8] : memref<128x32xbf16, #tpu.memory_space<vmem>>, vector<128x4xbf16>
    tpu.vector_store %arg8[%c0_23, %c8], %67 {strides = array<i32>} : memref<128x32xbf16, #tpu.memory_space<vmem>>, vector<128x4xbf16>,
    %69 = vector.extract_strided_slice %7 {offsets = [0, 12], sizes = [128, 4], strides = [1, 1]} : vector<128x96xbf16> to vector<128x4xbf16>
    %70 = vector.extract_strided_slice %7 {offsets = [0, 44], sizes = [128, 4], strides = [1, 1]} : vector<128x96xbf16> to vector<128x4xbf16>
    %71 = vector.extract_strided_slice %7 {offsets = [0, 76], sizes = [128, 4], strides = [1, 1]} : vector<128x96xbf16> to vector<128x4xbf16>
    %cst_24 = arith.constant dense<0.000000e+00> : vector<128x128xf32>
    %72 = tpu.matmul %69, %70, %cst_24 {dimension_numbers = #tpu.dot_dimension_numbers<[1], [1], [0], [0], [0, 0, 1, 0], [], []>} : vector<128x4xbf16>, vector<128x4xbf16>, vector<128x128xf32> -> vector<128x128xf32>
    %73 = vector.broadcast %8 : vector<1x128xf32> to vector<128x128xf32>
    %74 = arith.addf %72, %73 : vector<128x128xf32>
    %cst_25 = arith.constant dense<0xFF800000> : vector<128xf32>
    %75 = vector.multi_reduction <maximumf>, %74, %cst_25 [1] : vector<128x128xf32> to vector<128xf32>
    %76 = vector.shape_cast %75 : vector<128xf32> to vector<128x1xf32>
    %77 = vector.broadcast %76 : vector<128x1xf32> to vector<128x128xf32>
    %78 = arith.subf %74, %77 : vector<128x128xf32>
    %79 = math.exp %78 : vector<128x128xf32>
    %cst_26 = arith.constant dense<0.000000e+00> : vector<128xf32>
    %80 = vector.multi_reduction <add>, %79, %cst_26 [1] : vector<128x128xf32> to vector<128xf32>
    %81 = vector.shape_cast %80 : vector<128xf32> to vector<128x1xf32>
    %82 = tpu.reciprocal %81 {approx = true} : vector<128x1xf32> -> vector<128x1xf32>
    %83 = vector.broadcast %82 : vector<128x1xf32> to vector<128x128xf32>
    %84 = arith.mulf %79, %83 : vector<128x128xf32>
    %85 = arith.truncf %84 : vector<128x128xf32> to vector<128x128xbf16>
    %cst_27 = arith.constant dense<0.000000e+00> : vector<128x4xf32>
    %86 = tpu.matmul %85, %71, %cst_27 {dimension_numbers = #tpu.dot_dimension_numbers<[1], [0], [0], [1], [0, 0, 1, 1], [], []>} : vector<128x128xbf16>, vector<128x4xbf16>, vector<128x4xf32> -> vector<128x4xf32>
    %87 = arith.truncf %86 : vector<128x4xf32> to vector<128x4xbf16>
    %c0_28 = arith.constant 0 : index
    %c12 = arith.constant 12 : index
    %88 = vector.load %arg8[%c0_28, %c12] : memref<128x32xbf16, #tpu.memory_space<vmem>>, vector<128x4xbf16>
    tpu.vector_store %arg8[%c0_28, %c12], %87 {strides = array<i32>} : memref<128x32xbf16, #tpu.memory_space<vmem>>, vector<128x4xbf16>,
    %89 = vector.extract_strided_slice %7 {offsets = [0, 16], sizes = [128, 4], strides = [1, 1]} : vector<128x96xbf16> to vector<128x4xbf16>
    %90 = vector.extract_strided_slice %7 {offsets = [0, 48], sizes = [128, 4], strides = [1, 1]} : vector<128x96xbf16> to vector<128x4xbf16>
    %91 = vector.extract_strided_slice %7 {offsets = [0, 80], sizes = [128, 4], strides = [1, 1]} : vector<128x96xbf16> to vector<128x4xbf16>
    %cst_29 = arith.constant dense<0.000000e+00> : vector<128x128xf32>
    %92 = tpu.matmul %89, %90, %cst_29 {dimension_numbers = #tpu.dot_dimension_numbers<[1], [1], [0], [0], [0, 0, 1, 0], [], []>} : vector<128x4xbf16>, vector<128x4xbf16>, vector<128x128xf32> -> vector<128x128xf32>
    %93 = vector.broadcast %8 : vector<1x128xf32> to vector<128x128xf32>
    %94 = arith.addf %92, %93 : vector<128x128xf32>
    %cst_30 = arith.constant dense<0xFF800000> : vector<128xf32>
    %95 = vector.multi_reduction <maximumf>, %94, %cst_30 [1] : vector<128x128xf32> to vector<128xf32>
    %96 = vector.shape_cast %95 : vector<128xf32> to vector<128x1xf32>
    %97 = vector.broadcast %96 : vector<128x1xf32> to vector<128x128xf32>
    %98 = arith.subf %94, %97 : vector<128x128xf32>
    %99 = math.exp %98 : vector<128x128xf32>
    %cst_31 = arith.constant dense<0.000000e+00> : vector<128xf32>
    %100 = vector.multi_reduction <add>, %99, %cst_31 [1] : vector<128x128xf32> to vector<128xf32>
    %101 = vector.shape_cast %100 : vector<128xf32> to vector<128x1xf32>
    %102 = tpu.reciprocal %101 {approx = true} : vector<128x1xf32> -> vector<128x1xf32>
    %103 = vector.broadcast %102 : vector<128x1xf32> to vector<128x128xf32>
    %104 = arith.mulf %99, %103 : vector<128x128xf32>
    %105 = arith.truncf %104 : vector<128x128xf32> to vector<128x128xbf16>
    %cst_32 = arith.constant dense<0.000000e+00> : vector<128x4xf32>
    %106 = tpu.matmul %105, %91, %cst_32 {dimension_numbers = #tpu.dot_dimension_numbers<[1], [0], [0], [1], [0, 0, 1, 1], [], []>} : vector<128x128xbf16>, vector<128x4xbf16>, vector<128x4xf32> -> vector<128x4xf32>
    %107 = arith.truncf %106 : vector<128x4xf32> to vector<128x4xbf16>
    %c0_33 = arith.constant 0 : index
    %c16 = arith.constant 16 : index
    %108 = vector.load %arg8[%c0_33, %c16] : memref<128x32xbf16, #tpu.memory_space<vmem>>, vector<128x4xbf16>
    tpu.vector_store %arg8[%c0_33, %c16], %107 {strides = array<i32>} : memref<128x32xbf16, #tpu.memory_space<vmem>>, vector<128x4xbf16>,
    %109 = vector.extract_strided_slice %7 {offsets = [0, 20], sizes = [128, 4], strides = [1, 1]} : vector<128x96xbf16> to vector<128x4xbf16>
    %110 = vector.extract_strided_slice %7 {offsets = [0, 52], sizes = [128, 4], strides = [1, 1]} : vector<128x96xbf16> to vector<128x4xbf16>
    %111 = vector.extract_strided_slice %7 {offsets = [0, 84], sizes = [128, 4], strides = [1, 1]} : vector<128x96xbf16> to vector<128x4xbf16>
    %cst_34 = arith.constant dense<0.000000e+00> : vector<128x128xf32>
    %112 = tpu.matmul %109, %110, %cst_34 {dimension_numbers = #tpu.dot_dimension_numbers<[1], [1], [0], [0], [0, 0, 1, 0], [], []>} : vector<128x4xbf16>, vector<128x4xbf16>, vector<128x128xf32> -> vector<128x128xf32>
    %113 = vector.broadcast %8 : vector<1x128xf32> to vector<128x128xf32>
    %114 = arith.addf %112, %113 : vector<128x128xf32>
    %cst_35 = arith.constant dense<0xFF800000> : vector<128xf32>
    %115 = vector.multi_reduction <maximumf>, %114, %cst_35 [1] : vector<128x128xf32> to vector<128xf32>
    %116 = vector.shape_cast %115 : vector<128xf32> to vector<128x1xf32>
    %117 = vector.broadcast %116 : vector<128x1xf32> to vector<128x128xf32>
    %118 = arith.subf %114, %117 : vector<128x128xf32>
    %119 = math.exp %118 : vector<128x128xf32>
    %cst_36 = arith.constant dense<0.000000e+00> : vector<128xf32>
    %120 = vector.multi_reduction <add>, %119, %cst_36 [1] : vector<128x128xf32> to vector<128xf32>
    %121 = vector.shape_cast %120 : vector<128xf32> to vector<128x1xf32>
    %122 = tpu.reciprocal %121 {approx = true} : vector<128x1xf32> -> vector<128x1xf32>
    %123 = vector.broadcast %122 : vector<128x1xf32> to vector<128x128xf32>
    %124 = arith.mulf %119, %123 : vector<128x128xf32>
    %125 = arith.truncf %124 : vector<128x128xf32> to vector<128x128xbf16>
    %cst_37 = arith.constant dense<0.000000e+00> : vector<128x4xf32>
    %126 = tpu.matmul %125, %111, %cst_37 {dimension_numbers = #tpu.dot_dimension_numbers<[1], [0], [0], [1], [0, 0, 1, 1], [], []>} : vector<128x128xbf16>, vector<128x4xbf16>, vector<128x4xf32> -> vector<128x4xf32>
    %127 = arith.truncf %126 : vector<128x4xf32> to vector<128x4xbf16>
    %c0_38 = arith.constant 0 : index
    %c20 = arith.constant 20 : index
    %128 = vector.load %arg8[%c0_38, %c20] : memref<128x32xbf16, #tpu.memory_space<vmem>>, vector<128x4xbf16>
    tpu.vector_store %arg8[%c0_38, %c20], %127 {strides = array<i32>} : memref<128x32xbf16, #tpu.memory_space<vmem>>, vector<128x4xbf16>,
    %129 = vector.extract_strided_slice %7 {offsets = [0, 24], sizes = [128, 4], strides = [1, 1]} : vector<128x96xbf16> to vector<128x4xbf16>
    %130 = vector.extract_strided_slice %7 {offsets = [0, 56], sizes = [128, 4], strides = [1, 1]} : vector<128x96xbf16> to vector<128x4xbf16>
    %131 = vector.extract_strided_slice %7 {offsets = [0, 88], sizes = [128, 4], strides = [1, 1]} : vector<128x96xbf16> to vector<128x4xbf16>
    %cst_39 = arith.constant dense<0.000000e+00> : vector<128x128xf32>
    %132 = tpu.matmul %129, %130, %cst_39 {dimension_numbers = #tpu.dot_dimension_numbers<[1], [1], [0], [0], [0, 0, 1, 0], [], []>} : vector<128x4xbf16>, vector<128x4xbf16>, vector<128x128xf32> -> vector<128x128xf32>
    %133 = vector.broadcast %8 : vector<1x128xf32> to vector<128x128xf32>
    %134 = arith.addf %132, %133 : vector<128x128xf32>
    %cst_40 = arith.constant dense<0xFF800000> : vector<128xf32>
    %135 = vector.multi_reduction <maximumf>, %134, %cst_40 [1] : vector<128x128xf32> to vector<128xf32>
    %136 = vector.shape_cast %135 : vector<128xf32> to vector<128x1xf32>
    %137 = vector.broadcast %136 : vector<128x1xf32> to vector<128x128xf32>
    %138 = arith.subf %134, %137 : vector<128x128xf32>
    %139 = math.exp %138 : vector<128x128xf32>
    %cst_41 = arith.constant dense<0.000000e+00> : vector<128xf32>
    %140 = vector.multi_reduction <add>, %139, %cst_41 [1] : vector<128x128xf32> to vector<128xf32>
    %141 = vector.shape_cast %140 : vector<128xf32> to vector<128x1xf32>
    %142 = tpu.reciprocal %141 {approx = true} : vector<128x1xf32> -> vector<128x1xf32>
    %143 = vector.broadcast %142 : vector<128x1xf32> to vector<128x128xf32>
    %144 = arith.mulf %139, %143 : vector<128x128xf32>
    %145 = arith.truncf %144 : vector<128x128xf32> to vector<128x128xbf16>
    %cst_42 = arith.constant dense<0.000000e+00> : vector<128x4xf32>
    %146 = tpu.matmul %145, %131, %cst_42 {dimension_numbers = #tpu.dot_dimension_numbers<[1], [0], [0], [1], [0, 0, 1, 1], [], []>} : vector<128x128xbf16>, vector<128x4xbf16>, vector<128x4xf32> -> vector<128x4xf32>
    %147 = arith.truncf %146 : vector<128x4xf32> to vector<128x4xbf16>
    %c0_43 = arith.constant 0 : index
    %c24 = arith.constant 24 : index
    %148 = vector.load %arg8[%c0_43, %c24] : memref<128x32xbf16, #tpu.memory_space<vmem>>, vector<128x4xbf16>
    tpu.vector_store %arg8[%c0_43, %c24], %147 {strides = array<i32>} : memref<128x32xbf16, #tpu.memory_space<vmem>>, vector<128x4xbf16>,
    %149 = vector.extract_strided_slice %7 {offsets = [0, 28], sizes = [128, 4], strides = [1, 1]} : vector<128x96xbf16> to vector<128x4xbf16>
    %150 = vector.extract_strided_slice %7 {offsets = [0, 60], sizes = [128, 4], strides = [1, 1]} : vector<128x96xbf16> to vector<128x4xbf16>
    %151 = vector.extract_strided_slice %7 {offsets = [0, 92], sizes = [128, 4], strides = [1, 1]} : vector<128x96xbf16> to vector<128x4xbf16>
    %cst_44 = arith.constant dense<0.000000e+00> : vector<128x128xf32>
    %152 = tpu.matmul %149, %150, %cst_44 {dimension_numbers = #tpu.dot_dimension_numbers<[1], [1], [0], [0], [0, 0, 1, 0], [], []>} : vector<128x4xbf16>, vector<128x4xbf16>, vector<128x128xf32> -> vector<128x128xf32>
    %153 = vector.broadcast %8 : vector<1x128xf32> to vector<128x128xf32>
    %154 = arith.addf %152, %153 : vector<128x128xf32>
    %cst_45 = arith.constant dense<0xFF800000> : vector<128xf32>
    %155 = vector.multi_reduction <maximumf>, %154, %cst_45 [1] : vector<128x128xf32> to vector<128xf32>
    %156 = vector.shape_cast %155 : vector<128xf32> to vector<128x1xf32>
    %157 = vector.broadcast %156 : vector<128x1xf32> to vector<128x128xf32>
    %158 = arith.subf %154, %157 : vector<128x128xf32>
    %159 = math.exp %158 : vector<128x128xf32>
    %cst_46 = arith.constant dense<0.000000e+00> : vector<128xf32>
    %160 = vector.multi_reduction <add>, %159, %cst_46 [1] : vector<128x128xf32> to vector<128xf32>
    %161 = vector.shape_cast %160 : vector<128xf32> to vector<128x1xf32>
    %162 = tpu.reciprocal %161 {approx = true} : vector<128x1xf32> -> vector<128x1xf32>
    %163 = vector.broadcast %162 : vector<128x1xf32> to vector<128x128xf32>
    %164 = arith.mulf %159, %163 : vector<128x128xf32>
    %165 = arith.truncf %164 : vector<128x128xf32> to vector<128x128xbf16>
    %cst_47 = arith.constant dense<0.000000e+00> : vector<128x4xf32>
    %166 = tpu.matmul %165, %151, %cst_47 {dimension_numbers = #tpu.dot_dimension_numbers<[1], [0], [0], [1], [0, 0, 1, 1], [], []>} : vector<128x128xbf16>, vector<128x4xbf16>, vector<128x4xf32> -> vector<128x4xf32>
    %167 = arith.truncf %166 : vector<128x4xf32> to vector<128x4xbf16>
    %c0_48 = arith.constant 0 : index
    %c28 = arith.constant 28 : index
    %168 = vector.load %arg8[%c0_48, %c28] : memref<128x32xbf16, #tpu.memory_space<vmem>>, vector<128x4xbf16>
    tpu.vector_store %arg8[%c0_48, %c28], %167 {strides = array<i32>} : memref<128x32xbf16, #tpu.memory_space<vmem>>, vector<128x4xbf16>,
    %c0_49 = arith.constant 0 : index
    %c0_50 = arith.constant 0 : index
    %169 = vector.load %arg8[%c0_49, %c0_50] : memref<128x32xbf16, #tpu.memory_space<vmem>>, vector<128x32xbf16>
    %c0_51 = arith.constant 0 : index
    %c0_52 = arith.constant 0 : index
    %170 = vector.load %arg4[%c0_51, %c0_52] : memref<32x32xbf16, #tpu.memory_space<vmem>>, vector<32x32xbf16>
    %cst_53 = arith.constant dense<0.000000e+00> : vector<128x32xf32>
    %171 = tpu.matmul %169, %170, %cst_53 {dimension_numbers = #tpu.dot_dimension_numbers<[1], [0], [0], [1], [0, 0, 1, 1], [], []>} : vector<128x32xbf16>, vector<32x32xbf16>, vector<128x32xf32> -> vector<128x32xf32>
    %c0_54 = arith.constant 0 : index
    %c0_55 = arith.constant 0 : index
    %172 = vector.load %arg5[%c0_54, %c0_55] : memref<1x32xf32, #tpu.memory_space<vmem>>, vector<1x32xf32>
    %173 = vector.broadcast %172 : vector<1x32xf32> to vector<128x32xf32>
    %174 = arith.addf %171, %173 : vector<128x32xf32>
    %c0_56 = arith.constant 0 : index
    %c0_57 = arith.constant 0 : index
    %c0_58 = arith.constant 0 : index
    %175 = vector.load %arg7[%c0_56, %c0_57, %c0_58] : memref<1x128x32xf32, #tpu.memory_space<vmem>>, vector<1x128x32xf32>
    %176 = vector.shape_cast %175 : vector<1x128x32xf32> to vector<128x32xf32>
    %177 = vector.shape_cast %174 : vector<128x32xf32> to vector<1x128x32xf32>
    tpu.vector_store %arg7[%c0_56, %c0_57, %c0_58], %177 {strides = array<i32>} : memref<1x128x32xf32, #tpu.memory_space<vmem>>, vector<1x128x32xf32>,
    return
  }
  func.func @transform_0(%arg0: i32) -> (i32, i32, i32) {
    %c0_i32 = arith.constant 0 : i32
    %c0_i32_0 = arith.constant 0 : i32
    %c0_i32_1 = arith.constant 0 : i32
    return %arg0, %c0_i32, %c0_i32_0 : i32, i32, i32
  }
  func.func @transform_1(%arg0: i32) -> (i32, i32) {
    %c0_i32 = arith.constant 0 : i32
    %c0_i32_0 = arith.constant 0 : i32
    %c0_i32_1 = arith.constant 0 : i32
    return %c0_i32, %c0_i32_0 : i32, i32
  }
  func.func @transform_2(%arg0: i32) -> (i32, i32) {
    %c0_i32 = arith.constant 0 : i32
    %c0_i32_0 = arith.constant 0 : i32
    %c0_i32_1 = arith.constant 0 : i32
    return %c0_i32, %c0_i32_0 : i32, i32
  }
  func.func @transform_3(%arg0: i32) -> (i32, i32) {
    %c0_i32 = arith.constant 0 : i32
    %c0_i32_0 = arith.constant 0 : i32
    %c0_i32_1 = arith.constant 0 : i32
    return %c0_i32, %c0_i32_0 : i32, i32
  }
  func.func @transform_4(%arg0: i32) -> (i32, i32) {
    %c0_i32 = arith.constant 0 : i32
    %c0_i32_0 = arith.constant 0 : i32
    %c0_i32_1 = arith.constant 0 : i32
    return %c0_i32, %c0_i32_0 : i32, i32
  }
  func.func @transform_5(%arg0: i32) -> (i32, i32) {
    %c0_i32 = arith.constant 0 : i32
    %c0_i32_0 = arith.constant 0 : i32
    %c0_i32_1 = arith.constant 0 : i32
    return %c0_i32, %c0_i32_0 : i32, i32
  }
  func.func @transform_6(%arg0: i32) -> (i32, i32, i32) {
    %c0_i32 = arith.constant 0 : i32
    %c0_i32_0 = arith.constant 0 : i32
    %c0_i32_1 = arith.constant 0 : i32
    return %arg0, %c0_i32, %c0_i32_0 : i32, i32, i32
  }
}

</mosaic_0001>

<llo_original>
// kernel: tpu_custom_call.1
$region0: #{tpu_custom_call.1}
  #allocation0 [shape = 'u32[]', space=smem, size = 0x4, offset = 0x4, fixed_abs, tag = 'smem constant byte address 0x4 - core index']
  #allocation1 [shape = 'u32[144,128]{1,0:T(1,128)}', space=vmem, size = 0x12000, scoped, tag = 'internal scratch']
  #allocation2 [shape = 'bf16[128,32]{1,0:T(16,128)(2,1)}', space=vmem, size = 0x8000, scoped, tag = 'scratch operand']
  %s0 = inlined_call_operand.vmem [shape: bf16[2,128,32], index: 0, kind: input, shape index: {}]
  %s1 = inlined_call_operand.vmem [shape: bf16[32,96], index: 1, kind: input, shape index: {}]
  %s2 = inlined_call_operand.vmem [shape: f32[1,96], index: 2, kind: input, shape index: {}]
  %s3 = inlined_call_operand.vmem [shape: bf16[32,32], index: 3, kind: input, shape index: {}]
  %s4 = inlined_call_operand.vmem [shape: f32[1,32], index: 4, kind: input, shape index: {}]
  %s5 = inlined_call_operand.vmem [shape: f32[1,128], index: 5, kind: input, shape index: {}]
  %s6 = inlined_call_operand.vmem [shape: f32[2,128,32], index: 6, kind: output, shape index: {}]
  %s7 = sld [smem:[#allocation0]]
  $region57: #{tpu_custom_call.1} parent=0
    _
  %s9 = ssub.s32 1, %s7
  %s10 = scalar_select 0, %s9, %s7
  loop: start=0, step=1, limit=4
  $region2: #{tpu_custom_call.1} parent=0 // loop_pre_header
    _
  $region3: #{tpu_custom_call.1} parent=0 // loop_header
    %s12 = sphi 0, %s16
    %p13 = scmp.ge.s32.totalorder %s12, 4
    %s22 = sphi 0, %s24
    %s25 = sphi 0, %s22
    %s26 = sphi 0, %s25
    %s42 = sphi 0, %s26
    %s46 = sphi 0, %s46
    %s48 = sphi 0, %s46
    %s49 = sphi 0, %s48
    %s63 = sphi 0, %s49
    %s67 = sphi 0, %s67
    %s69 = sphi 0, %s67
    %s70 = sphi 0, %s69
    %s84 = sphi 0, %s70
    %s88 = sphi 0, %s88
    %s90 = sphi 0, %s88
    %s91 = sphi 0, %s90
    %s105 = sphi 0, %s91
    %s109 = sphi 0, %s109
    %s111 = sphi 0, %s109
    %s112 = sphi 0, %s111
    %s126 = sphi 0, %s112
    %s130 = sphi 0, %s130
    %s132 = sphi 0, %s130
    %s133 = sphi 0, %s132
    %s147 = sphi 0, %s133
    %s153 = sphi 0, %s155
    %s156 = sphi 0, %s153
    %s157 = sphi 0, %s156
    %s173 = sphi 0, %s157
  $region4: #{tpu_custom_call.1} parent=0 // loop_header_branch
    %15 = sbr.rel (%p13) target = $region8
  $region5: #{tpu_custom_call.1} parent=0 // loop_body
    %s17 = ssub.s32 %s12, 1
    %s18 = ssub.s32 %s12, 2
    %s19 = sadd.s32 %s12, 1
    %s20 = ssub.s32 %s12, %s19
    %p21 = scmp.eq.s32.totalorder %s20, 0
    %s23 = sadd.s32 %s22, 1
    %s24 = scalar_select %p21, %s22, %s23
    %p27 = pneg %p21
    %p28 = scmp.eq.s32.totalorder %s12, 1
    %p29 = por %p27, %p28
    %p30 = scmp.ne.s32.totalorder %s22, %s25
    %p31 = scmp.eq.s32.totalorder %s12, 0
    %p32 = por %p30, %p31
    %p33 = scmp.ne.s32.totalorder %s22, %s25
    %p34 = scmp.eq.s32.totalorder %s17, 1
    %p35 = por %p33, %p34
    %p36 = scmp.ne.s32.totalorder %s25, %s26
    %p37 = scmp.eq.s32.totalorder %s17, 0
    %p38 = por %p36, %p37
    %p39 = scmp.ne.s32.totalorder %s25, %s26
    %p40 = scmp.eq.s32.totalorder %s18, 1
    %p41 = por %p39, %p40
    %p43 = scmp.ne.s32.totalorder %s26, %s42
    %p44 = scmp.eq.s32.totalorder %s18, 0
    %p45 = por %p43, %p44
    %s47 = sadd.s32 %s46, 1
    %p50 = scmp.eq.s32.totalorder %s12, 1
    %p51 = scmp.ne.s32.totalorder %s46, %s48
    %p52 = scmp.eq.s32.totalorder %s12, 0
    %p53 = por %p51, %p52
    %p54 = scmp.ne.s32.totalorder %s46, %s48
    %p55 = scmp.eq.s32.totalorder %s17, 1
    %p56 = por %p54, %p55
    %p57 = scmp.ne.s32.totalorder %s48, %s49
    %p58 = scmp.eq.s32.totalorder %s17, 0
    %p59 = por %p57, %p58
    %p60 = scmp.ne.s32.totalorder %s48, %s49
    %p61 = scmp.eq.s32.totalorder %s18, 1
    %p62 = por %p60, %p61
    %p64 = scmp.ne.s32.totalorder %s49, %s63
    %p65 = scmp.eq.s32.totalorder %s18, 0
    %p66 = por %p64, %p65
    %s68 = sadd.s32 %s67, 1
    %p71 = scmp.eq.s32.totalorder %s12, 1
    %p72 = scmp.ne.s32.totalorder %s67, %s69
    %p73 = scmp.eq.s32.totalorder %s12, 0
    %p74 = por %p72, %p73
    %p75 = scmp.ne.s32.totalorder %s67, %s69
    %p76 = scmp.eq.s32.totalorder %s17, 1
    %p77 = por %p75, %p76
    %p78 = scmp.ne.s32.totalorder %s69, %s70
    %p79 = scmp.eq.s32.totalorder %s17, 0
    %p80 = por %p78, %p79
    %p81 = scmp.ne.s32.totalorder %s69, %s70
    %p82 = scmp.eq.s32.totalorder %s18, 1
    %p83 = por %p81, %p82
    %p85 = scmp.ne.s32.totalorder %s70, %s84
    %p86 = scmp.eq.s32.totalorder %s18, 0
    %p87 = por %p85, %p86
    %s89 = sadd.s32 %s88, 1
    %p92 = scmp.eq.s32.totalorder %s12, 1
    %p93 = scmp.ne.s32.totalorder %s88, %s90
    %p94 = scmp.eq.s32.totalorder %s12, 0
    %p95 = por %p93, %p94
    %p96 = scmp.ne.s32.totalorder %s88, %s90
    %p97 = scmp.eq.s32.totalorder %s17, 1
    %p98 = por %p96, %p97
    %p99 = scmp.ne.s32.totalorder %s90, %s91
    %p100 = scmp.eq.s32.totalorder %s17, 0
    %p101 = por %p99, %p100
    %p102 = scmp.ne.s32.totalorder %s90, %s91
    %p103 = scmp.eq.s32.totalorder %s18, 1
    %p104 = por %p102, %p103
    %p106 = scmp.ne.s32.totalorder %s91, %s105
    %p107 = scmp.eq.s32.totalorder %s18, 0
    %p108 = por %p106, %p107
    %s110 = sadd.s32 %s109, 1
    %p113 = scmp.eq.s32.totalorder %s12, 1
    %p114 = scmp.ne.s32.totalorder %s109, %s111
    %p115 = scmp.eq.s32.totalorder %s12, 0
    %p116 = por %p114, %p115
    %p117 = scmp.ne.s32.totalorder %s109, %s111
    %p118 = scmp.eq.s32.totalorder %s17, 1
    %p119 = por %p117, %p118
    %p120 = scmp.ne.s32.totalorder %s111, %s112
    %p121 = scmp.eq.s32.totalorder %s17, 0
    %p122 = por %p120, %p121
    %p123 = scmp.ne.s32.totalorder %s111, %s112
    %p124 = scmp.eq.s32.totalorder %s18, 1
    %p125 = por %p123, %p124
    %p127 = scmp.ne.s32.totalorder %s112, %s126
    %p128 = scmp.eq.s32.totalorder %s18, 0
    %p129 = por %p127, %p128
    %s131 = sadd.s32 %s130, 1
    %p134 = scmp.eq.s32.totalorder %s12, 1
    %p135 = scmp.ne.s32.totalorder %s130, %s132
    %p136 = scmp.eq.s32.totalorder %s12, 0
    %p137 = por %p135, %p136
    %p138 = scmp.ne.s32.totalorder %s130, %s132
    %p139 = scmp.eq.s32.totalorder %s17, 1
    %p140 = por %p138, %p139
    %p141 = scmp.ne.s32.totalorder %s132, %s133
    %p142 = scmp.eq.s32.totalorder %s17, 0
    %p143 = por %p141, %p142
    %p144 = scmp.ne.s32.totalorder %s132, %s133
    %p145 = scmp.eq.s32.totalorder %s18, 1
    %p146 = por %p144, %p145
    %p148 = scmp.ne.s32.totalorder %s133, %s147
    %p149 = scmp.eq.s32.totalorder %s18, 0
    %p150 = por %p148, %p149
    %s151 = ssub.s32 %s12, %s19
    %p152 = scmp.eq.s32.totalorder %s151, 0
    %s154 = sadd.s32 %s153, 1
    %s155 = scalar_select %p152, %s153, %s154
    %p158 = pneg %p152
    %p159 = scmp.eq.s32.totalorder %s12, 1
    %p160 = por %p158, %p159
    %p161 = scmp.ne.s32.totalorder %s153, %s156
    %p162 = scmp.eq.s32.totalorder %s12, 0
    %p163 = por %p161, %p162
    %p164 = scmp.ne.s32.totalorder %s153, %s156
    %p165 = scmp.eq.s32.totalorder %s17, 1
    %p166 = por %p164, %p165
    %p167 = scmp.ne.s32.totalorder %s156, %s157
    %p168 = scmp.eq.s32.totalorder %s17, 0
    %p169 = por %p167, %p168
    %p170 = scmp.ne.s32.totalorder %s156, %s157
    %p171 = scmp.eq.s32.totalorder %s18, 1
    %p172 = por %p170, %p171
    %p174 = scmp.ne.s32.totalorder %s157, %s173
    %p175 = scmp.eq.s32.totalorder %s18, 0
    %p176 = por %p174, %p175
    %p177 = scmp.le.s32.totalorder 1, %s12
    %p178 = scmp.lt.s32.totalorder %s12, 3
    %p179 = pnand %p177, %p178
    %p180 = pneg %p179
    // Predicated region
    $region9: #{tpu_custom_call.1} parent=5 // pred_check
      _
    $region10: #{tpu_custom_call.1} parent=5 // pred_check_branch
      %182 = sbr.rel (%p179) target = $region12
    $region11: #{tpu_custom_call.1} parent=5 // pred_region
      %s183 = ssub.s32 %s12, 1
      // Predicated region
      $region13: #{tpu_custom_call.1} parent=11 // pred_check
        %p184 = pneg %p59
      $region14: #{tpu_custom_call.1} parent=11 // pred_check_branch
        %186 = sbr.rel (%p184) target = $region16
      $region15: #{tpu_custom_call.1} parent=11 // pred_region
        _
      $region16: #{tpu_custom_call.1} parent=11 // pred_fallthru
        _
      // Predicated region
      $region17: #{tpu_custom_call.1} parent=11 // pred_check
        %p187 = pneg %p80
      $region18: #{tpu_custom_call.1} parent=11 // pred_check_branch
        %189 = sbr.rel (%p187) target = $region20
      $region19: #{tpu_custom_call.1} parent=11 // pred_region
        _
      $region20: #{tpu_custom_call.1} parent=11 // pred_fallthru
        _
      // Predicated region
      $region21: #{tpu_custom_call.1} parent=11 // pred_check
        %p190 = pneg %p101
      $region22: #{tpu_custom_call.1} parent=11 // pred_check_branch
        %192 = sbr.rel (%p190) target = $region24
      $region23: #{tpu_custom_call.1} parent=11 // pred_region
        _
      $region24: #{tpu_custom_call.1} parent=11 // pred_fallthru
        _
      // Predicated region
      $region25: #{tpu_custom_call.1} parent=11 // pred_check
        %p193 = pneg %p122
      $region26: #{tpu_custom_call.1} parent=11 // pred_check_branch
        %195 = sbr.rel (%p193) target = $region28
      $region27: #{tpu_custom_call.1} parent=11 // pred_region
        _
      $region28: #{tpu_custom_call.1} parent=11 // pred_fallthru
        _
      // Predicated region
      $region29: #{tpu_custom_call.1} parent=11 // pred_check
        %p196 = pneg %p143
      $region30: #{tpu_custom_call.1} parent=11 // pred_check_branch
        %198 = sbr.rel (%p196) target = $region32
      $region31: #{tpu_custom_call.1} parent=11 // pred_region
        _
      $region32: #{tpu_custom_call.1} parent=11 // pred_fallthru
        _
    $region12: #{tpu_custom_call.1} parent=5 // pred_fallthru
      _
    %p199 = scmp.lt.s32.totalorder %s12, 2
    // Predicated region
    $region33: #{tpu_custom_call.1} parent=5 // pred_check
      %p200 = pneg %p199
    $region34: #{tpu_custom_call.1} parent=5 // pred_check_branch
      %202 = sbr.rel (%p200) target = $region36
    $region35: #{tpu_custom_call.1} parent=5 // pred_region
      // Predicated region
      $region37: #{tpu_custom_call.1} parent=35 // pred_check
        %p203 = pneg %p32
      $region38: #{tpu_custom_call.1} parent=35 // pred_check_branch
        %205 = sbr.rel (%p203) target = $region40
      $region39: #{tpu_custom_call.1} parent=35 // pred_region
        %p206 = scmp.lt.s32.totalorder %s12, 1
        %s207 = scalar_select %p206, %s12, 1
        %s208 = smul.addr %s207, 16
        %s209 = smul.addr %s208, 4
        %s210 = scalar_lea.vmem %s0, %s209
      $region40: #{tpu_custom_call.1} parent=35 // pred_fallthru
        _
    $region36: #{tpu_custom_call.1} parent=5 // pred_fallthru
      _
    %p211 = scmp.le.s32.totalorder 1, %s12
    %p212 = scmp.lt.s32.totalorder %s12, 3
    %p213 = pnand %p211, %p212
    %p214 = pneg %p213
    // Predicated region
    $region41: #{tpu_custom_call.1} parent=5 // pred_check
      _
    $region42: #{tpu_custom_call.1} parent=5 // pred_check_branch
      %216 = sbr.rel (%p213) target = $region44
    $region43: #{tpu_custom_call.1} parent=5 // pred_region
      %s217 = ssub.s32 %s12, 1
      %p218 = scmp.lt.s32.totalorder %s17, 1
      %s219 = scalar_select %p218, %s17, 1
      %s220 = smul.addr %s219, 16
      %s221 = smul.addr %s220, 4
      %s222 = scalar_lea.vmem %s0, %s221
      %p223 = pneg %p38
      %p224 = pneg %p35
      %p225 = pneg %p59
      %p226 = pneg %p56
      %p227 = pneg %p80
      %p228 = pneg %p77
      %p229 = pneg %p101
      %p230 = pneg %p98
      %p231 = pneg %p122
      %p232 = pneg %p119
      %p233 = pneg %p143
      %p234 = pneg %p140
      %p235 = pneg %p169
      %p236 = pneg %p166
      %p237 = scmp.lt.s32.totalorder %s17, 1
      %s238 = scalar_select %p237, %s17, 1
      %s239 = smul.addr %s238, 16
      %s240 = smul.addr %s239, 8
      %s241 = scalar_lea.vmem %s6, %s240
      %p242 = scmp.lt.s32.totalorder %s17, 1
      %s243 = scalar_select %p242, %s17, 1
      %s244 = smul.addr %s243, 16
      %s245 = smul.addr %s244, 4
      %s246 = scalar_lea.vmem %s0, %s245
      %p247 = scmp.lt.s32.totalorder %s17, 1
      %s248 = scalar_select %p247, %s17, 1
      %s249 = smul.addr %s248, 16
      %s250 = smul.addr %s249, 8
      %s251 = scalar_lea.vmem %s6, %s250
      %v253 = vld [vmem:[%s246] sm:$0xf]
      %v254 = vld [vmem:[%s246 + $0x4] sm:$0xf]
      %v255 = vld [vmem:[%s246 + $0x8] sm:$0xf]
      %v256 = vld [vmem:[%s246 + $0xc] sm:$0xf]
      %v257 = vld [vmem:[%s246 + $0x10] sm:$0xf]
      %v258 = vld [vmem:[%s246 + $0x14] sm:$0xf]
      %v259 = vld [vmem:[%s246 + $0x18] sm:$0xf]
      %v260 = vld [vmem:[%s246 + $0x1c] sm:$0xf]
      %v261 = vld [vmem:[%s246 + $0x20] sm:$0xf]
      %v262 = vld [vmem:[%s246 + $0x24] sm:$0xf]
      %v263 = vld [vmem:[%s246 + $0x28] sm:$0xf]
      %v264 = vld [vmem:[%s246 + $0x2c] sm:$0xf]
      %v265 = vld [vmem:[%s246 + $0x30] sm:$0xf]
      %v266 = vld [vmem:[%s246 + $0x34] sm:$0xf]
      %v267 = vld [vmem:[%s246 + $0x38] sm:$0xf]
      %v268 = vld [vmem:[%s246 + $0x3c] sm:$0xf]
      %v269 = vld [vmem:[%s1] sm:$0xf]
      %v270 = vld [vmem:[%s1 + $0x4] sm:$0xf]
      %v271 = vld [vmem:[%s1 + $0x8] sm:$0xf]
      %v272 = vld [vmem:[%s1 + $0xc] sm:$0xf]
      %v273 = vld [vmem:[%s2] sm:$0x1]
      %v275 = vlaneseq
      %v276 = vshrl.u32 %v275, 7
      %v277 = vsub.s32 0, %v276
      %v278 = vrot.slane %v273, %v277
      %v296 = vunpack.c.l.b16 %v253
      %v297 = vunpack.c.l.b16 %v254
      %v298 = vunpack.c.l.b16 %v255
      %v299 = vunpack.c.l.b16 %v256
      %v300 = vunpack.c.l.b16 %v257
      %v301 = vunpack.c.l.b16 %v258
      %v302 = vunpack.c.l.b16 %v259
      %v303 = vunpack.c.l.b16 %v260
      %v304 = vunpack.c.l.b16 %v261
      %v305 = vunpack.c.l.b16 %v262
      %v306 = vunpack.c.l.b16 %v263
      %v307 = vunpack.c.l.b16 %v264
      %v308 = vunpack.c.l.b16 %v265
      %v309 = vunpack.c.l.b16 %v266
      %v310 = vunpack.c.l.b16 %v267
      %v311 = vunpack.c.l.b16 %v268
      %v312 = vpack.c.b16 %v297, %v296
      %v313 = vpack.c.b16 %v299, %v298
      %v314 = vpack.c.b16 %v301, %v300
      %v315 = vpack.c.b16 %v303, %v302
      %v316 = vpack.c.b16 %v305, %v304
      %v317 = vpack.c.b16 %v307, %v306
      %v318 = vpack.c.b16 %v309, %v308
      %v319 = vpack.c.b16 %v311, %v310
      %v324 = vunpack.c.l.b16 %v269
      %v325 = vunpack.c.l.b16 %v270
      %v326 = vunpack.c.l.b16 %v271
      %v327 = vunpack.c.l.b16 %v272
      %v328 = vpack.c.b16 %v325, %v324
      %v329 = vpack.c.b16 %v327, %v326
      %vm332 = vcmask 261120
      %v334 = vsel %vm332, %v312, 0
      %v337 = vsel %vm332, %v313, 0
      %v340 = vsel %vm332, %v314, 0
      %v343 = vsel %vm332, %v315, 0
      %v346 = vsel %vm332, %v316, 0
      %v349 = vsel %vm332, %v317, 0
      %v352 = vsel %vm332, %v318, 0
      %v355 = vsel %vm332, %v319, 0
      %357 = vmatprep.subr.bf16.mxu0 0
      %358 = vmatpush1.bf16.msra.mxu0 %v328
      %359 = vmatprep.subr.bf16.mxu0 0
      %360 = vmatpush1.bf16.msra.mxu0 %v329
      %361 = vmatprep.subr.bf16.mxu0 0
      %362 = vmatpush1.bf16.msra.mxu0 0
      %363 = vmatprep.subr.bf16.mxu0 0
      %364 = vmatpush1.bf16.msra.mxu0 0
      %365 = vmatprep.subr.bf16.mxu0 0
      %366 = vmatpush1.bf16.msra.mxu0 0
      %367 = vmatprep.subr.bf16.mxu0 0
      %368 = vmatpush1.bf16.msra.mxu0 0
      %369 = vmatprep.subr.bf16.mxu0 0
      %370 = vmatpush1.bf16.msra.mxu0 0
      %371 = vmatprep.subr.bf16.mxu0 0
      %372 = vmatpush1.bf16.msra.mxu0 0
      %373 = vmatprep.subr.bf16.mxu0 0
      %374 = vmatpush1.bf16.msra.mxu0 0
      %375 = vmatprep.subr.bf16.mxu0 0
      %376 = vmatpush1.bf16.msra.mxu0 0
      %377 = vmatprep.subr.bf16.mxu0 0
      %378 = vmatpush1.bf16.msra.mxu0 0
      %379 = vmatprep.subr.bf16.mxu0 0
      %380 = vmatpush1.bf16.msra.mxu0 0
      %381 = vmatprep.subr.bf16.mxu0 0
      %382 = vmatpush1.bf16.msra.mxu0 0
      %383 = vmatprep.subr.bf16.mxu0 0
      %384 = vmatpush1.bf16.msra.mxu0 0
      %385 = vmatprep.subr.bf16.mxu0 0
      %386 = vmatpush1.bf16.msra.mxu0 0
      %387 = vmatprep.subr.bf16.mxu0 0
      %388 = vmatpush1.bf16.msra.mxu0 0
      %389 = vmatprep.mubr.bf16.mxu0 0
      %390 = vmatmul.mubr.bf16.gmra.mrb[0].mxu0 %v334
      %v391 = vpop.f32.mrb[0].mxu0
      %v392 = vadd.f32 %v278, %v391
      %v393 = vpop.f32.mrb[0].mxu0
      %v394 = vpop.f32.mrb[0].mxu0
      %v395 = vadd.f32 %v278, %v394
      %v396 = vpop.f32.mrb[0].mxu0
      %397 = vmatprep.mubr.bf16.mxu0 0
      %398 = vmatmul.mubr.bf16.gmra.mrb[0].mxu0 %v337
      %v399 = vpop.f32.mrb[0].mxu0
      %v400 = vadd.f32 %v278, %v399
      %v401 = vpop.f32.mrb[0].mxu0
      %v402 = vpop.f32.mrb[0].mxu0
      %v403 = vadd.f32 %v278, %v402
      %v404 = vpop.f32.mrb[0].mxu0
      %405 = vmatprep.mubr.bf16.mxu0 0
      %406 = vmatmul.mubr.bf16.gmra.mrb[0].mxu0 %v340
      %v407 = vpop.f32.mrb[0].mxu0
      %v408 = vadd.f32 %v278, %v407
      %v409 = vpop.f32.mrb[0].mxu0
      %v410 = vpop.f32.mrb[0].mxu0
      %v411 = vadd.f32 %v278, %v410
      %v412 = vpop.f32.mrb[0].mxu0
      %413 = vmatprep.mubr.bf16.mxu0 0
      %414 = vmatmul.mubr.bf16.gmra.mrb[0].mxu0 %v343
      %v415 = vpop.f32.mrb[0].mxu0
      %v416 = vadd.f32 %v278, %v415
      %v417 = vpop.f32.mrb[0].mxu0
      %v418 = vpop.f32.mrb[0].mxu0
      %v419 = vadd.f32 %v278, %v418
      %v420 = vpop.f32.mrb[0].mxu0
      %421 = vmatprep.mubr.bf16.mxu0 0
      %422 = vmatmul.mubr.bf16.gmra.mrb[0].mxu0 %v346
      %v423 = vpop.f32.mrb[0].mxu0
      %v424 = vadd.f32 %v278, %v423
      %v425 = vpop.f32.mrb[0].mxu0
      %v426 = vpop.f32.mrb[0].mxu0
      %v427 = vadd.f32 %v278, %v426
      %v428 = vpop.f32.mrb[0].mxu0
      %429 = vmatprep.mubr.bf16.mxu0 0
      %430 = vmatmul.mubr.bf16.gmra.mrb[0].mxu0 %v349
      %v431 = vpop.f32.mrb[0].mxu0
      %v432 = vadd.f32 %v278, %v431
      %v433 = vpop.f32.mrb[0].mxu0
      %v434 = vpop.f32.mrb[0].mxu0
      %v435 = vadd.f32 %v278, %v434
      %v436 = vpop.f32.mrb[0].mxu0
      %437 = vmatprep.mubr.bf16.mxu0 0
      %438 = vmatmul.mubr.bf16.gmra.mrb[0].mxu0 %v352
      %v439 = vpop.f32.mrb[0].mxu0
      %v440 = vadd.f32 %v278, %v439
      %v441 = vpop.f32.mrb[0].mxu0
      %v442 = vpop.f32.mrb[0].mxu0
      %v443 = vadd.f32 %v278, %v442
      %v444 = vpop.f32.mrb[0].mxu0
      %445 = vmatprep.mubr.bf16.mxu0 0
      %446 = vmatmul.mubr.bf16.gmra.mrb[0].mxu0 %v355
      %v447 = vpop.f32.mrb[0].mxu0
      %v448 = vadd.f32 %v278, %v447
      %v449 = vpop.f32.mrb[0].mxu0
      %v450 = vpop.f32.mrb[0].mxu0
      %v451 = vadd.f32 %v278, %v450
      %v452 = vpop.f32.mrb[0].mxu0
      %453 = vdwg.mxu0
      %v454 = vpack.c.bf16 %v395, %v392
      %v455 = vpack.c.bf16 %v403, %v400
      %v456 = vpack.c.bf16 %v411, %v408
      %v457 = vpack.c.bf16 %v419, %v416
      %v458 = vpack.c.bf16 %v427, %v424
      %v459 = vpack.c.bf16 %v435, %v432
      %v460 = vpack.c.bf16 %v443, %v440
      %v461 = vpack.c.bf16 %v451, %v448
      %v462 = vld [vmem:[%s5] sm:$0x1]
      %v464 = vlaneseq
      %v465 = vshrl.u32 %v464, 7
      %v466 = vsub.s32 0, %v465
      %v467 = vrot.slane %v462, %v466
      %477 = vrot.lane.b32.xlu0 %v454, 96
      %v478 = vpop.permute.xlu0 %477
      %479 = vrot.lane.b32.xlu0 %v455, 96
      %v480 = vpop.permute.xlu0 %479
      %481 = vrot.lane.b32.xlu0 %v456, 96
      %v482 = vpop.permute.xlu0 %481
      %483 = vrot.lane.b32.xlu0 %v457, 96
      %v484 = vpop.permute.xlu0 %483
      %485 = vrot.lane.b32.xlu0 %v458, 96
      %v486 = vpop.permute.xlu0 %485
      %487 = vrot.lane.b32.xlu0 %v459, 96
      %v488 = vpop.permute.xlu0 %487
      %489 = vrot.lane.b32.xlu0 %v460, 96
      %v490 = vpop.permute.xlu0 %489
      %491 = vrot.lane.b32.xlu0 %v461, 96
      %v492 = vpop.permute.xlu0 %491
      %vm493 = vcmask 31744
      %v495 = vsel %vm493, %v454, 0
      %v498 = vsel %vm493, %v455, 0
      %v501 = vsel %vm493, %v456, 0
      %v504 = vsel %vm493, %v457, 0
      %v507 = vsel %vm493, %v458, 0
      %v510 = vsel %vm493, %v459, 0
      %v513 = vsel %vm493, %v460, 0
      %v516 = vsel %vm493, %v461, 0
      %v519 = vsel %vm493, %v478, 0
      %v522 = vsel %vm493, %v480, 0
      %v525 = vsel %vm493, %v482, 0
      %v528 = vsel %vm493, %v484, 0
      %v531 = vsel %vm493, %v486, 0
      %v534 = vsel %vm493, %v488, 0
      %v537 = vsel %vm493, %v490, 0
      %v540 = vsel %vm493, %v492, 0
      %542 = vmatprep.subr.bf16.mxu0 0
      %543 = vmatpush1.bf16.xpose.msra.mxu0 %v519
      %544 = vmatprep.subr.bf16.mxu0 0
      %545 = vmatpush1.bf16.xpose.msra.mxu0 %v522
      %546 = vmatprep.subr.bf16.mxu0 0
      %547 = vmatpush1.bf16.xpose.msra.mxu0 %v525
      %548 = vmatprep.subr.bf16.mxu0 0
      %549 = vmatpush1.bf16.xpose.msra.mxu0 %v528
      %550 = vmatprep.subr.bf16.mxu0 0
      %551 = vmatpush1.bf16.xpose.msra.mxu0 %v531
      %552 = vmatprep.subr.bf16.mxu0 0
      %553 = vmatpush1.bf16.xpose.msra.mxu0 %v534
      %554 = vmatprep.subr.bf16.mxu0 0
      %555 = vmatpush1.bf16.xpose.msra.mxu0 %v537
      %556 = vmatprep.subr.bf16.mxu0 0
      %557 = vmatpush1.bf16.xpose.msra.mxu0 %v540
      %558 = vmatprep.subr.bf16.mxu0 0
      %559 = vmatpush1.bf16.xpose.msra.mxu0 0
      %560 = vmatprep.subr.bf16.mxu0 0
      %561 = vmatpush1.bf16.xpose.msra.mxu0 0
      %562 = vmatprep.subr.bf16.mxu0 0
      %563 = vmatpush1.bf16.xpose.msra.mxu0 0
      %564 = vmatprep.subr.bf16.mxu0 0
      %565 = vmatpush1.bf16.xpose.msra.mxu0 0
      %566 = vmatprep.subr.bf16.mxu0 0
      %567 = vmatpush1.bf16.xpose.msra.mxu0 0
      %568 = vmatprep.subr.bf16.mxu0 0
      %569 = vmatpush1.bf16.xpose.msra.mxu0 0
      %570 = vmatprep.subr.bf16.mxu0 0
      %571 = vmatpush1.bf16.xpose.msra.mxu0 0
      %572 = vmatprep.subr.bf16.mxu0 0
      %573 = vmatpush1.bf16.xpose.msra.mxu0 0
      %574 = vmatprep.mubr.bf16.mxu0 0
      %575 = vmatmul.mubr.bf16.gmra.mrb[0].mxu0 %v495
      %v576 = vpop.f32.mrb[0].mxu0
      %v577 = vadd.f32 %v467, %v576
      %v578 = vpop.f32.mrb[0].mxu0
      %v579 = vpop.f32.mrb[0].mxu0
      %v580 = vadd.f32 %v467, %v579
      %v581 = vpop.f32.mrb[0].mxu0
      %582 = vmatprep.mubr.bf16.mxu0 0
      %583 = vmatmul.mubr.bf16.gmra.mrb[0].mxu0 %v498
      %v584 = vpop.f32.mrb[0].mxu0
      %v585 = vadd.f32 %v467, %v584
      %v586 = vpop.f32.mrb[0].mxu0
      %v587 = vpop.f32.mrb[0].mxu0
      %v588 = vadd.f32 %v467, %v587
      %v589 = vpop.f32.mrb[0].mxu0
      %590 = vmatprep.mubr.bf16.mxu0 0
      %591 = vmatmul.mubr.bf16.gmra.mrb[0].mxu0 %v501
      %v592 = vpop.f32.mrb[0].mxu0
      %v593 = vadd.f32 %v467, %v592
      %v594 = vpop.f32.mrb[0].mxu0
      %v595 = vpop.f32.mrb[0].mxu0
      %v596 = vadd.f32 %v467, %v595
      %v597 = vpop.f32.mrb[0].mxu0
      %598 = vmatprep.mubr.bf16.mxu0 0
      %599 = vmatmul.mubr.bf16.gmra.mrb[0].mxu0 %v504
      %v600 = vpop.f32.mrb[0].mxu0
      %v601 = vadd.f32 %v467, %v600
      %v602 = vpop.f32.mrb[0].mxu0
      %v603 = vpop.f32.mrb[0].mxu0
      %v604 = vadd.f32 %v467, %v603
      %v605 = vpop.f32.mrb[0].mxu0
      %606 = vmatprep.mubr.bf16.mxu0 0
      %607 = vmatmul.mubr.bf16.gmra.mrb[0].mxu0 %v507
      %v608 = vpop.f32.mrb[0].mxu0
      %v609 = vadd.f32 %v467, %v608
      %v610 = vpop.f32.mrb[0].mxu0
      %v611 = vpop.f32.mrb[0].mxu0
      %v612 = vadd.f32 %v467, %v611
      %v613 = vpop.f32.mrb[0].mxu0
      %614 = vmatprep.mubr.bf16.mxu0 0
      %615 = vmatmul.mubr.bf16.gmra.mrb[0].mxu0 %v510
      %v616 = vpop.f32.mrb[0].mxu0
      %v617 = vadd.f32 %v467, %v616
      %v618 = vpop.f32.mrb[0].mxu0
      %v619 = vpop.f32.mrb[0].mxu0
      %v620 = vadd.f32 %v467, %v619
      %v621 = vpop.f32.mrb[0].mxu0
      %622 = vmatprep.mubr.bf16.mxu0 0
      %623 = vmatmul.mubr.bf16.gmra.mrb[0].mxu0 %v513
      %v624 = vpop.f32.mrb[0].mxu0
      %v625 = vadd.f32 %v467, %v624
      %v626 = vpop.f32.mrb[0].mxu0
      %v627 = vpop.f32.mrb[0].mxu0
      %v628 = vadd.f32 %v467, %v627
      %v629 = vpop.f32.mrb[0].mxu0
      %630 = vmatprep.mubr.bf16.mxu0 0
      %631 = vmatmul.mubr.bf16.gmra.mrb[0].mxu0 %v516
      %v632 = vpop.f32.mrb[0].mxu0
      %v633 = vadd.f32 %v467, %v632
      %v634 = vpop.f32.mrb[0].mxu0
      %v635 = vpop.f32.mrb[0].mxu0
      %v636 = vadd.f32 %v467, %v635
      %v637 = vpop.f32.mrb[0].mxu0
      %638 = vdwg.mxu0
      %639 = vmax.xlane.f32.xlu0 %v577
      %v640 = vpop.xlane.xlu0 %639
      %641 = vmax.xlane.f32.xlu0 %v580
      %v642 = vpop.xlane.xlu0 %641
      %643 = vmax.xlane.f32.xlu0 %v585
      %v644 = vpop.xlane.xlu0 %643
      %645 = vmax.xlane.f32.xlu0 %v588
      %v646 = vpop.xlane.xlu0 %645
      %647 = vmax.xlane.f32.xlu0 %v593
      %v648 = vpop.xlane.xlu0 %647
      %649 = vmax.xlane.f32.xlu0 %v596
      %v650 = vpop.xlane.xlu0 %649
      %651 = vmax.xlane.f32.xlu0 %v601
      %v652 = vpop.xlane.xlu0 %651
      %653 = vmax.xlane.f32.xlu0 %v604
      %v654 = vpop.xlane.xlu0 %653
      %655 = vmax.xlane.f32.xlu0 %v609
      %v656 = vpop.xlane.xlu0 %655
      %657 = vmax.xlane.f32.xlu0 %v612
      %v658 = vpop.xlane.xlu0 %657
      %659 = vmax.xlane.f32.xlu0 %v617
      %v660 = vpop.xlane.xlu0 %659
      %661 = vmax.xlane.f32.xlu0 %v620
      %v662 = vpop.xlane.xlu0 %661
      %663 = vmax.xlane.f32.xlu0 %v625
      %v664 = vpop.xlane.xlu0 %663
      %665 = vmax.xlane.f32.xlu0 %v628
      %v666 = vpop.xlane.xlu0 %665
      %667 = vmax.xlane.f32.xlu0 %v633
      %v668 = vpop.xlane.xlu0 %667
      %669 = vmax.xlane.f32.xlu0 %v636
      %v670 = vpop.xlane.xlu0 %669
      %v671 = vsub.f32 %v577, %v640
      %v672 = vsub.f32 %v580, %v642
      %v673 = vsub.f32 %v585, %v644
      %v674 = vsub.f32 %v588, %v646
      %v675 = vsub.f32 %v593, %v648
      %v676 = vsub.f32 %v596, %v650
      %v677 = vsub.f32 %v601, %v652
      %v678 = vsub.f32 %v604, %v654
      %v679 = vsub.f32 %v609, %v656
      %v680 = vsub.f32 %v612, %v658
      %v681 = vsub.f32 %v617, %v660
      %v682 = vsub.f32 %v620, %v662
      %v683 = vsub.f32 %v625, %v664
      %v684 = vsub.f32 %v628, %v666
      %v685 = vsub.f32 %v633, %v668
      %v686 = vsub.f32 %v636, %v670
      %v687 = vmul.f32 %v671, 1.442695
      %v688 = vpow.pop %v687
      %v689 = vmul.f32 %v672, 1.442695
      %v690 = vpow.pop %v689
      %v691 = vmul.f32 %v673, 1.442695
      %v692 = vpow.pop %v691
      %v693 = vmul.f32 %v674, 1.442695
      %v694 = vpow.pop %v693
      %v695 = vmul.f32 %v675, 1.442695
      %v696 = vpow.pop %v695
      %v697 = vmul.f32 %v676, 1.442695
      %v698 = vpow.pop %v697
      %v699 = vmul.f32 %v677, 1.442695
      %v700 = vpow.pop %v699
      %v701 = vmul.f32 %v678, 1.442695
      %v702 = vpow.pop %v701
      %v703 = vmul.f32 %v679, 1.442695
      %v704 = vpow.pop %v703
      %v705 = vmul.f32 %v680, 1.442695
      %v706 = vpow.pop %v705
      %v707 = vmul.f32 %v681, 1.442695
      %v708 = vpow.pop %v707
      %v709 = vmul.f32 %v682, 1.442695
      %v710 = vpow.pop %v709
      %v711 = vmul.f32 %v683, 1.442695
      %v712 = vpow.pop %v711
      %v713 = vmul.f32 %v684, 1.442695
      %v714 = vpow.pop %v713
      %v715 = vmul.f32 %v685, 1.442695
      %v716 = vpow.pop %v715
      %v717 = vmul.f32 %v686, 1.442695
      %v718 = vpow.pop %v717
      %719 = vadd.xlane.f32.xlu0 %v688
      %v720 = vpop.xlane.xlu0 %719
      %721 = vadd.xlane.f32.xlu0 %v690
      %v722 = vpop.xlane.xlu0 %721
      %723 = vadd.xlane.f32.xlu0 %v692
      %v724 = vpop.xlane.xlu0 %723
      %725 = vadd.xlane.f32.xlu0 %v694
      %v726 = vpop.xlane.xlu0 %725
      %727 = vadd.xlane.f32.xlu0 %v696
      %v728 = vpop.xlane.xlu0 %727
      %729 = vadd.xlane.f32.xlu0 %v698
      %v730 = vpop.xlane.xlu0 %729
      %731 = vadd.xlane.f32.xlu0 %v700
      %v732 = vpop.xlane.xlu0 %731
      %733 = vadd.xlane.f32.xlu0 %v702
      %v734 = vpop.xlane.xlu0 %733
      %735 = vadd.xlane.f32.xlu0 %v704
      %v736 = vpop.xlane.xlu0 %735
      %737 = vadd.xlane.f32.xlu0 %v706
      %v738 = vpop.xlane.xlu0 %737
      %739 = vadd.xlane.f32.xlu0 %v708
      %v740 = vpop.xlane.xlu0 %739
      %741 = vadd.xlane.f32.xlu0 %v710
      %v742 = vpop.xlane.xlu0 %741
      %743 = vadd.xlane.f32.xlu0 %v712
      %v744 = vpop.xlane.xlu0 %743
      %745 = vadd.xlane.f32.xlu0 %v714
      %v746 = vpop.xlane.xlu0 %745
      %747 = vadd.xlane.f32.xlu0 %v716
      %v748 = vpop.xlane.xlu0 %747
      %749 = vadd.xlane.f32.xlu0 %v718
      %v750 = vpop.xlane.xlu0 %749
      %v751 = vrcp.pop %v720
      %v752 = vrcp.pop %v722
      %v753 = vrcp.pop %v724
      %v754 = vrcp.pop %v726
      %v755 = vrcp.pop %v728
      %v756 = vrcp.pop %v730
      %v757 = vrcp.pop %v732
      %v758 = vrcp.pop %v734
      %v759 = vrcp.pop %v736
      %v760 = vrcp.pop %v738
      %v761 = vrcp.pop %v740
      %v762 = vrcp.pop %v742
      %v763 = vrcp.pop %v744
      %v764 = vrcp.pop %v746
      %v765 = vrcp.pop %v748
      %v766 = vrcp.pop %v750
      %v767 = vmul.f32 %v688, %v751
      %v768 = vmul.f32 %v690, %v752
      %v769 = vmul.f32 %v692, %v753
      %v770 = vmul.f32 %v694, %v754
      %v771 = vmul.f32 %v696, %v755
      %v772 = vmul.f32 %v698, %v756
      %v773 = vmul.f32 %v700, %v757
      %v774 = vmul.f32 %v702, %v758
      %v775 = vmul.f32 %v704, %v759
      %v776 = vmul.f32 %v706, %v760
      %v777 = vmul.f32 %v708, %v761
      %v778 = vmul.f32 %v710, %v762
      %v779 = vmul.f32 %v712, %v763
      %v780 = vmul.f32 %v714, %v764
      %v781 = vmul.f32 %v716, %v765
      %v782 = vmul.f32 %v718, %v766
      %v783 = vpack.c.bf16 %v768, %v767
      %v784 = vpack.c.bf16 %v770, %v769
      %v785 = vpack.c.bf16 %v772, %v771
      %v786 = vpack.c.bf16 %v774, %v773
      %v787 = vpack.c.bf16 %v776, %v775
      %v788 = vpack.c.bf16 %v778, %v777
      %v789 = vpack.c.bf16 %v780, %v779
      %v790 = vpack.c.bf16 %v782, %v781
      %791 = vrot.lane.b32.xlu0 %v454, 64
      %v792 = vpop.permute.xlu0 %791
      %793 = vrot.lane.b32.xlu0 %v455, 64
      %v794 = vpop.permute.xlu0 %793
      %795 = vrot.lane.b32.xlu0 %v456, 64
      %v796 = vpop.permute.xlu0 %795
      %797 = vrot.lane.b32.xlu0 %v457, 64
      %v798 = vpop.permute.xlu0 %797
      %799 = vrot.lane.b32.xlu0 %v458, 64
      %v800 = vpop.permute.xlu0 %799
      %801 = vrot.lane.b32.xlu0 %v459, 64
      %v802 = vpop.permute.xlu0 %801
      %803 = vrot.lane.b32.xlu0 %v460, 64
      %v804 = vpop.permute.xlu0 %803
      %805 = vrot.lane.b32.xlu0 %v461, 64
      %v806 = vpop.permute.xlu0 %805
      %815 = vmatprep.subr.bf16.mxu0 0
      %816 = vmatpush1.bf16.msra.mxu0 %v792
      %817 = vmatprep.subr.bf16.mxu0 0
      %818 = vmatpush1.bf16.msra.mxu0 %v794
      %819 = vmatprep.subr.bf16.mxu0 0
      %820 = vmatpush1.bf16.msra.mxu0 %v796
      %821 = vmatprep.subr.bf16.mxu0 0
      %822 = vmatpush1.bf16.msra.mxu0 %v798
      %823 = vmatprep.subr.bf16.mxu0 0
      %824 = vmatpush1.bf16.msra.mxu0 %v800
      %825 = vmatprep.subr.bf16.mxu0 0
      %826 = vmatpush1.bf16.msra.mxu0 %v802
      %827 = vmatprep.subr.bf16.mxu0 0
      %828 = vmatpush1.bf16.msra.mxu0 %v804
      %829 = vmatprep.subr.bf16.mxu0 0
      %830 = vmatpush1.bf16.msra.mxu0 %v806
      %831 = vmatprep.subr.bf16.mxu0 0
      %832 = vmatpush1.bf16.msra.mxu0 0
      %833 = vmatprep.subr.bf16.mxu0 0
      %834 = vmatpush1.bf16.msra.mxu0 0
      %835 = vmatprep.subr.bf16.mxu0 0
      %836 = vmatpush1.bf16.msra.mxu0 0
      %837 = vmatprep.subr.bf16.mxu0 0
      %838 = vmatpush1.bf16.msra.mxu0 0
      %839 = vmatprep.subr.bf16.mxu0 0
      %840 = vmatpush1.bf16.msra.mxu0 0
      %841 = vmatprep.subr.bf16.mxu0 0
      %842 = vmatpush1.bf16.msra.mxu0 0
      %843 = vmatprep.subr.bf16.mxu0 0
      %844 = vmatpush1.bf16.msra.mxu0 0
      %845 = vmatprep.subr.bf16.mxu0 0
      %846 = vmatpush1.bf16.msra.mxu0 0
      %847 = vmatprep.mubr.bf16.mxu0 0
      %848 = vmatmul.mubr.bf16.gmra.mrb[0].mxu0 %v783
      %v849 = vpop.f32.mrb[0].mxu0
      %v850 = vadd.f32 0.0, %v849
      %v851 = vpop.f32.mrb[0].mxu0
      %v852 = vpop.f32.mrb[0].mxu0
      %v853 = vadd.f32 0.0, %v852
      %v854 = vpop.f32.mrb[0].mxu0
      %855 = vmatprep.mubr.bf16.mxu0 0
      %856 = vmatmul.mubr.bf16.gmra.mrb[0].mxu0 %v784
      %v857 = vpop.f32.mrb[0].mxu0
      %v858 = vadd.f32 0.0, %v857
      %v859 = vpop.f32.mrb[0].mxu0
      %v860 = vpop.f32.mrb[0].mxu0
      %v861 = vadd.f32 0.0, %v860
      %v862 = vpop.f32.mrb[0].mxu0
      %863 = vmatprep.mubr.bf16.mxu0 0
      %864 = vmatmul.mubr.bf16.gmra.mrb[0].mxu0 %v785
      %v865 = vpop.f32.mrb[0].mxu0
      %v866 = vadd.f32 0.0, %v865
      %v867 = vpop.f32.mrb[0].mxu0
      %v868 = vpop.f32.mrb[0].mxu0
      %v869 = vadd.f32 0.0, %v868
      %v870 = vpop.f32.mrb[0].mxu0
      %871 = vmatprep.mubr.bf16.mxu0 0
      %872 = vmatmul.mubr.bf16.gmra.mrb[0].mxu0 %v786
      %v873 = vpop.f32.mrb[0].mxu0
      %v874 = vadd.f32 0.0, %v873
      %v875 = vpop.f32.mrb[0].mxu0
      %v876 = vpop.f32.mrb[0].mxu0
      %v877 = vadd.f32 0.0, %v876
      %v878 = vpop.f32.mrb[0].mxu0
      %879 = vmatprep.mubr.bf16.mxu0 0
      %880 = vmatmul.mubr.bf16.gmra.mrb[0].mxu0 %v787
      %v881 = vpop.f32.mrb[0].mxu0
      %v882 = vadd.f32 0.0, %v881
      %v883 = vpop.f32.mrb[0].mxu0
      %v884 = vpop.f32.mrb[0].mxu0
      %v885 = vadd.f32 0.0, %v884
      %v886 = vpop.f32.mrb[0].mxu0
      %887 = vmatprep.mubr.bf16.mxu0 0
      %888 = vmatmul.mubr.bf16.gmra.mrb[0].mxu0 %v788
      %v889 = vpop.f32.mrb[0].mxu0
      %v890 = vadd.f32 0.0, %v889
      %v891 = vpop.f32.mrb[0].mxu0
      %v892 = vpop.f32.mrb[0].mxu0
      %v893 = vadd.f32 0.0, %v892
      %v894 = vpop.f32.mrb[0].mxu0
      %895 = vmatprep.mubr.bf16.mxu0 0
      %896 = vmatmul.mubr.bf16.gmra.mrb[0].mxu0 %v789
      %v897 = vpop.f32.mrb[0].mxu0
      %v898 = vadd.f32 0.0, %v897
      %v899 = vpop.f32.mrb[0].mxu0
      %v900 = vpop.f32.mrb[0].mxu0
      %v901 = vadd.f32 0.0, %v900
      %v902 = vpop.f32.mrb[0].mxu0
      %903 = vmatprep.mubr.bf16.mxu0 0
      %904 = vmatmul.mubr.bf16.gmra.mrb[0].mxu0 %v790
      %v905 = vpop.f32.mrb[0].mxu0
      %v906 = vadd.f32 0.0, %v905
      %v907 = vpop.f32.mrb[0].mxu0
      %v908 = vpop.f32.mrb[0].mxu0
      %v909 = vadd.f32 0.0, %v908
      %v910 = vpop.f32.mrb[0].mxu0
      %911 = vdwg.mxu0
      %v912 = vpack.c.bf16 %v853, %v850
      %v913 = vpack.c.bf16 %v861, %v858
      %v914 = vpack.c.bf16 %v869, %v866
      %v915 = vpack.c.bf16 %v877, %v874
      %v916 = vpack.c.bf16 %v885, %v882
      %v917 = vpack.c.bf16 %v893, %v890
      %v918 = vpack.c.bf16 %v901, %v898
      %v919 = vpack.c.bf16 %v909, %v906
      %920 = vst.msk [vmem:[#allocation2] sm:$0xff] %vm493, %v912
      %921 = vst.msk [vmem:[#allocation2 + $0x8] sm:$0xff] %vm493, %v913
      %922 = vst.msk [vmem:[#allocation2 + $0x10] sm:$0xff] %vm493, %v914
      %923 = vst.msk [vmem:[#allocation2 + $0x18] sm:$0xff] %vm493, %v915
      %924 = vst.msk [vmem:[#allocation2 + $0x20] sm:$0xff] %vm493, %v916
      %925 = vst.msk [vmem:[#allocation2 + $0x28] sm:$0xff] %vm493, %v917
      %926 = vst.msk [vmem:[#allocation2 + $0x30] sm:$0xff] %vm493, %v918
      %927 = vst.msk [vmem:[#allocation2 + $0x38] sm:$0xff] %vm493, %v919
      %928 = vrot.lane.b32.xlu0 %v454, 124
      %v929 = vpop.permute.xlu0 %928
      %930 = vrot.lane.b32.xlu0 %v455, 124
      %v931 = vpop.permute.xlu0 %930
      %932 = vrot.lane.b32.xlu0 %v456, 124
      %v933 = vpop.permute.xlu0 %932
      %934 = vrot.lane.b32.xlu0 %v457, 124
      %v935 = vpop.permute.xlu0 %934
      %936 = vrot.lane.b32.xlu0 %v458, 124
      %v937 = vpop.permute.xlu0 %936
      %938 = vrot.lane.b32.xlu0 %v459, 124
      %v939 = vpop.permute.xlu0 %938
      %940 = vrot.lane.b32.xlu0 %v460, 124
      %v941 = vpop.permute.xlu0 %940
      %942 = vrot.lane.b32.xlu0 %v461, 124
      %v943 = vpop.permute.xlu0 %942
      %944 = vrot.lane.b32.xlu0 %v454, 92
      %v945 = vpop.permute.xlu0 %944
      %946 = vrot.lane.b32.xlu0 %v455, 92
      %v947 = vpop.permute.xlu0 %946
      %948 = vrot.lane.b32.xlu0 %v456, 92
      %v949 = vpop.permute.xlu0 %948
      %950 = vrot.lane.b32.xlu0 %v457, 92
      %v951 = vpop.permute.xlu0 %950
      %952 = vrot.lane.b32.xlu0 %v458, 92
      %v953 = vpop.permute.xlu0 %952
      %954 = vrot.lane.b32.xlu0 %v459, 92
      %v955 = vpop.permute.xlu0 %954
      %956 = vrot.lane.b32.xlu0 %v460, 92
      %v957 = vpop.permute.xlu0 %956
      %958 = vrot.lane.b32.xlu0 %v461, 92
      %v959 = vpop.permute.xlu0 %958
      %v961 = vsel %vm493, %v929, 0
      %v964 = vsel %vm493, %v931, 0
      %v967 = vsel %vm493, %v933, 0
      %v970 = vsel %vm493, %v935, 0
      %v973 = vsel %vm493, %v937, 0
      %v976 = vsel %vm493, %v939, 0
      %v979 = vsel %vm493, %v941, 0
      %v982 = vsel %vm493, %v943, 0
      %v985 = vsel %vm493, %v945, 0
      %v988 = vsel %vm493, %v947, 0
      %v991 = vsel %vm493, %v949, 0
      %v994 = vsel %vm493, %v951, 0
      %v997 = vsel %vm493, %v953, 0
      %v1000 = vsel %vm493, %v955, 0
      %v1003 = vsel %vm493, %v957, 0
      %v1006 = vsel %vm493, %v959, 0
      %1008 = vmatprep.subr.bf16.mxu0 0
      %1009 = vmatpush1.bf16.xpose.msra.mxu0 %v985
      %1010 = vmatprep.subr.bf16.mxu0 0
      %1011 = vmatpush1.bf16.xpose.msra.mxu0 %v988
      %1012 = vmatprep.subr.bf16.mxu0 0
      %1013 = vmatpush1.bf16.xpose.msra.mxu0 %v991
      %1014 = vmatprep.subr.bf16.mxu0 0
      %1015 = vmatpush1.bf16.xpose.msra.mxu0 %v994
      %1016 = vmatprep.subr.bf16.mxu0 0
      %1017 = vmatpush1.bf16.xpose.msra.mxu0 %v997
      %1018 = vmatprep.subr.bf16.mxu0 0
      %1019 = vmatpush1.bf16.xpose.msra.mxu0 %v1000
      %1020 = vmatprep.subr.bf16.mxu0 0
      %1021 = vmatpush1.bf16.xpose.msra.mxu0 %v1003
      %1022 = vmatprep.subr.bf16.mxu0 0
      %1023 = vmatpush1.bf16.xpose.msra.mxu0 %v1006
      %1024 = vmatprep.subr.bf16.mxu0 0
      %1025 = vmatpush1.bf16.xpose.msra.mxu0 0
      %1026 = vmatprep.subr.bf16.mxu0 0
      %1027 = vmatpush1.bf16.xpose.msra.mxu0 0
      %1028 = vmatprep.subr.bf16.mxu0 0
      %1029 = vmatpush1.bf16.xpose.msra.mxu0 0
      %1030 = vmatprep.subr.bf16.mxu0 0
      %1031 = vmatpush1.bf16.xpose.msra.mxu0 0
      %1032 = vmatprep.subr.bf16.mxu0 0
      %1033 = vmatpush1.bf16.xpose.msra.mxu0 0
      %1034 = vmatprep.subr.bf16.mxu0 0
      %1035 = vmatpush1.bf16.xpose.msra.mxu0 0
      %1036 = vmatprep.subr.bf16.mxu0 0
      %1037 = vmatpush1.bf16.xpose.msra.mxu0 0
      %1038 = vmatprep.subr.bf16.mxu0 0
      %1039 = vmatpush1.bf16.xpose.msra.mxu0 0
      %1040 = vmatprep.mubr.bf16.mxu0 0
      %1041 = vmatmul.mubr.bf16.gmra.mrb[0].mxu0 %v961
      %v1042 = vpop.f32.mrb[0].mxu0
      %v1043 = vadd.f32 %v467, %v1042
      %v1044 = vpop.f32.mrb[0].mxu0
      %v1045 = vpop.f32.mrb[0].mxu0
      %v1046 = vadd.f32 %v467, %v1045
      %v1047 = vpop.f32.mrb[0].mxu0
      %1048 = vmatprep.mubr.bf16.mxu0 0
      %1049 = vmatmul.mubr.bf16.gmra.mrb[0].mxu0 %v964
      %v1050 = vpop.f32.mrb[0].mxu0
      %v1051 = vadd.f32 %v467, %v1050
      %v1052 = vpop.f32.mrb[0].mxu0
      %v1053 = vpop.f32.mrb[0].mxu0
      %v1054 = vadd.f32 %v467, %v1053
      %v1055 = vpop.f32.mrb[0].mxu0
      %1056 = vmatprep.mubr.bf16.mxu0 0
      %1057 = vmatmul.mubr.bf16.gmra.mrb[0].mxu0 %v967
      %v1058 = vpop.f32.mrb[0].mxu0
      %v1059 = vadd.f32 %v467, %v1058
      %v1060 = vpop.f32.mrb[0].mxu0
      %v1061 = vpop.f32.mrb[0].mxu0
      %v1062 = vadd.f32 %v467, %v1061
      %v1063 = vpop.f32.mrb[0].mxu0
      %1064 = vmatprep.mubr.bf16.mxu0 0
      %1065 = vmatmul.mubr.bf16.gmra.mrb[0].mxu0 %v970
      %v1066 = vpop.f32.mrb[0].mxu0
      %v1067 = vadd.f32 %v467, %v1066
      %v1068 = vpop.f32.mrb[0].mxu0
      %v1069 = vpop.f32.mrb[0].mxu0
      %v1070 = vadd.f32 %v467, %v1069
      %v1071 = vpop.f32.mrb[0].mxu0
      %1072 = vmatprep.mubr.bf16.mxu0 0
      %1073 = vmatmul.mubr.bf16.gmra.mrb[0].mxu0 %v973
      %v1074 = vpop.f32.mrb[0].mxu0
      %v1075 = vadd.f32 %v467, %v1074
      %v1076 = vpop.f32.mrb[0].mxu0
      %v1077 = vpop.f32.mrb[0].mxu0
      %v1078 = vadd.f32 %v467, %v1077
      %v1079 = vpop.f32.mrb[0].mxu0
      %1080 = vmatprep.mubr.bf16.mxu0 0
      %1081 = vmatmul.mubr.bf16.gmra.mrb[0].mxu0 %v976
      %v1082 = vpop.f32.mrb[0].mxu0
      %v1083 = vadd.f32 %v467, %v1082
      %v1084 = vpop.f32.mrb[0].mxu0
      %v1085 = vpop.f32.mrb[0].mxu0
      %v1086 = vadd.f32 %v467, %v1085
      %v1087 = vpop.f32.mrb[0].mxu0
      %1088 = vmatprep.mubr.bf16.mxu0 0
      %1089 = vmatmul.mubr.bf16.gmra.mrb[0].mxu0 %v979
      %v1090 = vpop.f32.mrb[0].mxu0
      %v1091 = vadd.f32 %v467, %v1090
      %v1092 = vpop.f32.mrb[0].mxu0
      %v1093 = vpop.f32.mrb[0].mxu0
      %v1094 = vadd.f32 %v467, %v1093
      %v1095 = vpop.f32.mrb[0].mxu0
      %1096 = vmatprep.mubr.bf16.mxu0 0
      %1097 = vmatmul.mubr.bf16.gmra.mrb[0].mxu0 %v982
      %v1098 = vpop.f32.mrb[0].mxu0
      %v1099 = vadd.f32 %v467, %v1098
      %v1100 = vpop.f32.mrb[0].mxu0
      %v1101 = vpop.f32.mrb[0].mxu0
      %v1102 = vadd.f32 %v467, %v1101
      %v1103 = vpop.f32.mrb[0].mxu0
      %1104 = vdwg.mxu0
      %1105 = vmax.xlane.f32.xlu0 %v1043
      %v1106 = vpop.xlane.xlu0 %1105
      %1107 = vmax.xlane.f32.xlu0 %v1046
      %v1108 = vpop.xlane.xlu0 %1107
      %1109 = vmax.xlane.f32.xlu0 %v1051
      %v1110 = vpop.xlane.xlu0 %1109
      %1111 = vmax.xlane.f32.xlu0 %v1054
      %v1112 = vpop.xlane.xlu0 %1111
      %1113 = vmax.xlane.f32.xlu0 %v1059
      %v1114 = vpop.xlane.xlu0 %1113
      %1115 = vmax.xlane.f32.xlu0 %v1062
      %v1116 = vpop.xlane.xlu0 %1115
      %1117 = vmax.xlane.f32.xlu0 %v1067
      %v1118 = vpop.xlane.xlu0 %1117
      %1119 = vmax.xlane.f32.xlu0 %v1070
      %v1120 = vpop.xlane.xlu0 %1119
      %1121 = vmax.xlane.f32.xlu0 %v1075
      %v1122 = vpop.xlane.xlu0 %1121
      %1123 = vmax.xlane.f32.xlu0 %v1078
      %v1124 = vpop.xlane.xlu0 %1123
      %1125 = vmax.xlane.f32.xlu0 %v1083
      %v1126 = vpop.xlane.xlu0 %1125
      %1127 = vmax.xlane.f32.xlu0 %v1086
      %v1128 = vpop.xlane.xlu0 %1127
      %1129 = vmax.xlane.f32.xlu0 %v1091
      %v1130 = vpop.xlane.xlu0 %1129
      %1131 = vmax.xlane.f32.xlu0 %v1094
      %v1132 = vpop.xlane.xlu0 %1131
      %1133 = vmax.xlane.f32.xlu0 %v1099
      %v1134 = vpop.xlane.xlu0 %1133
      %1135 = vmax.xlane.f32.xlu0 %v1102
      %v1136 = vpop.xlane.xlu0 %1135
      %v1137 = vsub.f32 %v1043, %v1106
      %v1138 = vsub.f32 %v1046, %v1108
      %v1139 = vsub.f32 %v1051, %v1110
      %v1140 = vsub.f32 %v1054, %v1112
      %v1141 = vsub.f32 %v1059, %v1114
      %v1142 = vsub.f32 %v1062, %v1116
      %v1143 = vsub.f32 %v1067, %v1118
      %v1144 = vsub.f32 %v1070, %v1120
      %v1145 = vsub.f32 %v1075, %v1122
      %v1146 = vsub.f32 %v1078, %v1124
      %v1147 = vsub.f32 %v1083, %v1126
      %v1148 = vsub.f32 %v1086, %v1128
      %v1149 = vsub.f32 %v1091, %v1130
      %v1150 = vsub.f32 %v1094, %v1132
      %v1151 = vsub.f32 %v1099, %v1134
      %v1152 = vsub.f32 %v1102, %v1136
      %v1153 = vmul.f32 %v1137, 1.442695
      %v1154 = vpow.pop %v1153
      %v1155 = vmul.f32 %v1138, 1.442695
      %v1156 = vpow.pop %v1155
      %v1157 = vmul.f32 %v1139, 1.442695
      %v1158 = vpow.pop %v1157
      %v1159 = vmul.f32 %v1140, 1.442695
      %v1160 = vpow.pop %v1159
      %v1161 = vmul.f32 %v1141, 1.442695
      %v1162 = vpow.pop %v1161
      %v1163 = vmul.f32 %v1142, 1.442695
      %v1164 = vpow.pop %v1163
      %v1165 = vmul.f32 %v1143, 1.442695
      %v1166 = vpow.pop %v1165
      %v1167 = vmul.f32 %v1144, 1.442695
      %v1168 = vpow.pop %v1167
      %v1169 = vmul.f32 %v1145, 1.442695
      %v1170 = vpow.pop %v1169
      %v1171 = vmul.f32 %v1146, 1.442695
      %v1172 = vpow.pop %v1171
      %v1173 = vmul.f32 %v1147, 1.442695
      %v1174 = vpow.pop %v1173
      %v1175 = vmul.f32 %v1148, 1.442695
      %v1176 = vpow.pop %v1175
      %v1177 = vmul.f32 %v1149, 1.442695
      %v1178 = vpow.pop %v1177
      %v1179 = vmul.f32 %v1150, 1.442695
      %v1180 = vpow.pop %v1179
      %v1181 = vmul.f32 %v1151, 1.442695
      %v1182 = vpow.pop %v1181
      %v1183 = vmul.f32 %v1152, 1.442695
      %v1184 = vpow.pop %v1183
      %1185 = vadd.xlane.f32.xlu0 %v1154
      %v1186 = vpop.xlane.xlu0 %1185
      %1187 = vadd.xlane.f32.xlu0 %v1156
      %v1188 = vpop.xlane.xlu0 %1187
      %1189 = vadd.xlane.f32.xlu0 %v1158
      %v1190 = vpop.xlane.xlu0 %1189
      %1191 = vadd.xlane.f32.xlu0 %v1160
      %v1192 = vpop.xlane.xlu0 %1191
      %1193 = vadd.xlane.f32.xlu0 %v1162
      %v1194 = vpop.xlane.xlu0 %1193
      %1195 = vadd.xlane.f32.xlu0 %v1164
      %v1196 = vpop.xlane.xlu0 %1195
      %1197 = vadd.xlane.f32.xlu0 %v1166
      %v1198 = vpop.xlane.xlu0 %1197
      %1199 = vadd.xlane.f32.xlu0 %v1168
      %v1200 = vpop.xlane.xlu0 %1199
      %1201 = vadd.xlane.f32.xlu0 %v1170
      %v1202 = vpop.xlane.xlu0 %1201
      %1203 = vadd.xlane.f32.xlu0 %v1172
      %v1204 = vpop.xlane.xlu0 %1203
      %1205 = vadd.xlane.f32.xlu0 %v1174
      %v1206 = vpop.xlane.xlu0 %1205
      %1207 = vadd.xlane.f32.xlu0 %v1176
      %v1208 = vpop.xlane.xlu0 %1207
      %1209 = vadd.xlane.f32.xlu0 %v1178
      %v1210 = vpop.xlane.xlu0 %1209
      %1211 = vadd.xlane.f32.xlu0 %v1180
      %v1212 = vpop.xlane.xlu0 %1211
      %1213 = vadd.xlane.f32.xlu0 %v1182
      %v1214 = vpop.xlane.xlu0 %1213
      %1215 = vadd.xlane.f32.xlu0 %v1184
      %v1216 = vpop.xlane.xlu0 %1215
      %v1217 = vrcp.pop %v1186
      %v1218 = vrcp.pop %v1188
      %v1219 = vrcp.pop %v1190
      %v1220 = vrcp.pop %v1192
      %v1221 = vrcp.pop %v1194
      %v1222 = vrcp.pop %v1196
      %v1223 = vrcp.pop %v1198
      %v1224 = vrcp.pop %v1200
      %v1225 = vrcp.pop %v1202
      %v1226 = vrcp.pop %v1204
      %v1227 = vrcp.pop %v1206
      %v1228 = vrcp.pop %v1208
      %v1229 = vrcp.pop %v1210
      %v1230 = vrcp.pop %v1212
      %v1231 = vrcp.pop %v1214
      %v1232 = vrcp.pop %v1216
      %v1233 = vmul.f32 %v1154, %v1217
      %v1234 = vmul.f32 %v1156, %v1218
      %v1235 = vmul.f32 %v1158, %v1219
      %v1236 = vmul.f32 %v1160, %v1220
      %v1237 = vmul.f32 %v1162, %v1221
      %v1238 = vmul.f32 %v1164, %v1222
      %v1239 = vmul.f32 %v1166, %v1223
      %v1240 = vmul.f32 %v1168, %v1224
      %v1241 = vmul.f32 %v1170, %v1225
      %v1242 = vmul.f32 %v1172, %v1226
      %v1243 = vmul.f32 %v1174, %v1227
      %v1244 = vmul.f32 %v1176, %v1228
      %v1245 = vmul.f32 %v1178, %v1229
      %v1246 = vmul.f32 %v1180, %v1230
      %v1247 = vmul.f32 %v1182, %v1231
      %v1248 = vmul.f32 %v1184, %v1232
      %v1249 = vpack.c.bf16 %v1234, %v1233
      %v1250 = vpack.c.bf16 %v1236, %v1235
      %v1251 = vpack.c.bf16 %v1238, %v1237
      %v1252 = vpack.c.bf16 %v1240, %v1239
      %v1253 = vpack.c.bf16 %v1242, %v1241
      %v1254 = vpack.c.bf16 %v1244, %v1243
      %v1255 = vpack.c.bf16 %v1246, %v1245
      %v1256 = vpack.c.bf16 %v1248, %v1247
      %1257 = vrot.lane.b32.xlu0 %v454, 60
      %v1258 = vpop.permute.xlu0 %1257
      %1259 = vrot.lane.b32.xlu0 %v455, 60
      %v1260 = vpop.permute.xlu0 %1259
      %1261 = vrot.lane.b32.xlu0 %v456, 60
      %v1262 = vpop.permute.xlu0 %1261
      %1263 = vrot.lane.b32.xlu0 %v457, 60
      %v1264 = vpop.permute.xlu0 %1263
      %1265 = vrot.lane.b32.xlu0 %v458, 60
      %v1266 = vpop.permute.xlu0 %1265
      %1267 = vrot.lane.b32.xlu0 %v459, 60
      %v1268 = vpop.permute.xlu0 %1267
      %1269 = vrot.lane.b32.xlu0 %v460, 60
      %v1270 = vpop.permute.xlu0 %1269
      %1271 = vrot.lane.b32.xlu0 %v461, 60
      %v1272 = vpop.permute.xlu0 %1271
      %1281 = vmatprep.subr.bf16.mxu0 0
      %1282 = vmatpush1.bf16.msra.mxu0 %v1258
      %1283 = vmatprep.subr.bf16.mxu0 0
      %1284 = vmatpush1.bf16.msra.mxu0 %v1260
      %1285 = vmatprep.subr.bf16.mxu0 0
      %1286 = vmatpush1.bf16.msra.mxu0 %v1262
      %1287 = vmatprep.subr.bf16.mxu0 0
      %1288 = vmatpush1.bf16.msra.mxu0 %v1264
      %1289 = vmatprep.subr.bf16.mxu0 0
      %1290 = vmatpush1.bf16.msra.mxu0 %v1266
      %1291 = vmatprep.subr.bf16.mxu0 0
      %1292 = vmatpush1.bf16.msra.mxu0 %v1268
      %1293 = vmatprep.subr.bf16.mxu0 0
      %1294 = vmatpush1.bf16.msra.mxu0 %v1270
      %1295 = vmatprep.subr.bf16.mxu0 0
      %1296 = vmatpush1.bf16.msra.mxu0 %v1272
      %1297 = vmatprep.subr.bf16.mxu0 0
      %1298 = vmatpush1.bf16.msra.mxu0 0
      %1299 = vmatprep.subr.bf16.mxu0 0
      %1300 = vmatpush1.bf16.msra.mxu0 0
      %1301 = vmatprep.subr.bf16.mxu0 0
      %1302 = vmatpush1.bf16.msra.mxu0 0
      %1303 = vmatprep.subr.bf16.mxu0 0
      %1304 = vmatpush1.bf16.msra.mxu0 0
      %1305 = vmatprep.subr.bf16.mxu0 0
      %1306 = vmatpush1.bf16.msra.mxu0 0
      %1307 = vmatprep.subr.bf16.mxu0 0
      %1308 = vmatpush1.bf16.msra.mxu0 0
      %1309 = vmatprep.subr.bf16.mxu0 0
      %1310 = vmatpush1.bf16.msra.mxu0 0
      %1311 = vmatprep.subr.bf16.mxu0 0
      %1312 = vmatpush1.bf16.msra.mxu0 0
      %1313 = vmatprep.mubr.bf16.mxu0 0
      %1314 = vmatmul.mubr.bf16.gmra.mrb[0].mxu0 %v1249
      %v1315 = vpop.f32.mrb[0].mxu0
      %v1316 = vadd.f32 0.0, %v1315
      %v1317 = vpop.f32.mrb[0].mxu0
      %v1318 = vpop.f32.mrb[0].mxu0
      %v1319 = vadd.f32 0.0, %v1318
      %v1320 = vpop.f32.mrb[0].mxu0
      %1321 = vmatprep.mubr.bf16.mxu0 0
      %1322 = vmatmul.mubr.bf16.gmra.mrb[0].mxu0 %v1250
      %v1323 = vpop.f32.mrb[0].mxu0
      %v1324 = vadd.f32 0.0, %v1323
      %v1325 = vpop.f32.mrb[0].mxu0
      %v1326 = vpop.f32.mrb[0].mxu0
      %v1327 = vadd.f32 0.0, %v1326
      %v1328 = vpop.f32.mrb[0].mxu0
      %1329 = vmatprep.mubr.bf16.mxu0 0
      %1330 = vmatmul.mubr.bf16.gmra.mrb[0].mxu0 %v1251
      %v1331 = vpop.f32.mrb[0].mxu0
      %v1332 = vadd.f32 0.0, %v1331
      %v1333 = vpop.f32.mrb[0].mxu0
      %v1334 = vpop.f32.mrb[0].mxu0
      %v1335 = vadd.f32 0.0, %v1334
      %v1336 = vpop.f32.mrb[0].mxu0
      %1337 = vmatprep.mubr.bf16.mxu0 0
      %1338 = vmatmul.mubr.bf16.gmra.mrb[0].mxu0 %v1252
      %v1339 = vpop.f32.mrb[0].mxu0
      %v1340 = vadd.f32 0.0, %v1339
      %v1341 = vpop.f32.mrb[0].mxu0
      %v1342 = vpop.f32.mrb[0].mxu0
      %v1343 = vadd.f32 0.0, %v1342
      %v1344 = vpop.f32.mrb[0].mxu0
      %1345 = vmatprep.mubr.bf16.mxu0 0
      %1346 = vmatmul.mubr.bf16.gmra.mrb[0].mxu0 %v1253
      %v1347 = vpop.f32.mrb[0].mxu0
      %v1348 = vadd.f32 0.0, %v1347
      %v1349 = vpop.f32.mrb[0].mxu0
      %v1350 = vpop.f32.mrb[0].mxu0
      %v1351 = vadd.f32 0.0, %v1350
      %v1352 = vpop.f32.mrb[0].mxu0
      %1353 = vmatprep.mubr.bf16.mxu0 0
      %1354 = vmatmul.mubr.bf16.gmra.mrb[0].mxu0 %v1254
      %v1355 = vpop.f32.mrb[0].mxu0
      %v1356 = vadd.f32 0.0, %v1355
      %v1357 = vpop.f32.mrb[0].mxu0
      %v1358 = vpop.f32.mrb[0].mxu0
      %v1359 = vadd.f32 0.0, %v1358
      %v1360 = vpop.f32.mrb[0].mxu0
      %1361 = vmatprep.mubr.bf16.mxu0 0
      %1362 = vmatmul.mubr.bf16.gmra.mrb[0].mxu0 %v1255
      %v1363 = vpop.f32.mrb[0].mxu0
      %v1364 = vadd.f32 0.0, %v1363
      %v1365 = vpop.f32.mrb[0].mxu0
      %v1366 = vpop.f32.mrb[0].mxu0
      %v1367 = vadd.f32 0.0, %v1366
      %v1368 = vpop.f32.mrb[0].mxu0
      %1369 = vmatprep.mubr.bf16.mxu0 0
      %1370 = vmatmul.mubr.bf16.gmra.mrb[0].mxu0 %v1256
      %v1371 = vpop.f32.mrb[0].mxu0
      %v1372 = vadd.f32 0.0, %v1371
      %v1373 = vpop.f32.mrb[0].mxu0
      %v1374 = vpop.f32.mrb[0].mxu0
      %v1375 = vadd.f32 0.0, %v1374
      %v1376 = vpop.f32.mrb[0].mxu0
      %1377 = vdwg.mxu0
      %v1378 = vpack.c.bf16 %v1319, %v1316
      %v1379 = vpack.c.bf16 %v1327, %v1324
      %v1380 = vpack.c.bf16 %v1335, %v1332
      %v1381 = vpack.c.bf16 %v1343, %v1340
      %v1382 = vpack.c.bf16 %v1351, %v1348
      %v1383 = vpack.c.bf16 %v1359, %v1356
      %v1384 = vpack.c.bf16 %v1367, %v1364
      %v1385 = vpack.c.bf16 %v1375, %v1372
      %1394 = vrot.lane.b32.xlu0 %v1378, 4
      %v1395 = vpop.permute.xlu0 %1394
      %1396 = vrot.lane.b32.xlu0 %v1379, 4
      %v1397 = vpop.permute.xlu0 %1396
      %1398 = vrot.lane.b32.xlu0 %v1380, 4
      %v1399 = vpop.permute.xlu0 %1398
      %1400 = vrot.lane.b32.xlu0 %v1381, 4
      %v1401 = vpop.permute.xlu0 %1400
      %1402 = vrot.lane.b32.xlu0 %v1382, 4
      %v1403 = vpop.permute.xlu0 %1402
      %1404 = vrot.lane.b32.xlu0 %v1383, 4
      %v1405 = vpop.permute.xlu0 %1404
      %1406 = vrot.lane.b32.xlu0 %v1384, 4
      %v1407 = vpop.permute.xlu0 %1406
      %1408 = vrot.lane.b32.xlu0 %v1385, 4
      %v1409 = vpop.permute.xlu0 %1408
      %vm1418 = vcmask 64544
      %1419 = vst.msk [vmem:[#allocation2] sm:$0xff] %vm1418, %v1395
      %1420 = vst.msk [vmem:[#allocation2 + $0x8] sm:$0xff] %vm1418, %v1397
      %1421 = vst.msk [vmem:[#allocation2 + $0x10] sm:$0xff] %vm1418, %v1399
      %1422 = vst.msk [vmem:[#allocation2 + $0x18] sm:$0xff] %vm1418, %v1401
      %1423 = vst.msk [vmem:[#allocation2 + $0x20] sm:$0xff] %vm1418, %v1403
      %1424 = vst.msk [vmem:[#allocation2 + $0x28] sm:$0xff] %vm1418, %v1405
      %1425 = vst.msk [vmem:[#allocation2 + $0x30] sm:$0xff] %vm1418, %v1407
      %1426 = vst.msk [vmem:[#allocation2 + $0x38] sm:$0xff] %vm1418, %v1409
      %1427 = vrot.lane.b32.xlu0 %v454, 120
      %v1428 = vpop.permute.xlu0 %1427
      %1429 = vrot.lane.b32.xlu0 %v455, 120
      %v1430 = vpop.permute.xlu0 %1429
      %1431 = vrot.lane.b32.xlu0 %v456, 120
      %v1432 = vpop.permute.xlu0 %1431
      %1433 = vrot.lane.b32.xlu0 %v457, 120
      %v1434 = vpop.permute.xlu0 %1433
      %1435 = vrot.lane.b32.xlu0 %v458, 120
      %v1436 = vpop.permute.xlu0 %1435
      %1437 = vrot.lane.b32.xlu0 %v459, 120
      %v1438 = vpop.permute.xlu0 %1437
      %1439 = vrot.lane.b32.xlu0 %v460, 120
      %v1440 = vpop.permute.xlu0 %1439
      %1441 = vrot.lane.b32.xlu0 %v461, 120
      %v1442 = vpop.permute.xlu0 %1441
      %1443 = vrot.lane.b32.xlu0 %v454, 88
      %v1444 = vpop.permute.xlu0 %1443
      %1445 = vrot.lane.b32.xlu0 %v455, 88
      %v1446 = vpop.permute.xlu0 %1445
      %1447 = vrot.lane.b32.xlu0 %v456, 88
      %v1448 = vpop.permute.xlu0 %1447
      %1449 = vrot.lane.b32.xlu0 %v457, 88
      %v1450 = vpop.permute.xlu0 %1449
      %1451 = vrot.lane.b32.xlu0 %v458, 88
      %v1452 = vpop.permute.xlu0 %1451
      %1453 = vrot.lane.b32.xlu0 %v459, 88
      %v1454 = vpop.permute.xlu0 %1453
      %1455 = vrot.lane.b32.xlu0 %v460, 88
      %v1456 = vpop.permute.xlu0 %1455
      %1457 = vrot.lane.b32.xlu0 %v461, 88
      %v1458 = vpop.permute.xlu0 %1457
      %v1460 = vsel %vm493, %v1428, 0
      %v1463 = vsel %vm493, %v1430, 0
      %v1466 = vsel %vm493, %v1432, 0
      %v1469 = vsel %vm493, %v1434, 0
      %v1472 = vsel %vm493, %v1436, 0
      %v1475 = vsel %vm493, %v1438, 0
      %v1478 = vsel %vm493, %v1440, 0
      %v1481 = vsel %vm493, %v1442, 0
      %v1484 = vsel %vm493, %v1444, 0
      %v1487 = vsel %vm493, %v1446, 0
      %v1490 = vsel %vm493, %v1448, 0
      %v1493 = vsel %vm493, %v1450, 0
      %v1496 = vsel %vm493, %v1452, 0
      %v1499 = vsel %vm493, %v1454, 0
      %v1502 = vsel %vm493, %v1456, 0
      %v1505 = vsel %vm493, %v1458, 0
      %1507 = vmatprep.subr.bf16.mxu0 0
      %1508 = vmatpush1.bf16.xpose.msra.mxu0 %v1484
      %1509 = vmatprep.subr.bf16.mxu0 0
      %1510 = vmatpush1.bf16.xpose.msra.mxu0 %v1487
      %1511 = vmatprep.subr.bf16.mxu0 0
      %1512 = vmatpush1.bf16.xpose.msra.mxu0 %v1490
      %1513 = vmatprep.subr.bf16.mxu0 0
      %1514 = vmatpush1.bf16.xpose.msra.mxu0 %v1493
      %1515 = vmatprep.subr.bf16.mxu0 0
      %1516 = vmatpush1.bf16.xpose.msra.mxu0 %v1496
      %1517 = vmatprep.subr.bf16.mxu0 0
      %1518 = vmatpush1.bf16.xpose.msra.mxu0 %v1499
      %1519 = vmatprep.subr.bf16.mxu0 0
      %1520 = vmatpush1.bf16.xpose.msra.mxu0 %v1502
      %1521 = vmatprep.subr.bf16.mxu0 0
      %1522 = vmatpush1.bf16.xpose.msra.mxu0 %v1505
      %1523 = vmatprep.subr.bf16.mxu0 0
      %1524 = vmatpush1.bf16.xpose.msra.mxu0 0
      %1525 = vmatprep.subr.bf16.mxu0 0
      %1526 = vmatpush1.bf16.xpose.msra.mxu0 0
      %1527 = vmatprep.subr.bf16.mxu0 0
      %1528 = vmatpush1.bf16.xpose.msra.mxu0 0
      %1529 = vmatprep.subr.bf16.mxu0 0
      %1530 = vmatpush1.bf16.xpose.msra.mxu0 0
      %1531 = vmatprep.subr.bf16.mxu0 0
      %1532 = vmatpush1.bf16.xpose.msra.mxu0 0
      %1533 = vmatprep.subr.bf16.mxu0 0
      %1534 = vmatpush1.bf16.xpose.msra.mxu0 0
      %1535 = vmatprep.subr.bf16.mxu0 0
      %1536 = vmatpush1.bf16.xpose.msra.mxu0 0
      %1537 = vmatprep.subr.bf16.mxu0 0
      %1538 = vmatpush1.bf16.xpose.msra.mxu0 0
      %1539 = vmatprep.mubr.bf16.mxu0 0
      %1540 = vmatmul.mubr.bf16.gmra.mrb[0].mxu0 %v1460
      %v1541 = vpop.f32.mrb[0].mxu0
      %v1542 = vadd.f32 %v467, %v1541
      %v1543 = vpop.f32.mrb[0].mxu0
      %v1544 = vpop.f32.mrb[0].mxu0
      %v1545 = vadd.f32 %v467, %v1544
      %v1546 = vpop.f32.mrb[0].mxu0
      %1547 = vmatprep.mubr.bf16.mxu0 0
      %1548 = vmatmul.mubr.bf16.gmra.mrb[0].mxu0 %v1463
      %v1549 = vpop.f32.mrb[0].mxu0
      %v1550 = vadd.f32 %v467, %v1549
      %v1551 = vpop.f32.mrb[0].mxu0
      %v1552 = vpop.f32.mrb[0].mxu0
      %v1553 = vadd.f32 %v467, %v1552
      %v1554 = vpop.f32.mrb[0].mxu0
      %1555 = vmatprep.mubr.bf16.mxu0 0
      %1556 = vmatmul.mubr.bf16.gmra.mrb[0].mxu0 %v1466
      %v1557 = vpop.f32.mrb[0].mxu0
      %v1558 = vadd.f32 %v467, %v1557
      %v1559 = vpop.f32.mrb[0].mxu0
      %v1560 = vpop.f32.mrb[0].mxu0
      %v1561 = vadd.f32 %v467, %v1560
      %v1562 = vpop.f32.mrb[0].mxu0
      %1563 = vmatprep.mubr.bf16.mxu0 0
      %1564 = vmatmul.mubr.bf16.gmra.mrb[0].mxu0 %v1469
      %v1565 = vpop.f32.mrb[0].mxu0
      %v1566 = vadd.f32 %v467, %v1565
      %v1567 = vpop.f32.mrb[0].mxu0
      %v1568 = vpop.f32.mrb[0].mxu0
      %v1569 = vadd.f32 %v467, %v1568
      %v1570 = vpop.f32.mrb[0].mxu0
      %1571 = vmatprep.mubr.bf16.mxu0 0
      %1572 = vmatmul.mubr.bf16.gmra.mrb[0].mxu0 %v1472
      %v1573 = vpop.f32.mrb[0].mxu0
      %v1574 = vadd.f32 %v467, %v1573
      %v1575 = vpop.f32.mrb[0].mxu0
      %v1576 = vpop.f32.mrb[0].mxu0
      %v1577 = vadd.f32 %v467, %v1576
      %v1578 = vpop.f32.mrb[0].mxu0
      %1579 = vmatprep.mubr.bf16.mxu0 0
      %1580 = vmatmul.mubr.bf16.gmra.mrb[0].mxu0 %v1475
      %v1581 = vpop.f32.mrb[0].mxu0
      %v1582 = vadd.f32 %v467, %v1581
      %v1583 = vpop.f32.mrb[0].mxu0
      %v1584 = vpop.f32.mrb[0].mxu0
      %v1585 = vadd.f32 %v467, %v1584
      %v1586 = vpop.f32.mrb[0].mxu0
      %1587 = vmatprep.mubr.bf16.mxu0 0
      %1588 = vmatmul.mubr.bf16.gmra.mrb[0].mxu0 %v1478
      %v1589 = vpop.f32.mrb[0].mxu0
      %v1590 = vadd.f32 %v467, %v1589
      %v1591 = vpop.f32.mrb[0].mxu0
      %v1592 = vpop.f32.mrb[0].mxu0
      %v1593 = vadd.f32 %v467, %v1592
      %v1594 = vpop.f32.mrb[0].mxu0
      %1595 = vmatprep.mubr.bf16.mxu0 0
      %1596 = vmatmul.mubr.bf16.gmra.mrb[0].mxu0 %v1481
      %v1597 = vpop.f32.mrb[0].mxu0
      %v1598 = vadd.f32 %v467, %v1597
      %v1599 = vpop.f32.mrb[0].mxu0
      %v1600 = vpop.f32.mrb[0].mxu0
      %v1601 = vadd.f32 %v467, %v1600
      %v1602 = vpop.f32.mrb[0].mxu0
      %1603 = vdwg.mxu0
      %1604 = vmax.xlane.f32.xlu0 %v1542
      %v1605 = vpop.xlane.xlu0 %1604
      %1606 = vmax.xlane.f32.xlu0 %v1545
      %v1607 = vpop.xlane.xlu0 %1606
      %1608 = vmax.xlane.f32.xlu0 %v1550
      %v1609 = vpop.xlane.xlu0 %1608
      %1610 = vmax.xlane.f32.xlu0 %v1553
      %v1611 = vpop.xlane.xlu0 %1610
      %1612 = vmax.xlane.f32.xlu0 %v1558
      %v1613 = vpop.xlane.xlu0 %1612
      %1614 = vmax.xlane.f32.xlu0 %v1561
      %v1615 = vpop.xlane.xlu0 %1614
      %1616 = vmax.xlane.f32.xlu0 %v1566
      %v1617 = vpop.xlane.xlu0 %1616
      %1618 = vmax.xlane.f32.xlu0 %v1569
      %v1619 = vpop.xlane.xlu0 %1618
      %1620 = vmax.xlane.f32.xlu0 %v1574
      %v1621 = vpop.xlane.xlu0 %1620
      %1622 = vmax.xlane.f32.xlu0 %v1577
      %v1623 = vpop.xlane.xlu0 %1622
      %1624 = vmax.xlane.f32.xlu0 %v1582
      %v1625 = vpop.xlane.xlu0 %1624
      %1626 = vmax.xlane.f32.xlu0 %v1585
      %v1627 = vpop.xlane.xlu0 %1626
      %1628 = vmax.xlane.f32.xlu0 %v1590
      %v1629 = vpop.xlane.xlu0 %1628
      %1630 = vmax.xlane.f32.xlu0 %v1593
      %v1631 = vpop.xlane.xlu0 %1630
      %1632 = vmax.xlane.f32.xlu0 %v1598
      %v1633 = vpop.xlane.xlu0 %1632
      %1634 = vmax.xlane.f32.xlu0 %v1601
      %v1635 = vpop.xlane.xlu0 %1634
      %v1636 = vsub.f32 %v1542, %v1605
      %v1637 = vsub.f32 %v1545, %v1607
      %v1638 = vsub.f32 %v1550, %v1609
      %v1639 = vsub.f32 %v1553, %v1611
      %v1640 = vsub.f32 %v1558, %v1613
      %v1641 = vsub.f32 %v1561, %v1615
      %v1642 = vsub.f32 %v1566, %v1617
      %v1643 = vsub.f32 %v1569, %v1619
      %v1644 = vsub.f32 %v1574, %v1621
      %v1645 = vsub.f32 %v1577, %v1623
      %v1646 = vsub.f32 %v1582, %v1625
      %v1647 = vsub.f32 %v1585, %v1627
      %v1648 = vsub.f32 %v1590, %v1629
      %v1649 = vsub.f32 %v1593, %v1631
      %v1650 = vsub.f32 %v1598, %v1633
      %v1651 = vsub.f32 %v1601, %v1635
      %v1652 = vmul.f32 %v1636, 1.442695
      %v1653 = vpow.pop %v1652
      %v1654 = vmul.f32 %v1637, 1.442695
      %v1655 = vpow.pop %v1654
      %v1656 = vmul.f32 %v1638, 1.442695
      %v1657 = vpow.pop %v1656
      %v1658 = vmul.f32 %v1639, 1.442695
      %v1659 = vpow.pop %v1658
      %v1660 = vmul.f32 %v1640, 1.442695
      %v1661 = vpow.pop %v1660
      %v1662 = vmul.f32 %v1641, 1.442695
      %v1663 = vpow.pop %v1662
      %v1664 = vmul.f32 %v1642, 1.442695
      %v1665 = vpow.pop %v1664
      %v1666 = vmul.f32 %v1643, 1.442695
      %v1667 = vpow.pop %v1666
      %v1668 = vmul.f32 %v1644, 1.442695
      %v1669 = vpow.pop %v1668
      %v1670 = vmul.f32 %v1645, 1.442695
      %v1671 = vpow.pop %v1670
      %v1672 = vmul.f32 %v1646, 1.442695
      %v1673 = vpow.pop %v1672
      %v1674 = vmul.f32 %v1647, 1.442695
      %v1675 = vpow.pop %v1674
      %v1676 = vmul.f32 %v1648, 1.442695
      %v1677 = vpow.pop %v1676
      %v1678 = vmul.f32 %v1649, 1.442695
      %v1679 = vpow.pop %v1678
      %v1680 = vmul.f32 %v1650, 1.442695
      %v1681 = vpow.pop %v1680
      %v1682 = vmul.f32 %v1651, 1.442695
      %v1683 = vpow.pop %v1682
      %1684 = vadd.xlane.f32.xlu0 %v1653
      %v1685 = vpop.xlane.xlu0 %1684
      %1686 = vadd.xlane.f32.xlu0 %v1655
      %v1687 = vpop.xlane.xlu0 %1686
      %1688 = vadd.xlane.f32.xlu0 %v1657
      %v1689 = vpop.xlane.xlu0 %1688
      %1690 = vadd.xlane.f32.xlu0 %v1659
      %v1691 = vpop.xlane.xlu0 %1690
      %1692 = vadd.xlane.f32.xlu0 %v1661
      %v1693 = vpop.xlane.xlu0 %1692
      %1694 = vadd.xlane.f32.xlu0 %v1663
      %v1695 = vpop.xlane.xlu0 %1694
      %1696 = vadd.xlane.f32.xlu0 %v1665
      %v1697 = vpop.xlane.xlu0 %1696
      %1698 = vadd.xlane.f32.xlu0 %v1667
      %v1699 = vpop.xlane.xlu0 %1698
      %1700 = vadd.xlane.f32.xlu0 %v1669
      %v1701 = vpop.xlane.xlu0 %1700
      %1702 = vadd.xlane.f32.xlu0 %v1671
      %v1703 = vpop.xlane.xlu0 %1702
      %1704 = vadd.xlane.f32.xlu0 %v1673
      %v1705 = vpop.xlane.xlu0 %1704
      %1706 = vadd.xlane.f32.xlu0 %v1675
      %v1707 = vpop.xlane.xlu0 %1706
      %1708 = vadd.xlane.f32.xlu0 %v1677
      %v1709 = vpop.xlane.xlu0 %1708
      %1710 = vadd.xlane.f32.xlu0 %v1679
      %v1711 = vpop.xlane.xlu0 %1710
      %1712 = vadd.xlane.f32.xlu0 %v1681
      %v1713 = vpop.xlane.xlu0 %1712
      %1714 = vadd.xlane.f32.xlu0 %v1683
      %v1715 = vpop.xlane.xlu0 %1714
      %v1716 = vrcp.pop %v1685
      %v1717 = vrcp.pop %v1687
      %v1718 = vrcp.pop %v1689
      %v1719 = vrcp.pop %v1691
      %v1720 = vrcp.pop %v1693
      %v1721 = vrcp.pop %v1695
      %v1722 = vrcp.pop %v1697
      %v1723 = vrcp.pop %v1699
      %v1724 = vrcp.pop %v1701
      %v1725 = vrcp.pop %v1703
      %v1726 = vrcp.pop %v1705
      %v1727 = vrcp.pop %v1707
      %v1728 = vrcp.pop %v1709
      %v1729 = vrcp.pop %v1711
      %v1730 = vrcp.pop %v1713
      %v1731 = vrcp.pop %v1715
      %v1732 = vmul.f32 %v1653, %v1716
      %v1733 = vmul.f32 %v1655, %v1717
      %v1734 = vmul.f32 %v1657, %v1718
      %v1735 = vmul.f32 %v1659, %v1719
      %v1736 = vmul.f32 %v1661, %v1720
      %v1737 = vmul.f32 %v1663, %v1721
      %v1738 = vmul.f32 %v1665, %v1722
      %v1739 = vmul.f32 %v1667, %v1723
      %v1740 = vmul.f32 %v1669, %v1724
      %v1741 = vmul.f32 %v1671, %v1725
      %v1742 = vmul.f32 %v1673, %v1726
      %v1743 = vmul.f32 %v1675, %v1727
      %v1744 = vmul.f32 %v1677, %v1728
      %v1745 = vmul.f32 %v1679, %v1729
      %v1746 = vmul.f32 %v1681, %v1730
      %v1747 = vmul.f32 %v1683, %v1731
      %v1748 = vpack.c.bf16 %v1733, %v1732
      %v1749 = vpack.c.bf16 %v1735, %v1734
      %v1750 = vpack.c.bf16 %v1737, %v1736
      %v1751 = vpack.c.bf16 %v1739, %v1738
      %v1752 = vpack.c.bf16 %v1741, %v1740
      %v1753 = vpack.c.bf16 %v1743, %v1742
      %v1754 = vpack.c.bf16 %v1745, %v1744
      %v1755 = vpack.c.bf16 %v1747, %v1746
      %1756 = vrot.lane.b32.xlu0 %v454, 56
      %v1757 = vpop.permute.xlu0 %1756
      %1758 = vrot.lane.b32.xlu0 %v455, 56
      %v1759 = vpop.permute.xlu0 %1758
      %1760 = vrot.lane.b32.xlu0 %v456, 56
      %v1761 = vpop.permute.xlu0 %1760
      %1762 = vrot.lane.b32.xlu0 %v457, 56
      %v1763 = vpop.permute.xlu0 %1762
      %1764 = vrot.lane.b32.xlu0 %v458, 56
      %v1765 = vpop.permute.xlu0 %1764
      %1766 = vrot.lane.b32.xlu0 %v459, 56
      %v1767 = vpop.permute.xlu0 %1766
      %1768 = vrot.lane.b32.xlu0 %v460, 56
      %v1769 = vpop.permute.xlu0 %1768
      %1770 = vrot.lane.b32.xlu0 %v461, 56
      %v1771 = vpop.permute.xlu0 %1770
      %1780 = vmatprep.subr.bf16.mxu0 0
      %1781 = vmatpush1.bf16.msra.mxu0 %v1757
      %1782 = vmatprep.subr.bf16.mxu0 0
      %1783 = vmatpush1.bf16.msra.mxu0 %v1759
      %1784 = vmatprep.subr.bf16.mxu0 0
      %1785 = vmatpush1.bf16.msra.mxu0 %v1761
      %1786 = vmatprep.subr.bf16.mxu0 0
      %1787 = vmatpush1.bf16.msra.mxu0 %v1763
      %1788 = vmatprep.subr.bf16.mxu0 0
      %1789 = vmatpush1.bf16.msra.mxu0 %v1765
      %1790 = vmatprep.subr.bf16.mxu0 0
      %1791 = vmatpush1.bf16.msra.mxu0 %v1767
      %1792 = vmatprep.subr.bf16.mxu0 0
      %1793 = vmatpush1.bf16.msra.mxu0 %v1769
      %1794 = vmatprep.subr.bf16.mxu0 0
      %1795 = vmatpush1.bf16.msra.mxu0 %v1771
      %1796 = vmatprep.subr.bf16.mxu0 0
      %1797 = vmatpush1.bf16.msra.mxu0 0
      %1798 = vmatprep.subr.bf16.mxu0 0
      %1799 = vmatpush1.bf16.msra.mxu0 0
      %1800 = vmatprep.subr.bf16.mxu0 0
      %1801 = vmatpush1.bf16.msra.mxu0 0
      %1802 = vmatprep.subr.bf16.mxu0 0
      %1803 = vmatpush1.bf16.msra.mxu0 0
      %1804 = vmatprep.subr.bf16.mxu0 0
      %1805 = vmatpush1.bf16.msra.mxu0 0
      %1806 = vmatprep.subr.bf16.mxu0 0
      %1807 = vmatpush1.bf16.msra.mxu0 0
      %1808 = vmatprep.subr.bf16.mxu0 0
      %1809 = vmatpush1.bf16.msra.mxu0 0
      %1810 = vmatprep.subr.bf16.mxu0 0
      %1811 = vmatpush1.bf16.msra.mxu0 0
      %1812 = vmatprep.mubr.bf16.mxu0 0
      %1813 = vmatmul.mubr.bf16.gmra.mrb[0].mxu0 %v1748
      %v1814 = vpop.f32.mrb[0].mxu0
      %v1815 = vadd.f32 0.0, %v1814
      %v1816 = vpop.f32.mrb[0].mxu0
      %v1817 = vpop.f32.mrb[0].mxu0
      %v1818 = vadd.f32 0.0, %v1817
      %v1819 = vpop.f32.mrb[0].mxu0
      %1820 = vmatprep.mubr.bf16.mxu0 0
      %1821 = vmatmul.mubr.bf16.gmra.mrb[0].mxu0 %v1749
      %v1822 = vpop.f32.mrb[0].mxu0
      %v1823 = vadd.f32 0.0, %v1822
      %v1824 = vpop.f32.mrb[0].mxu0
      %v1825 = vpop.f32.mrb[0].mxu0
      %v1826 = vadd.f32 0.0, %v1825
      %v1827 = vpop.f32.mrb[0].mxu0
      %1828 = vmatprep.mubr.bf16.mxu0 0
      %1829 = vmatmul.mubr.bf16.gmra.mrb[0].mxu0 %v1750
      %v1830 = vpop.f32.mrb[0].mxu0
      %v1831 = vadd.f32 0.0, %v1830
      %v1832 = vpop.f32.mrb[0].mxu0
      %v1833 = vpop.f32.mrb[0].mxu0
      %v1834 = vadd.f32 0.0, %v1833
      %v1835 = vpop.f32.mrb[0].mxu0
      %1836 = vmatprep.mubr.bf16.mxu0 0
      %1837 = vmatmul.mubr.bf16.gmra.mrb[0].mxu0 %v1751
      %v1838 = vpop.f32.mrb[0].mxu0
      %v1839 = vadd.f32 0.0, %v1838
      %v1840 = vpop.f32.mrb[0].mxu0
      %v1841 = vpop.f32.mrb[0].mxu0
      %v1842 = vadd.f32 0.0, %v1841
      %v1843 = vpop.f32.mrb[0].mxu0
      %1844 = vmatprep.mubr.bf16.mxu0 0
      %1845 = vmatmul.mubr.bf16.gmra.mrb[0].mxu0 %v1752
      %v1846 = vpop.f32.mrb[0].mxu0
      %v1847 = vadd.f32 0.0, %v1846
      %v1848 = vpop.f32.mrb[0].mxu0
      %v1849 = vpop.f32.mrb[0].mxu0
      %v1850 = vadd.f32 0.0, %v1849
      %v1851 = vpop.f32.mrb[0].mxu0
      %1852 = vmatprep.mubr.bf16.mxu0 0
      %1853 = vmatmul.mubr.bf16.gmra.mrb[0].mxu0 %v1753
      %v1854 = vpop.f32.mrb[0].mxu0
      %v1855 = vadd.f32 0.0, %v1854
      %v1856 = vpop.f32.mrb[0].mxu0
      %v1857 = vpop.f32.mrb[0].mxu0
      %v1858 = vadd.f32 0.0, %v1857
      %v1859 = vpop.f32.mrb[0].mxu0
      %1860 = vmatprep.mubr.bf16.mxu0 0
      %1861 = vmatmul.mubr.bf16.gmra.mrb[0].mxu0 %v1754
      %v1862 = vpop.f32.mrb[0].mxu0
      %v1863 = vadd.f32 0.0, %v1862
      %v1864 = vpop.f32.mrb[0].mxu0
      %v1865 = vpop.f32.mrb[0].mxu0
      %v1866 = vadd.f32 0.0, %v1865
      %v1867 = vpop.f32.mrb[0].mxu0
      %1868 = vmatprep.mubr.bf16.mxu0 0
      %1869 = vmatmul.mubr.bf16.gmra.mrb[0].mxu0 %v1755
      %v1870 = vpop.f32.mrb[0].mxu0
      %v1871 = vadd.f32 0.0, %v1870
      %v1872 = vpop.f32.mrb[0].mxu0
      %v1873 = vpop.f32.mrb[0].mxu0
      %v1874 = vadd.f32 0.0, %v1873
      %v1875 = vpop.f32.mrb[0].mxu0
      %1876 = vdwg.mxu0
      %v1877 = vpack.c.bf16 %v1818, %v1815
      %v1878 = vpack.c.bf16 %v1826, %v1823
      %v1879 = vpack.c.bf16 %v1834, %v1831
      %v1880 = vpack.c.bf16 %v1842, %v1839
      %v1881 = vpack.c.bf16 %v1850, %v1847
      %v1882 = vpack.c.bf16 %v1858, %v1855
      %v1883 = vpack.c.bf16 %v1866, %v1863
      %v1884 = vpack.c.bf16 %v1874, %v1871
      %1893 = vrot.lane.b32.xlu0 %v1877, 8
      %v1894 = vpop.permute.xlu0 %1893
      %1895 = vrot.lane.b32.xlu0 %v1878, 8
      %v1896 = vpop.permute.xlu0 %1895
      %1897 = vrot.lane.b32.xlu0 %v1879, 8
      %v1898 = vpop.permute.xlu0 %1897
      %1899 = vrot.lane.b32.xlu0 %v1880, 8
      %v1900 = vpop.permute.xlu0 %1899
      %1901 = vrot.lane.b32.xlu0 %v1881, 8
      %v1902 = vpop.permute.xlu0 %1901
      %1903 = vrot.lane.b32.xlu0 %v1882, 8
      %v1904 = vpop.permute.xlu0 %1903
      %1905 = vrot.lane.b32.xlu0 %v1883, 8
      %v1906 = vpop.permute.xlu0 %1905
      %1907 = vrot.lane.b32.xlu0 %v1884, 8
      %v1908 = vpop.permute.xlu0 %1907
      %vm1917 = vcmask 97344
      %1918 = vst.msk [vmem:[#allocation2] sm:$0xff] %vm1917, %v1894
      %1919 = vst.msk [vmem:[#allocation2 + $0x8] sm:$0xff] %vm1917, %v1896
      %1920 = vst.msk [vmem:[#allocation2 + $0x10] sm:$0xff] %vm1917, %v1898
      %1921 = vst.msk [vmem:[#allocation2 + $0x18] sm:$0xff] %vm1917, %v1900
      %1922 = vst.msk [vmem:[#allocation2 + $0x20] sm:$0xff] %vm1917, %v1902
      %1923 = vst.msk [vmem:[#allocation2 + $0x28] sm:$0xff] %vm1917, %v1904
      %1924 = vst.msk [vmem:[#allocation2 + $0x30] sm:$0xff] %vm1917, %v1906
      %1925 = vst.msk [vmem:[#allocation2 + $0x38] sm:$0xff] %vm1917, %v1908
      %1926 = vrot.lane.b32.xlu0 %v454, 116
      %v1927 = vpop.permute.xlu0 %1926
      %1928 = vrot.lane.b32.xlu0 %v455, 116
      %v1929 = vpop.permute.xlu0 %1928
      %1930 = vrot.lane.b32.xlu0 %v456, 116
      %v1931 = vpop.permute.xlu0 %1930
      %1932 = vrot.lane.b32.xlu0 %v457, 116
      %v1933 = vpop.permute.xlu0 %1932
      %1934 = vrot.lane.b32.xlu0 %v458, 116
      %v1935 = vpop.permute.xlu0 %1934
      %1936 = vrot.lane.b32.xlu0 %v459, 116
      %v1937 = vpop.permute.xlu0 %1936
      %1938 = vrot.lane.b32.xlu0 %v460, 116
      %v1939 = vpop.permute.xlu0 %1938
      %1940 = vrot.lane.b32.xlu0 %v461, 116
      %v1941 = vpop.permute.xlu0 %1940
      %1942 = vrot.lane.b32.xlu0 %v454, 84
      %v1943 = vpop.permute.xlu0 %1942
      %1944 = vrot.lane.b32.xlu0 %v455, 84
      %v1945 = vpop.permute.xlu0 %1944
      %1946 = vrot.lane.b32.xlu0 %v456, 84
      %v1947 = vpop.permute.xlu0 %1946
      %1948 = vrot.lane.b32.xlu0 %v457, 84
      %v1949 = vpop.permute.xlu0 %1948
      %1950 = vrot.lane.b32.xlu0 %v458, 84
      %v1951 = vpop.permute.xlu0 %1950
      %1952 = vrot.lane.b32.xlu0 %v459, 84
      %v1953 = vpop.permute.xlu0 %1952
      %1954 = vrot.lane.b32.xlu0 %v460, 84
      %v1955 = vpop.permute.xlu0 %1954
      %1956 = vrot.lane.b32.xlu0 %v461, 84
      %v1957 = vpop.permute.xlu0 %1956
      %v1959 = vsel %vm493, %v1927, 0
      %v1962 = vsel %vm493, %v1929, 0
      %v1965 = vsel %vm493, %v1931, 0
      %v1968 = vsel %vm493, %v1933, 0
      %v1971 = vsel %vm493, %v1935, 0
      %v1974 = vsel %vm493, %v1937, 0
      %v1977 = vsel %vm493, %v1939, 0
      %v1980 = vsel %vm493, %v1941, 0
      %v1983 = vsel %vm493, %v1943, 0
      %v1986 = vsel %vm493, %v1945, 0
      %v1989 = vsel %vm493, %v1947, 0
      %v1992 = vsel %vm493, %v1949, 0
      %v1995 = vsel %vm493, %v1951, 0
      %v1998 = vsel %vm493, %v1953, 0
      %v2001 = vsel %vm493, %v1955, 0
      %v2004 = vsel %vm493, %v1957, 0
      %2006 = vmatprep.subr.bf16.mxu0 0
      %2007 = vmatpush1.bf16.xpose.msra.mxu0 %v1983
      %2008 = vmatprep.subr.bf16.mxu0 0
      %2009 = vmatpush1.bf16.xpose.msra.mxu0 %v1986
      %2010 = vmatprep.subr.bf16.mxu0 0
      %2011 = vmatpush1.bf16.xpose.msra.mxu0 %v1989
      %2012 = vmatprep.subr.bf16.mxu0 0
      %2013 = vmatpush1.bf16.xpose.msra.mxu0 %v1992
      %2014 = vmatprep.subr.bf16.mxu0 0
      %2015 = vmatpush1.bf16.xpose.msra.mxu0 %v1995
      %2016 = vmatprep.subr.bf16.mxu0 0
      %2017 = vmatpush1.bf16.xpose.msra.mxu0 %v1998
      %2018 = vmatprep.subr.bf16.mxu0 0
      %2019 = vmatpush1.bf16.xpose.msra.mxu0 %v2001
      %2020 = vmatprep.subr.bf16.mxu0 0
      %2021 = vmatpush1.bf16.xpose.msra.mxu0 %v2004
      %2022 = vmatprep.subr.bf16.mxu0 0
      %2023 = vmatpush1.bf16.xpose.msra.mxu0 0
      %2024 = vmatprep.subr.bf16.mxu0 0
      %2025 = vmatpush1.bf16.xpose.msra.mxu0 0
      %2026 = vmatprep.subr.bf16.mxu0 0
      %2027 = vmatpush1.bf16.xpose.msra.mxu0 0
      %2028 = vmatprep.subr.bf16.mxu0 0
      %2029 = vmatpush1.bf16.xpose.msra.mxu0 0
      %2030 = vmatprep.subr.bf16.mxu0 0
      %2031 = vmatpush1.bf16.xpose.msra.mxu0 0
      %2032 = vmatprep.subr.bf16.mxu0 0
      %2033 = vmatpush1.bf16.xpose.msra.mxu0 0
      %2034 = vmatprep.subr.bf16.mxu0 0
      %2035 = vmatpush1.bf16.xpose.msra.mxu0 0
      %2036 = vmatprep.subr.bf16.mxu0 0
      %2037 = vmatpush1.bf16.xpose.msra.mxu0 0
      %2038 = vmatprep.mubr.bf16.mxu0 0
      %2039 = vmatmul.mubr.bf16.gmra.mrb[0].mxu0 %v1959
      %v2040 = vpop.f32.mrb[0].mxu0
      %v2041 = vadd.f32 %v467, %v2040
      %v2042 = vpop.f32.mrb[0].mxu0
      %v2043 = vpop.f32.mrb[0].mxu0
      %v2044 = vadd.f32 %v467, %v2043
      %v2045 = vpop.f32.mrb[0].mxu0
      %2046 = vmatprep.mubr.bf16.mxu0 0
      %2047 = vmatmul.mubr.bf16.gmra.mrb[0].mxu0 %v1962
      %v2048 = vpop.f32.mrb[0].mxu0
      %v2049 = vadd.f32 %v467, %v2048
      %v2050 = vpop.f32.mrb[0].mxu0
      %v2051 = vpop.f32.mrb[0].mxu0
      %v2052 = vadd.f32 %v467, %v2051
      %v2053 = vpop.f32.mrb[0].mxu0
      %2054 = vmatprep.mubr.bf16.mxu0 0
      %2055 = vmatmul.mubr.bf16.gmra.mrb[0].mxu0 %v1965
      %v2056 = vpop.f32.mrb[0].mxu0
      %v2057 = vadd.f32 %v467, %v2056
      %v2058 = vpop.f32.mrb[0].mxu0
      %v2059 = vpop.f32.mrb[0].mxu0
      %v2060 = vadd.f32 %v467, %v2059
      %v2061 = vpop.f32.mrb[0].mxu0
      %2062 = vmatprep.mubr.bf16.mxu0 0
      %2063 = vmatmul.mubr.bf16.gmra.mrb[0].mxu0 %v1968
      %v2064 = vpop.f32.mrb[0].mxu0
      %v2065 = vadd.f32 %v467, %v2064
      %v2066 = vpop.f32.mrb[0].mxu0
      %v2067 = vpop.f32.mrb[0].mxu0
      %v2068 = vadd.f32 %v467, %v2067
      %v2069 = vpop.f32.mrb[0].mxu0
      %2070 = vmatprep.mubr.bf16.mxu0 0
      %2071 = vmatmul.mubr.bf16.gmra.mrb[0].mxu0 %v1971
      %v2072 = vpop.f32.mrb[0].mxu0
      %v2073 = vadd.f32 %v467, %v2072
      %v2074 = vpop.f32.mrb[0].mxu0
      %v2075 = vpop.f32.mrb[0].mxu0
      %v2076 = vadd.f32 %v467, %v2075
      %v2077 = vpop.f32.mrb[0].mxu0
      %2078 = vmatprep.mubr.bf16.mxu0 0
      %2079 = vmatmul.mubr.bf16.gmra.mrb[0].mxu0 %v1974
      %v2080 = vpop.f32.mrb[0].mxu0
      %v2081 = vadd.f32 %v467, %v2080
      %v2082 = vpop.f32.mrb[0].mxu0
      %v2083 = vpop.f32.mrb[0].mxu0
      %v2084 = vadd.f32 %v467, %v2083
      %v2085 = vpop.f32.mrb[0].mxu0
      %2086 = vmatprep.mubr.bf16.mxu0 0
      %2087 = vmatmul.mubr.bf16.gmra.mrb[0].mxu0 %v1977
      %v2088 = vpop.f32.mrb[0].mxu0
      %v2089 = vadd.f32 %v467, %v2088
      %v2090 = vpop.f32.mrb[0].mxu0
      %v2091 = vpop.f32.mrb[0].mxu0
      %v2092 = vadd.f32 %v467, %v2091
      %v2093 = vpop.f32.mrb[0].mxu0
      %2094 = vmatprep.mubr.bf16.mxu0 0
      %2095 = vmatmul.mubr.bf16.gmra.mrb[0].mxu0 %v1980
      %v2096 = vpop.f32.mrb[0].mxu0
      %v2097 = vadd.f32 %v467, %v2096
      %v2098 = vpop.f32.mrb[0].mxu0
      %v2099 = vpop.f32.mrb[0].mxu0
      %v2100 = vadd.f32 %v467, %v2099
      %v2101 = vpop.f32.mrb[0].mxu0
      %2102 = vdwg.mxu0
      %2103 = vmax.xlane.f32.xlu0 %v2041
      %v2104 = vpop.xlane.xlu0 %2103
      %2105 = vmax.xlane.f32.xlu0 %v2044
      %v2106 = vpop.xlane.xlu0 %2105
      %2107 = vmax.xlane.f32.xlu0 %v2049
      %v2108 = vpop.xlane.xlu0 %2107
      %2109 = vmax.xlane.f32.xlu0 %v2052
      %v2110 = vpop.xlane.xlu0 %2109
      %2111 = vmax.xlane.f32.xlu0 %v2057
      %v2112 = vpop.xlane.xlu0 %2111
      %2113 = vmax.xlane.f32.xlu0 %v2060
      %v2114 = vpop.xlane.xlu0 %2113
      %2115 = vmax.xlane.f32.xlu0 %v2065
      %v2116 = vpop.xlane.xlu0 %2115
      %2117 = vmax.xlane.f32.xlu0 %v2068
      %v2118 = vpop.xlane.xlu0 %2117
      %2119 = vmax.xlane.f32.xlu0 %v2073
      %v2120 = vpop.xlane.xlu0 %2119
      %2121 = vmax.xlane.f32.xlu0 %v2076
      %v2122 = vpop.xlane.xlu0 %2121
      %2123 = vmax.xlane.f32.xlu0 %v2081
      %v2124 = vpop.xlane.xlu0 %2123
      %2125 = vmax.xlane.f32.xlu0 %v2084
      %v2126 = vpop.xlane.xlu0 %2125
      %2127 = vmax.xlane.f32.xlu0 %v2089
      %v2128 = vpop.xlane.xlu0 %2127
      %2129 = vmax.xlane.f32.xlu0 %v2092
      %v2130 = vpop.xlane.xlu0 %2129
      %2131 = vmax.xlane.f32.xlu0 %v2097
      %v2132 = vpop.xlane.xlu0 %2131
      %2133 = vmax.xlane.f32.xlu0 %v2100
      %v2134 = vpop.xlane.xlu0 %2133
      %v2135 = vsub.f32 %v2041, %v2104
      %v2136 = vsub.f32 %v2044, %v2106
      %v2137 = vsub.f32 %v2049, %v2108
      %v2138 = vsub.f32 %v2052, %v2110
      %v2139 = vsub.f32 %v2057, %v2112
      %v2140 = vsub.f32 %v2060, %v2114
      %v2141 = vsub.f32 %v2065, %v2116
      %v2142 = vsub.f32 %v2068, %v2118
      %v2143 = vsub.f32 %v2073, %v2120
      %v2144 = vsub.f32 %v2076, %v2122
      %v2145 = vsub.f32 %v2081, %v2124
      %v2146 = vsub.f32 %v2084, %v2126
      %v2147 = vsub.f32 %v2089, %v2128
      %v2148 = vsub.f32 %v2092, %v2130
      %v2149 = vsub.f32 %v2097, %v2132
      %v2150 = vsub.f32 %v2100, %v2134
      %v2151 = vmul.f32 %v2135, 1.442695
      %v2152 = vpow.pop %v2151
      %v2153 = vmul.f32 %v2136, 1.442695
      %v2154 = vpow.pop %v2153
      %v2155 = vmul.f32 %v2137, 1.442695
      %v2156 = vpow.pop %v2155
      %v2157 = vmul.f32 %v2138, 1.442695
      %v2158 = vpow.pop %v2157
      %v2159 = vmul.f32 %v2139, 1.442695
      %v2160 = vpow.pop %v2159
      %v2161 = vmul.f32 %v2140, 1.442695
      %v2162 = vpow.pop %v2161
      %v2163 = vmul.f32 %v2141, 1.442695
      %v2164 = vpow.pop %v2163
      %v2165 = vmul.f32 %v2142, 1.442695
      %v2166 = vpow.pop %v2165
      %v2167 = vmul.f32 %v2143, 1.442695
      %v2168 = vpow.pop %v2167
      %v2169 = vmul.f32 %v2144, 1.442695
      %v2170 = vpow.pop %v2169
      %v2171 = vmul.f32 %v2145, 1.442695
      %v2172 = vpow.pop %v2171
      %v2173 = vmul.f32 %v2146, 1.442695
      %v2174 = vpow.pop %v2173
      %v2175 = vmul.f32 %v2147, 1.442695
      %v2176 = vpow.pop %v2175
      %v2177 = vmul.f32 %v2148, 1.442695
      %v2178 = vpow.pop %v2177
      %v2179 = vmul.f32 %v2149, 1.442695
      %v2180 = vpow.pop %v2179
      %v2181 = vmul.f32 %v2150, 1.442695
      %v2182 = vpow.pop %v2181
      %2183 = vadd.xlane.f32.xlu0 %v2152
      %v2184 = vpop.xlane.xlu0 %2183
      %2185 = vadd.xlane.f32.xlu0 %v2154
      %v2186 = vpop.xlane.xlu0 %2185
      %2187 = vadd.xlane.f32.xlu0 %v2156
      %v2188 = vpop.xlane.xlu0 %2187
      %2189 = vadd.xlane.f32.xlu0 %v2158
      %v2190 = vpop.xlane.xlu0 %2189
      %2191 = vadd.xlane.f32.xlu0 %v2160
      %v2192 = vpop.xlane.xlu0 %2191
      %2193 = vadd.xlane.f32.xlu0 %v2162
      %v2194 = vpop.xlane.xlu0 %2193
      %2195 = vadd.xlane.f32.xlu0 %v2164
      %v2196 = vpop.xlane.xlu0 %2195
      %2197 = vadd.xlane.f32.xlu0 %v2166
      %v2198 = vpop.xlane.xlu0 %2197
      %2199 = vadd.xlane.f32.xlu0 %v2168
      %v2200 = vpop.xlane.xlu0 %2199
      %2201 = vadd.xlane.f32.xlu0 %v2170
      %v2202 = vpop.xlane.xlu0 %2201
      %2203 = vadd.xlane.f32.xlu0 %v2172
      %v2204 = vpop.xlane.xlu0 %2203
      %2205 = vadd.xlane.f32.xlu0 %v2174
      %v2206 = vpop.xlane.xlu0 %2205
      %2207 = vadd.xlane.f32.xlu0 %v2176
      %v2208 = vpop.xlane.xlu0 %2207
      %2209 = vadd.xlane.f32.xlu0 %v2178
      %v2210 = vpop.xlane.xlu0 %2209
      %2211 = vadd.xlane.f32.xlu0 %v2180
      %v2212 = vpop.xlane.xlu0 %2211
      %2213 = vadd.xlane.f32.xlu0 %v2182
      %v2214 = vpop.xlane.xlu0 %2213
      %v2215 = vrcp.pop %v2184
      %v2216 = vrcp.pop %v2186
      %v2217 = vrcp.pop %v2188
      %v2218 = vrcp.pop %v2190
      %v2219 = vrcp.pop %v2192
      %v2220 = vrcp.pop %v2194
      %v2221 = vrcp.pop %v2196
      %v2222 = vrcp.pop %v2198
      %v2223 = vrcp.pop %v2200
      %v2224 = vrcp.pop %v2202
      %v2225 = vrcp.pop %v2204
      %v2226 = vrcp.pop %v2206
      %v2227 = vrcp.pop %v2208
      %v2228 = vrcp.pop %v2210
      %v2229 = vrcp.pop %v2212
      %v2230 = vrcp.pop %v2214
      %v2231 = vmul.f32 %v2152, %v2215
      %v2232 = vmul.f32 %v2154, %v2216
      %v2233 = vmul.f32 %v2156, %v2217
      %v2234 = vmul.f32 %v2158, %v2218
      %v2235 = vmul.f32 %v2160, %v2219
      %v2236 = vmul.f32 %v2162, %v2220
      %v2237 = vmul.f32 %v2164, %v2221
      %v2238 = vmul.f32 %v2166, %v2222
      %v2239 = vmul.f32 %v2168, %v2223
      %v2240 = vmul.f32 %v2170, %v2224
      %v2241 = vmul.f32 %v2172, %v2225
      %v2242 = vmul.f32 %v2174, %v2226
      %v2243 = vmul.f32 %v2176, %v2227
      %v2244 = vmul.f32 %v2178, %v2228
      %v2245 = vmul.f32 %v2180, %v2229
      %v2246 = vmul.f32 %v2182, %v2230
      %v2247 = vpack.c.bf16 %v2232, %v2231
      %v2248 = vpack.c.bf16 %v2234, %v2233
      %v2249 = vpack.c.bf16 %v2236, %v2235
      %v2250 = vpack.c.bf16 %v2238, %v2237
      %v2251 = vpack.c.bf16 %v2240, %v2239
      %v2252 = vpack.c.bf16 %v2242, %v2241
      %v2253 = vpack.c.bf16 %v2244, %v2243
      %v2254 = vpack.c.bf16 %v2246, %v2245
      %2255 = vrot.lane.b32.xlu0 %v454, 52
      %v2256 = vpop.permute.xlu0 %2255
      %2257 = vrot.lane.b32.xlu0 %v455, 52
      %v2258 = vpop.permute.xlu0 %2257
      %2259 = vrot.lane.b32.xlu0 %v456, 52
      %v2260 = vpop.permute.xlu0 %2259
      %2261 = vrot.lane.b32.xlu0 %v457, 52
      %v2262 = vpop.permute.xlu0 %2261
      %2263 = vrot.lane.b32.xlu0 %v458, 52
      %v2264 = vpop.permute.xlu0 %2263
      %2265 = vrot.lane.b32.xlu0 %v459, 52
      %v2266 = vpop.permute.xlu0 %2265
      %2267 = vrot.lane.b32.xlu0 %v460, 52
      %v2268 = vpop.permute.xlu0 %2267
      %2269 = vrot.lane.b32.xlu0 %v461, 52
      %v2270 = vpop.permute.xlu0 %2269
      %2279 = vmatprep.subr.bf16.mxu0 0
      %2280 = vmatpush1.bf16.msra.mxu0 %v2256
      %2281 = vmatprep.subr.bf16.mxu0 0
      %2282 = vmatpush1.bf16.msra.mxu0 %v2258
      %2283 = vmatprep.subr.bf16.mxu0 0
      %2284 = vmatpush1.bf16.msra.mxu0 %v2260
      %2285 = vmatprep.subr.bf16.mxu0 0
      %2286 = vmatpush1.bf16.msra.mxu0 %v2262
      %2287 = vmatprep.subr.bf16.mxu0 0
      %2288 = vmatpush1.bf16.msra.mxu0 %v2264
      %2289 = vmatprep.subr.bf16.mxu0 0
      %2290 = vmatpush1.bf16.msra.mxu0 %v2266
      %2291 = vmatprep.subr.bf16.mxu0 0
      %2292 = vmatpush1.bf16.msra.mxu0 %v2268
      %2293 = vmatprep.subr.bf16.mxu0 0
      %2294 = vmatpush1.bf16.msra.mxu0 %v2270
      %2295 = vmatprep.subr.bf16.mxu0 0
      %2296 = vmatpush1.bf16.msra.mxu0 0
      %2297 = vmatprep.subr.bf16.mxu0 0
      %2298 = vmatpush1.bf16.msra.mxu0 0
      %2299 = vmatprep.subr.bf16.mxu0 0
      %2300 = vmatpush1.bf16.msra.mxu0 0
      %2301 = vmatprep.subr.bf16.mxu0 0
      %2302 = vmatpush1.bf16.msra.mxu0 0
      %2303 = vmatprep.subr.bf16.mxu0 0
      %2304 = vmatpush1.bf16.msra.mxu0 0
      %2305 = vmatprep.subr.bf16.mxu0 0
      %2306 = vmatpush1.bf16.msra.mxu0 0
      %2307 = vmatprep.subr.bf16.mxu0 0
      %2308 = vmatpush1.bf16.msra.mxu0 0
      %2309 = vmatprep.subr.bf16.mxu0 0
      %2310 = vmatpush1.bf16.msra.mxu0 0
      %2311 = vmatprep.mubr.bf16.mxu0 0
      %2312 = vmatmul.mubr.bf16.gmra.mrb[0].mxu0 %v2247
      %v2313 = vpop.f32.mrb[0].mxu0
      %v2314 = vadd.f32 0.0, %v2313
      %v2315 = vpop.f32.mrb[0].mxu0
      %v2316 = vpop.f32.mrb[0].mxu0
      %v2317 = vadd.f32 0.0, %v2316
      %v2318 = vpop.f32.mrb[0].mxu0
      %2319 = vmatprep.mubr.bf16.mxu0 0
      %2320 = vmatmul.mubr.bf16.gmra.mrb[0].mxu0 %v2248
      %v2321 = vpop.f32.mrb[0].mxu0
      %v2322 = vadd.f32 0.0, %v2321
      %v2323 = vpop.f32.mrb[0].mxu0
      %v2324 = vpop.f32.mrb[0].mxu0
      %v2325 = vadd.f32 0.0, %v2324
      %v2326 = vpop.f32.mrb[0].mxu0
      %2327 = vmatprep.mubr.bf16.mxu0 0
      %2328 = vmatmul.mubr.bf16.gmra.mrb[0].mxu0 %v2249
      %v2329 = vpop.f32.mrb[0].mxu0
      %v2330 = vadd.f32 0.0, %v2329
      %v2331 = vpop.f32.mrb[0].mxu0
      %v2332 = vpop.f32.mrb[0].mxu0
      %v2333 = vadd.f32 0.0, %v2332
      %v2334 = vpop.f32.mrb[0].mxu0
      %2335 = vmatprep.mubr.bf16.mxu0 0
      %2336 = vmatmul.mubr.bf16.gmra.mrb[0].mxu0 %v2250
      %v2337 = vpop.f32.mrb[0].mxu0
      %v2338 = vadd.f32 0.0, %v2337
      %v2339 = vpop.f32.mrb[0].mxu0
      %v2340 = vpop.f32.mrb[0].mxu0
      %v2341 = vadd.f32 0.0, %v2340
      %v2342 = vpop.f32.mrb[0].mxu0
      %2343 = vmatprep.mubr.bf16.mxu0 0
      %2344 = vmatmul.mubr.bf16.gmra.mrb[0].mxu0 %v2251
      %v2345 = vpop.f32.mrb[0].mxu0
      %v2346 = vadd.f32 0.0, %v2345
      %v2347 = vpop.f32.mrb[0].mxu0
      %v2348 = vpop.f32.mrb[0].mxu0
      %v2349 = vadd.f32 0.0, %v2348
      %v2350 = vpop.f32.mrb[0].mxu0
      %2351 = vmatprep.mubr.bf16.mxu0 0
      %2352 = vmatmul.mubr.bf16.gmra.mrb[0].mxu0 %v2252
      %v2353 = vpop.f32.mrb[0].mxu0
      %v2354 = vadd.f32 0.0, %v2353
      %v2355 = vpop.f32.mrb[0].mxu0
      %v2356 = vpop.f32.mrb[0].mxu0
      %v2357 = vadd.f32 0.0, %v2356
      %v2358 = vpop.f32.mrb[0].mxu0
      %2359 = vmatprep.mubr.bf16.mxu0 0
      %2360 = vmatmul.mubr.bf16.gmra.mrb[0].mxu0 %v2253
      %v2361 = vpop.f32.mrb[0].mxu0
      %v2362 = vadd.f32 0.0, %v2361
      %v2363 = vpop.f32.mrb[0].mxu0
      %v2364 = vpop.f32.mrb[0].mxu0
      %v2365 = vadd.f32 0.0, %v2364
      %v2366 = vpop.f32.mrb[0].mxu0
      %2367 = vmatprep.mubr.bf16.mxu0 0
      %2368 = vmatmul.mubr.bf16.gmra.mrb[0].mxu0 %v2254
      %v2369 = vpop.f32.mrb[0].mxu0
      %v2370 = vadd.f32 0.0, %v2369
      %v2371 = vpop.f32.mrb[0].mxu0
      %v2372 = vpop.f32.mrb[0].mxu0
      %v2373 = vadd.f32 0.0, %v2372
      %v2374 = vpop.f32.mrb[0].mxu0
      %2375 = vdwg.mxu0
      %v2376 = vpack.c.bf16 %v2317, %v2314
      %v2377 = vpack.c.bf16 %v2325, %v2322
      %v2378 = vpack.c.bf16 %v2333, %v2330
      %v2379 = vpack.c.bf16 %v2341, %v2338
      %v2380 = vpack.c.bf16 %v2349, %v2346
      %v2381 = vpack.c.bf16 %v2357, %v2354
      %v2382 = vpack.c.bf16 %v2365, %v2362
      %v2383 = vpack.c.bf16 %v2373, %v2370
      %2392 = vrot.lane.b32.xlu0 %v2376, 12
      %v2393 = vpop.permute.xlu0 %2392
      %2394 = vrot.lane.b32.xlu0 %v2377, 12
      %v2395 = vpop.permute.xlu0 %2394
      %2396 = vrot.lane.b32.xlu0 %v2378, 12
      %v2397 = vpop.permute.xlu0 %2396
      %2398 = vrot.lane.b32.xlu0 %v2379, 12
      %v2399 = vpop.permute.xlu0 %2398
      %2400 = vrot.lane.b32.xlu0 %v2380, 12
      %v2401 = vpop.permute.xlu0 %2400
      %2402 = vrot.lane.b32.xlu0 %v2381, 12
      %v2403 = vpop.permute.xlu0 %2402
      %2404 = vrot.lane.b32.xlu0 %v2382, 12
      %v2405 = vpop.permute.xlu0 %2404
      %2406 = vrot.lane.b32.xlu0 %v2383, 12
      %v2407 = vpop.permute.xlu0 %2406
      %vm2416 = vcmask 130144
      %2417 = vst.msk [vmem:[#allocation2] sm:$0xff] %vm2416, %v2393
      %2418 = vst.msk [vmem:[#allocation2 + $0x8] sm:$0xff] %vm2416, %v2395
      %2419 = vst.msk [vmem:[#allocation2 + $0x10] sm:$0xff] %vm2416, %v2397
      %2420 = vst.msk [vmem:[#allocation2 + $0x18] sm:$0xff] %vm2416, %v2399
      %2421 = vst.msk [vmem:[#allocation2 + $0x20] sm:$0xff] %vm2416, %v2401
      %2422 = vst.msk [vmem:[#allocation2 + $0x28] sm:$0xff] %vm2416, %v2403
      %2423 = vst.msk [vmem:[#allocation2 + $0x30] sm:$0xff] %vm2416, %v2405
      %2424 = vst.msk [vmem:[#allocation2 + $0x38] sm:$0xff] %vm2416, %v2407
      %2425 = vrot.lane.b32.xlu0 %v454, 112
      %v2426 = vpop.permute.xlu0 %2425
      %2427 = vrot.lane.b32.xlu0 %v455, 112
      %v2428 = vpop.permute.xlu0 %2427
      %2429 = vrot.lane.b32.xlu0 %v456, 112
      %v2430 = vpop.permute.xlu0 %2429
      %2431 = vrot.lane.b32.xlu0 %v457, 112
      %v2432 = vpop.permute.xlu0 %2431
      %2433 = vrot.lane.b32.xlu0 %v458, 112
      %v2434 = vpop.permute.xlu0 %2433
      %2435 = vrot.lane.b32.xlu0 %v459, 112
      %v2436 = vpop.permute.xlu0 %2435
      %2437 = vrot.lane.b32.xlu0 %v460, 112
      %v2438 = vpop.permute.xlu0 %2437
      %2439 = vrot.lane.b32.xlu0 %v461, 112
      %v2440 = vpop.permute.xlu0 %2439
      %2441 = vrot.lane.b32.xlu0 %v454, 80
      %v2442 = vpop.permute.xlu0 %2441
      %2443 = vrot.lane.b32.xlu0 %v455, 80
      %v2444 = vpop.permute.xlu0 %2443
      %2445 = vrot.lane.b32.xlu0 %v456, 80
      %v2446 = vpop.permute.xlu0 %2445
      %2447 = vrot.lane.b32.xlu0 %v457, 80
      %v2448 = vpop.permute.xlu0 %2447
      %2449 = vrot.lane.b32.xlu0 %v458, 80
      %v2450 = vpop.permute.xlu0 %2449
      %2451 = vrot.lane.b32.xlu0 %v459, 80
      %v2452 = vpop.permute.xlu0 %2451
      %2453 = vrot.lane.b32.xlu0 %v460, 80
      %v2454 = vpop.permute.xlu0 %2453
      %2455 = vrot.lane.b32.xlu0 %v461, 80
      %v2456 = vpop.permute.xlu0 %2455
      %v2458 = vsel %vm493, %v2426, 0
      %v2461 = vsel %vm493, %v2428, 0
      %v2464 = vsel %vm493, %v2430, 0
      %v2467 = vsel %vm493, %v2432, 0
      %v2470 = vsel %vm493, %v2434, 0
      %v2473 = vsel %vm493, %v2436, 0
      %v2476 = vsel %vm493, %v2438, 0
      %v2479 = vsel %vm493, %v2440, 0
      %v2482 = vsel %vm493, %v2442, 0
      %v2485 = vsel %vm493, %v2444, 0
      %v2488 = vsel %vm493, %v2446, 0
      %v2491 = vsel %vm493, %v2448, 0
      %v2494 = vsel %vm493, %v2450, 0
      %v2497 = vsel %vm493, %v2452, 0
      %v2500 = vsel %vm493, %v2454, 0
      %v2503 = vsel %vm493, %v2456, 0
      %2505 = vmatprep.subr.bf16.mxu0 0
      %2506 = vmatpush1.bf16.xpose.msra.mxu0 %v2482
      %2507 = vmatprep.subr.bf16.mxu0 0
      %2508 = vmatpush1.bf16.xpose.msra.mxu0 %v2485
      %2509 = vmatprep.subr.bf16.mxu0 0
      %2510 = vmatpush1.bf16.xpose.msra.mxu0 %v2488
      %2511 = vmatprep.subr.bf16.mxu0 0
      %2512 = vmatpush1.bf16.xpose.msra.mxu0 %v2491
      %2513 = vmatprep.subr.bf16.mxu0 0
      %2514 = vmatpush1.bf16.xpose.msra.mxu0 %v2494
      %2515 = vmatprep.subr.bf16.mxu0 0
      %2516 = vmatpush1.bf16.xpose.msra.mxu0 %v2497
      %2517 = vmatprep.subr.bf16.mxu0 0
      %2518 = vmatpush1.bf16.xpose.msra.mxu0 %v2500
      %2519 = vmatprep.subr.bf16.mxu0 0
      %2520 = vmatpush1.bf16.xpose.msra.mxu0 %v2503
      %2521 = vmatprep.subr.bf16.mxu0 0
      %2522 = vmatpush1.bf16.xpose.msra.mxu0 0
      %2523 = vmatprep.subr.bf16.mxu0 0
      %2524 = vmatpush1.bf16.xpose.msra.mxu0 0
      %2525 = vmatprep.subr.bf16.mxu0 0
      %2526 = vmatpush1.bf16.xpose.msra.mxu0 0
      %2527 = vmatprep.subr.bf16.mxu0 0
      %2528 = vmatpush1.bf16.xpose.msra.mxu0 0
      %2529 = vmatprep.subr.bf16.mxu0 0
      %2530 = vmatpush1.bf16.xpose.msra.mxu0 0
      %2531 = vmatprep.subr.bf16.mxu0 0
      %2532 = vmatpush1.bf16.xpose.msra.mxu0 0
      %2533 = vmatprep.subr.bf16.mxu0 0
      %2534 = vmatpush1.bf16.xpose.msra.mxu0 0
      %2535 = vmatprep.subr.bf16.mxu0 0
      %2536 = vmatpush1.bf16.xpose.msra.mxu0 0
      %2537 = vmatprep.mubr.bf16.mxu0 0
      %2538 = vmatmul.mubr.bf16.gmra.mrb[0].mxu0 %v2458
      %v2539 = vpop.f32.mrb[0].mxu0
      %v2540 = vadd.f32 %v467, %v2539
      %v2541 = vpop.f32.mrb[0].mxu0
      %v2542 = vpop.f32.mrb[0].mxu0
      %v2543 = vadd.f32 %v467, %v2542
      %v2544 = vpop.f32.mrb[0].mxu0
      %2545 = vmatprep.mubr.bf16.mxu0 0
      %2546 = vmatmul.mubr.bf16.gmra.mrb[0].mxu0 %v2461
      %v2547 = vpop.f32.mrb[0].mxu0
      %v2548 = vadd.f32 %v467, %v2547
      %v2549 = vpop.f32.mrb[0].mxu0
      %v2550 = vpop.f32.mrb[0].mxu0
      %v2551 = vadd.f32 %v467, %v2550
      %v2552 = vpop.f32.mrb[0].mxu0
      %2553 = vmatprep.mubr.bf16.mxu0 0
      %2554 = vmatmul.mubr.bf16.gmra.mrb[0].mxu0 %v2464
      %v2555 = vpop.f32.mrb[0].mxu0
      %v2556 = vadd.f32 %v467, %v2555
      %v2557 = vpop.f32.mrb[0].mxu0
      %v2558 = vpop.f32.mrb[0].mxu0
      %v2559 = vadd.f32 %v467, %v2558
      %v2560 = vpop.f32.mrb[0].mxu0
      %2561 = vmatprep.mubr.bf16.mxu0 0
      %2562 = vmatmul.mubr.bf16.gmra.mrb[0].mxu0 %v2467
      %v2563 = vpop.f32.mrb[0].mxu0
      %v2564 = vadd.f32 %v467, %v2563
      %v2565 = vpop.f32.mrb[0].mxu0
      %v2566 = vpop.f32.mrb[0].mxu0
      %v2567 = vadd.f32 %v467, %v2566
      %v2568 = vpop.f32.mrb[0].mxu0
      %2569 = vmatprep.mubr.bf16.mxu0 0
      %2570 = vmatmul.mubr.bf16.gmra.mrb[0].mxu0 %v2470
      %v2571 = vpop.f32.mrb[0].mxu0
      %v2572 = vadd.f32 %v467, %v2571
      %v2573 = vpop.f32.mrb[0].mxu0
      %v2574 = vpop.f32.mrb[0].mxu0
      %v2575 = vadd.f32 %v467, %v2574
      %v2576 = vpop.f32.mrb[0].mxu0
      %2577 = vmatprep.mubr.bf16.mxu0 0
      %2578 = vmatmul.mubr.bf16.gmra.mrb[0].mxu0 %v2473
      %v2579 = vpop.f32.mrb[0].mxu0
      %v2580 = vadd.f32 %v467, %v2579
      %v2581 = vpop.f32.mrb[0].mxu0
      %v2582 = vpop.f32.mrb[0].mxu0
      %v2583 = vadd.f32 %v467, %v2582
      %v2584 = vpop.f32.mrb[0].mxu0
      %2585 = vmatprep.mubr.bf16.mxu0 0
      %2586 = vmatmul.mubr.bf16.gmra.mrb[0].mxu0 %v2476
      %v2587 = vpop.f32.mrb[0].mxu0
      %v2588 = vadd.f32 %v467, %v2587
      %v2589 = vpop.f32.mrb[0].mxu0
      %v2590 = vpop.f32.mrb[0].mxu0
      %v2591 = vadd.f32 %v467, %v2590
      %v2592 = vpop.f32.mrb[0].mxu0
      %2593 = vmatprep.mubr.bf16.mxu0 0
      %2594 = vmatmul.mubr.bf16.gmra.mrb[0].mxu0 %v2479
      %v2595 = vpop.f32.mrb[0].mxu0
      %v2596 = vadd.f32 %v467, %v2595
      %v2597 = vpop.f32.mrb[0].mxu0
      %v2598 = vpop.f32.mrb[0].mxu0
      %v2599 = vadd.f32 %v467, %v2598
      %v2600 = vpop.f32.mrb[0].mxu0
      %2601 = vdwg.mxu0
      %2602 = vmax.xlane.f32.xlu0 %v2540
      %v2603 = vpop.xlane.xlu0 %2602
      %2604 = vmax.xlane.f32.xlu0 %v2543
      %v2605 = vpop.xlane.xlu0 %2604
      %2606 = vmax.xlane.f32.xlu0 %v2548
      %v2607 = vpop.xlane.xlu0 %2606
      %2608 = vmax.xlane.f32.xlu0 %v2551
      %v2609 = vpop.xlane.xlu0 %2608
      %2610 = vmax.xlane.f32.xlu0 %v2556
      %v2611 = vpop.xlane.xlu0 %2610
      %2612 = vmax.xlane.f32.xlu0 %v2559
      %v2613 = vpop.xlane.xlu0 %2612
      %2614 = vmax.xlane.f32.xlu0 %v2564
      %v2615 = vpop.xlane.xlu0 %2614
      %2616 = vmax.xlane.f32.xlu0 %v2567
      %v2617 = vpop.xlane.xlu0 %2616
      %2618 = vmax.xlane.f32.xlu0 %v2572
      %v2619 = vpop.xlane.xlu0 %2618
      %2620 = vmax.xlane.f32.xlu0 %v2575
      %v2621 = vpop.xlane.xlu0 %2620
      %2622 = vmax.xlane.f32.xlu0 %v2580
      %v2623 = vpop.xlane.xlu0 %2622
      %2624 = vmax.xlane.f32.xlu0 %v2583
      %v2625 = vpop.xlane.xlu0 %2624
      %2626 = vmax.xlane.f32.xlu0 %v2588
      %v2627 = vpop.xlane.xlu0 %2626
      %2628 = vmax.xlane.f32.xlu0 %v2591
      %v2629 = vpop.xlane.xlu0 %2628
      %2630 = vmax.xlane.f32.xlu0 %v2596
      %v2631 = vpop.xlane.xlu0 %2630
      %2632 = vmax.xlane.f32.xlu0 %v2599
      %v2633 = vpop.xlane.xlu0 %2632
      %v2634 = vsub.f32 %v2540, %v2603
      %v2635 = vsub.f32 %v2543, %v2605
      %v2636 = vsub.f32 %v2548, %v2607
      %v2637 = vsub.f32 %v2551, %v2609
      %v2638 = vsub.f32 %v2556, %v2611
      %v2639 = vsub.f32 %v2559, %v2613
      %v2640 = vsub.f32 %v2564, %v2615
      %v2641 = vsub.f32 %v2567, %v2617
      %v2642 = vsub.f32 %v2572, %v2619
      %v2643 = vsub.f32 %v2575, %v2621
      %v2644 = vsub.f32 %v2580, %v2623
      %v2645 = vsub.f32 %v2583, %v2625
      %v2646 = vsub.f32 %v2588, %v2627
      %v2647 = vsub.f32 %v2591, %v2629
      %v2648 = vsub.f32 %v2596, %v2631
      %v2649 = vsub.f32 %v2599, %v2633
      %v2650 = vmul.f32 %v2634, 1.442695
      %v2651 = vpow.pop %v2650
      %v2652 = vmul.f32 %v2635, 1.442695
      %v2653 = vpow.pop %v2652
      %v2654 = vmul.f32 %v2636, 1.442695
      %v2655 = vpow.pop %v2654
      %v2656 = vmul.f32 %v2637, 1.442695
      %v2657 = vpow.pop %v2656
      %v2658 = vmul.f32 %v2638, 1.442695
      %v2659 = vpow.pop %v2658
      %v2660 = vmul.f32 %v2639, 1.442695
      %v2661 = vpow.pop %v2660
      %v2662 = vmul.f32 %v2640, 1.442695
      %v2663 = vpow.pop %v2662
      %v2664 = vmul.f32 %v2641, 1.442695
      %v2665 = vpow.pop %v2664
      %v2666 = vmul.f32 %v2642, 1.442695
      %v2667 = vpow.pop %v2666
      %v2668 = vmul.f32 %v2643, 1.442695
      %v2669 = vpow.pop %v2668
      %v2670 = vmul.f32 %v2644, 1.442695
      %v2671 = vpow.pop %v2670
      %v2672 = vmul.f32 %v2645, 1.442695
      %v2673 = vpow.pop %v2672
      %v2674 = vmul.f32 %v2646, 1.442695
      %v2675 = vpow.pop %v2674
      %v2676 = vmul.f32 %v2647, 1.442695
      %v2677 = vpow.pop %v2676
      %v2678 = vmul.f32 %v2648, 1.442695
      %v2679 = vpow.pop %v2678
      %v2680 = vmul.f32 %v2649, 1.442695
      %v2681 = vpow.pop %v2680
      %2682 = vadd.xlane.f32.xlu0 %v2651
      %v2683 = vpop.xlane.xlu0 %2682
      %2684 = vadd.xlane.f32.xlu0 %v2653
      %v2685 = vpop.xlane.xlu0 %2684
      %2686 = vadd.xlane.f32.xlu0 %v2655
      %v2687 = vpop.xlane.xlu0 %2686
      %2688 = vadd.xlane.f32.xlu0 %v2657
      %v2689 = vpop.xlane.xlu0 %2688
      %2690 = vadd.xlane.f32.xlu0 %v2659
      %v2691 = vpop.xlane.xlu0 %2690
      %2692 = vadd.xlane.f32.xlu0 %v2661
      %v2693 = vpop.xlane.xlu0 %2692
      %2694 = vadd.xlane.f32.xlu0 %v2663
      %v2695 = vpop.xlane.xlu0 %2694
      %2696 = vadd.xlane.f32.xlu0 %v2665
      %v2697 = vpop.xlane.xlu0 %2696
      %2698 = vadd.xlane.f32.xlu0 %v2667
      %v2699 = vpop.xlane.xlu0 %2698
      %2700 = vadd.xlane.f32.xlu0 %v2669
      %v2701 = vpop.xlane.xlu0 %2700
      %2702 = vadd.xlane.f32.xlu0 %v2671
      %v2703 = vpop.xlane.xlu0 %2702
      %2704 = vadd.xlane.f32.xlu0 %v2673
      %v2705 = vpop.xlane.xlu0 %2704
      %2706 = vadd.xlane.f32.xlu0 %v2675
      %v2707 = vpop.xlane.xlu0 %2706
      %2708 = vadd.xlane.f32.xlu0 %v2677
      %v2709 = vpop.xlane.xlu0 %2708
      %2710 = vadd.xlane.f32.xlu0 %v2679
      %v2711 = vpop.xlane.xlu0 %2710
      %2712 = vadd.xlane.f32.xlu0 %v2681
      %v2713 = vpop.xlane.xlu0 %2712
      %v2714 = vrcp.pop %v2683
      %v2715 = vrcp.pop %v2685
      %v2716 = vrcp.pop %v2687
      %v2717 = vrcp.pop %v2689
      %v2718 = vrcp.pop %v2691
      %v2719 = vrcp.pop %v2693
      %v2720 = vrcp.pop %v2695
      %v2721 = vrcp.pop %v2697
      %v2722 = vrcp.pop %v2699
      %v2723 = vrcp.pop %v2701
      %v2724 = vrcp.pop %v2703
      %v2725 = vrcp.pop %v2705
      %v2726 = vrcp.pop %v2707
      %v2727 = vrcp.pop %v2709
      %v2728 = vrcp.pop %v2711
      %v2729 = vrcp.pop %v2713
      %v2730 = vmul.f32 %v2651, %v2714
      %v2731 = vmul.f32 %v2653, %v2715
      %v2732 = vmul.f32 %v2655, %v2716
      %v2733 = vmul.f32 %v2657, %v2717
      %v2734 = vmul.f32 %v2659, %v2718
      %v2735 = vmul.f32 %v2661, %v2719
      %v2736 = vmul.f32 %v2663, %v2720
      %v2737 = vmul.f32 %v2665, %v2721
      %v2738 = vmul.f32 %v2667, %v2722
      %v2739 = vmul.f32 %v2669, %v2723
      %v2740 = vmul.f32 %v2671, %v2724
      %v2741 = vmul.f32 %v2673, %v2725
      %v2742 = vmul.f32 %v2675, %v2726
      %v2743 = vmul.f32 %v2677, %v2727
      %v2744 = vmul.f32 %v2679, %v2728
      %v2745 = vmul.f32 %v2681, %v2729
      %v2746 = vpack.c.bf16 %v2731, %v2730
      %v2747 = vpack.c.bf16 %v2733, %v2732
      %v2748 = vpack.c.bf16 %v2735, %v2734
      %v2749 = vpack.c.bf16 %v2737, %v2736
      %v2750 = vpack.c.bf16 %v2739, %v2738
      %v2751 = vpack.c.bf16 %v2741, %v2740
      %v2752 = vpack.c.bf16 %v2743, %v2742
      %v2753 = vpack.c.bf16 %v2745, %v2744
      %2754 = vrot.lane.b32.xlu0 %v454, 48
      %v2755 = vpop.permute.xlu0 %2754
      %2756 = vrot.lane.b32.xlu0 %v455, 48
      %v2757 = vpop.permute.xlu0 %2756
      %2758 = vrot.lane.b32.xlu0 %v456, 48
      %v2759 = vpop.permute.xlu0 %2758
      %2760 = vrot.lane.b32.xlu0 %v457, 48
      %v2761 = vpop.permute.xlu0 %2760
      %2762 = vrot.lane.b32.xlu0 %v458, 48
      %v2763 = vpop.permute.xlu0 %2762
      %2764 = vrot.lane.b32.xlu0 %v459, 48
      %v2765 = vpop.permute.xlu0 %2764
      %2766 = vrot.lane.b32.xlu0 %v460, 48
      %v2767 = vpop.permute.xlu0 %2766
      %2768 = vrot.lane.b32.xlu0 %v461, 48
      %v2769 = vpop.permute.xlu0 %2768
      %2778 = vmatprep.subr.bf16.mxu0 0
      %2779 = vmatpush1.bf16.msra.mxu0 %v2755
      %2780 = vmatprep.subr.bf16.mxu0 0
      %2781 = vmatpush1.bf16.msra.mxu0 %v2757
      %2782 = vmatprep.subr.bf16.mxu0 0
      %2783 = vmatpush1.bf16.msra.mxu0 %v2759
      %2784 = vmatprep.subr.bf16.mxu0 0
      %2785 = vmatpush1.bf16.msra.mxu0 %v2761
      %2786 = vmatprep.subr.bf16.mxu0 0
      %2787 = vmatpush1.bf16.msra.mxu0 %v2763
      %2788 = vmatprep.subr.bf16.mxu0 0
      %2789 = vmatpush1.bf16.msra.mxu0 %v2765
      %2790 = vmatprep.subr.bf16.mxu0 0
      %2791 = vmatpush1.bf16.msra.mxu0 %v2767
      %2792 = vmatprep.subr.bf16.mxu0 0
      %2793 = vmatpush1.bf16.msra.mxu0 %v2769
      %2794 = vmatprep.subr.bf16.mxu0 0
      %2795 = vmatpush1.bf16.msra.mxu0 0
      %2796 = vmatprep.subr.bf16.mxu0 0
      %2797 = vmatpush1.bf16.msra.mxu0 0
      %2798 = vmatprep.subr.bf16.mxu0 0
      %2799 = vmatpush1.bf16.msra.mxu0 0
      %2800 = vmatprep.subr.bf16.mxu0 0
      %2801 = vmatpush1.bf16.msra.mxu0 0
      %2802 = vmatprep.subr.bf16.mxu0 0
      %2803 = vmatpush1.bf16.msra.mxu0 0
      %2804 = vmatprep.subr.bf16.mxu0 0
      %2805 = vmatpush1.bf16.msra.mxu0 0
      %2806 = vmatprep.subr.bf16.mxu0 0
      %2807 = vmatpush1.bf16.msra.mxu0 0
      %2808 = vmatprep.subr.bf16.mxu0 0
      %2809 = vmatpush1.bf16.msra.mxu0 0
      %2810 = vmatprep.mubr.bf16.mxu0 0
      %2811 = vmatmul.mubr.bf16.gmra.mrb[0].mxu0 %v2746
      %v2812 = vpop.f32.mrb[0].mxu0
      %v2813 = vadd.f32 0.0, %v2812
      %v2814 = vpop.f32.mrb[0].mxu0
      %v2815 = vpop.f32.mrb[0].mxu0
      %v2816 = vadd.f32 0.0, %v2815
      %v2817 = vpop.f32.mrb[0].mxu0
      %2818 = vmatprep.mubr.bf16.mxu0 0
      %2819 = vmatmul.mubr.bf16.gmra.mrb[0].mxu0 %v2747
      %v2820 = vpop.f32.mrb[0].mxu0
      %v2821 = vadd.f32 0.0, %v2820
      %v2822 = vpop.f32.mrb[0].mxu0
      %v2823 = vpop.f32.mrb[0].mxu0
      %v2824 = vadd.f32 0.0, %v2823
      %v2825 = vpop.f32.mrb[0].mxu0
      %2826 = vmatprep.mubr.bf16.mxu0 0
      %2827 = vmatmul.mubr.bf16.gmra.mrb[0].mxu0 %v2748
      %v2828 = vpop.f32.mrb[0].mxu0
      %v2829 = vadd.f32 0.0, %v2828
      %v2830 = vpop.f32.mrb[0].mxu0
      %v2831 = vpop.f32.mrb[0].mxu0
      %v2832 = vadd.f32 0.0, %v2831
      %v2833 = vpop.f32.mrb[0].mxu0
      %2834 = vmatprep.mubr.bf16.mxu0 0
      %2835 = vmatmul.mubr.bf16.gmra.mrb[0].mxu0 %v2749
      %v2836 = vpop.f32.mrb[0].mxu0
      %v2837 = vadd.f32 0.0, %v2836
      %v2838 = vpop.f32.mrb[0].mxu0
      %v2839 = vpop.f32.mrb[0].mxu0
      %v2840 = vadd.f32 0.0, %v2839
      %v2841 = vpop.f32.mrb[0].mxu0
      %2842 = vmatprep.mubr.bf16.mxu0 0
      %2843 = vmatmul.mubr.bf16.gmra.mrb[0].mxu0 %v2750
      %v2844 = vpop.f32.mrb[0].mxu0
      %v2845 = vadd.f32 0.0, %v2844
      %v2846 = vpop.f32.mrb[0].mxu0
      %v2847 = vpop.f32.mrb[0].mxu0
      %v2848 = vadd.f32 0.0, %v2847
      %v2849 = vpop.f32.mrb[0].mxu0
      %2850 = vmatprep.mubr.bf16.mxu0 0
      %2851 = vmatmul.mubr.bf16.gmra.mrb[0].mxu0 %v2751
      %v2852 = vpop.f32.mrb[0].mxu0
      %v2853 = vadd.f32 0.0, %v2852
      %v2854 = vpop.f32.mrb[0].mxu0
      %v2855 = vpop.f32.mrb[0].mxu0
      %v2856 = vadd.f32 0.0, %v2855
      %v2857 = vpop.f32.mrb[0].mxu0
      %2858 = vmatprep.mubr.bf16.mxu0 0
      %2859 = vmatmul.mubr.bf16.gmra.mrb[0].mxu0 %v2752
      %v2860 = vpop.f32.mrb[0].mxu0
      %v2861 = vadd.f32 0.0, %v2860
      %v2862 = vpop.f32.mrb[0].mxu0
      %v2863 = vpop.f32.mrb[0].mxu0
      %v2864 = vadd.f32 0.0, %v2863
      %v2865 = vpop.f32.mrb[0].mxu0
      %2866 = vmatprep.mubr.bf16.mxu0 0
      %2867 = vmatmul.mubr.bf16.gmra.mrb[0].mxu0 %v2753
      %v2868 = vpop.f32.mrb[0].mxu0
      %v2869 = vadd.f32 0.0, %v2868
      %v2870 = vpop.f32.mrb[0].mxu0
      %v2871 = vpop.f32.mrb[0].mxu0
      %v2872 = vadd.f32 0.0, %v2871
      %v2873 = vpop.f32.mrb[0].mxu0
      %2874 = vdwg.mxu0
      %v2875 = vpack.c.bf16 %v2816, %v2813
      %v2876 = vpack.c.bf16 %v2824, %v2821
      %v2877 = vpack.c.bf16 %v2832, %v2829
      %v2878 = vpack.c.bf16 %v2840, %v2837
      %v2879 = vpack.c.bf16 %v2848, %v2845
      %v2880 = vpack.c.bf16 %v2856, %v2853
      %v2881 = vpack.c.bf16 %v2864, %v2861
      %v2882 = vpack.c.bf16 %v2872, %v2869
      %2891 = vrot.lane.b32.xlu0 %v2875, 16
      %v2892 = vpop.permute.xlu0 %2891
      %2893 = vrot.lane.b32.xlu0 %v2876, 16
      %v2894 = vpop.permute.xlu0 %2893
      %2895 = vrot.lane.b32.xlu0 %v2877, 16
      %v2896 = vpop.permute.xlu0 %2895
      %2897 = vrot.lane.b32.xlu0 %v2878, 16
      %v2898 = vpop.permute.xlu0 %2897
      %2899 = vrot.lane.b32.xlu0 %v2879, 16
      %v2900 = vpop.permute.xlu0 %2899
      %2901 = vrot.lane.b32.xlu0 %v2880, 16
      %v2902 = vpop.permute.xlu0 %2901
      %2903 = vrot.lane.b32.xlu0 %v2881, 16
      %v2904 = vpop.permute.xlu0 %2903
      %2905 = vrot.lane.b32.xlu0 %v2882, 16
      %v2906 = vpop.permute.xlu0 %2905
      %vm2915 = vcmask 162944
      %2916 = vst.msk [vmem:[#allocation2] sm:$0xff] %vm2915, %v2892
      %2917 = vst.msk [vmem:[#allocation2 + $0x8] sm:$0xff] %vm2915, %v2894
      %2918 = vst.msk [vmem:[#allocation2 + $0x10] sm:$0xff] %vm2915, %v2896
      %2919 = vst.msk [vmem:[#allocation2 + $0x18] sm:$0xff] %vm2915, %v2898
      %2920 = vst.msk [vmem:[#allocation2 + $0x20] sm:$0xff] %vm2915, %v2900
      %2921 = vst.msk [vmem:[#allocation2 + $0x28] sm:$0xff] %vm2915, %v2902
      %2922 = vst.msk [vmem:[#allocation2 + $0x30] sm:$0xff] %vm2915, %v2904
      %2923 = vst.msk [vmem:[#allocation2 + $0x38] sm:$0xff] %vm2915, %v2906
      %2924 = vrot.lane.b32.xlu0 %v454, 108
      %v2925 = vpop.permute.xlu0 %2924
      %2926 = vrot.lane.b32.xlu0 %v455, 108
      %v2927 = vpop.permute.xlu0 %2926
      %2928 = vrot.lane.b32.xlu0 %v456, 108
      %v2929 = vpop.permute.xlu0 %2928
      %2930 = vrot.lane.b32.xlu0 %v457, 108
      %v2931 = vpop.permute.xlu0 %2930
      %2932 = vrot.lane.b32.xlu0 %v458, 108
      %v2933 = vpop.permute.xlu0 %2932
      %2934 = vrot.lane.b32.xlu0 %v459, 108
      %v2935 = vpop.permute.xlu0 %2934
      %2936 = vrot.lane.b32.xlu0 %v460, 108
      %v2937 = vpop.permute.xlu0 %2936
      %2938 = vrot.lane.b32.xlu0 %v461, 108
      %v2939 = vpop.permute.xlu0 %2938
      %2940 = vrot.lane.b32.xlu0 %v454, 76
      %v2941 = vpop.permute.xlu0 %2940
      %2942 = vrot.lane.b32.xlu0 %v455, 76
      %v2943 = vpop.permute.xlu0 %2942
      %2944 = vrot.lane.b32.xlu0 %v456, 76
      %v2945 = vpop.permute.xlu0 %2944
      %2946 = vrot.lane.b32.xlu0 %v457, 76
      %v2947 = vpop.permute.xlu0 %2946
      %2948 = vrot.lane.b32.xlu0 %v458, 76
      %v2949 = vpop.permute.xlu0 %2948
      %2950 = vrot.lane.b32.xlu0 %v459, 76
      %v2951 = vpop.permute.xlu0 %2950
      %2952 = vrot.lane.b32.xlu0 %v460, 76
      %v2953 = vpop.permute.xlu0 %2952
      %2954 = vrot.lane.b32.xlu0 %v461, 76
      %v2955 = vpop.permute.xlu0 %2954
      %v2957 = vsel %vm493, %v2925, 0
      %v2960 = vsel %vm493, %v2927, 0
      %v2963 = vsel %vm493, %v2929, 0
      %v2966 = vsel %vm493, %v2931, 0
      %v2969 = vsel %vm493, %v2933, 0
      %v2972 = vsel %vm493, %v2935, 0
      %v2975 = vsel %vm493, %v2937, 0
      %v2978 = vsel %vm493, %v2939, 0
      %v2981 = vsel %vm493, %v2941, 0
      %v2984 = vsel %vm493, %v2943, 0
      %v2987 = vsel %vm493, %v2945, 0
      %v2990 = vsel %vm493, %v2947, 0
      %v2993 = vsel %vm493, %v2949, 0
      %v2996 = vsel %vm493, %v2951, 0
      %v2999 = vsel %vm493, %v2953, 0
      %v3002 = vsel %vm493, %v2955, 0
      %3004 = vmatprep.subr.bf16.mxu0 0
      %3005 = vmatpush1.bf16.xpose.msra.mxu0 %v2981
      %3006 = vmatprep.subr.bf16.mxu0 0
      %3007 = vmatpush1.bf16.xpose.msra.mxu0 %v2984
      %3008 = vmatprep.subr.bf16.mxu0 0
      %3009 = vmatpush1.bf16.xpose.msra.mxu0 %v2987
      %3010 = vmatprep.subr.bf16.mxu0 0
      %3011 = vmatpush1.bf16.xpose.msra.mxu0 %v2990
      %3012 = vmatprep.subr.bf16.mxu0 0
      %3013 = vmatpush1.bf16.xpose.msra.mxu0 %v2993
      %3014 = vmatprep.subr.bf16.mxu0 0
      %3015 = vmatpush1.bf16.xpose.msra.mxu0 %v2996
      %3016 = vmatprep.subr.bf16.mxu0 0
      %3017 = vmatpush1.bf16.xpose.msra.mxu0 %v2999
      %3018 = vmatprep.subr.bf16.mxu0 0
      %3019 = vmatpush1.bf16.xpose.msra.mxu0 %v3002
      %3020 = vmatprep.subr.bf16.mxu0 0
      %3021 = vmatpush1.bf16.xpose.msra.mxu0 0
      %3022 = vmatprep.subr.bf16.mxu0 0
      %3023 = vmatpush1.bf16.xpose.msra.mxu0 0
      %3024 = vmatprep.subr.bf16.mxu0 0
      %3025 = vmatpush1.bf16.xpose.msra.mxu0 0
      %3026 = vmatprep.subr.bf16.mxu0 0
      %3027 = vmatpush1.bf16.xpose.msra.mxu0 0
      %3028 = vmatprep.subr.bf16.mxu0 0
      %3029 = vmatpush1.bf16.xpose.msra.mxu0 0
      %3030 = vmatprep.subr.bf16.mxu0 0
      %3031 = vmatpush1.bf16.xpose.msra.mxu0 0
      %3032 = vmatprep.subr.bf16.mxu0 0
      %3033 = vmatpush1.bf16.xpose.msra.mxu0 0
      %3034 = vmatprep.subr.bf16.mxu0 0
      %3035 = vmatpush1.bf16.xpose.msra.mxu0 0
      %3036 = vmatprep.mubr.bf16.mxu0 0
      %3037 = vmatmul.mubr.bf16.gmra.mrb[0].mxu0 %v2957
      %v3038 = vpop.f32.mrb[0].mxu0
      %v3039 = vadd.f32 %v467, %v3038
      %v3040 = vpop.f32.mrb[0].mxu0
      %v3041 = vpop.f32.mrb[0].mxu0
      %v3042 = vadd.f32 %v467, %v3041
      %v3043 = vpop.f32.mrb[0].mxu0
      %3044 = vmatprep.mubr.bf16.mxu0 0
      %3045 = vmatmul.mubr.bf16.gmra.mrb[0].mxu0 %v2960
      %v3046 = vpop.f32.mrb[0].mxu0
      %v3047 = vadd.f32 %v467, %v3046
      %v3048 = vpop.f32.mrb[0].mxu0
      %v3049 = vpop.f32.mrb[0].mxu0
      %v3050 = vadd.f32 %v467, %v3049
      %v3051 = vpop.f32.mrb[0].mxu0
      %3052 = vmatprep.mubr.bf16.mxu0 0
      %3053 = vmatmul.mubr.bf16.gmra.mrb[0].mxu0 %v2963
      %v3054 = vpop.f32.mrb[0].mxu0
      %v3055 = vadd.f32 %v467, %v3054
      %v3056 = vpop.f32.mrb[0].mxu0
      %v3057 = vpop.f32.mrb[0].mxu0
      %v3058 = vadd.f32 %v467, %v3057
      %v3059 = vpop.f32.mrb[0].mxu0
      %3060 = vmatprep.mubr.bf16.mxu0 0
      %3061 = vmatmul.mubr.bf16.gmra.mrb[0].mxu0 %v2966
      %v3062 = vpop.f32.mrb[0].mxu0
      %v3063 = vadd.f32 %v467, %v3062
      %v3064 = vpop.f32.mrb[0].mxu0
      %v3065 = vpop.f32.mrb[0].mxu0
      %v3066 = vadd.f32 %v467, %v3065
      %v3067 = vpop.f32.mrb[0].mxu0
      %3068 = vmatprep.mubr.bf16.mxu0 0
      %3069 = vmatmul.mubr.bf16.gmra.mrb[0].mxu0 %v2969
      %v3070 = vpop.f32.mrb[0].mxu0
      %v3071 = vadd.f32 %v467, %v3070
      %v3072 = vpop.f32.mrb[0].mxu0
      %v3073 = vpop.f32.mrb[0].mxu0
      %v3074 = vadd.f32 %v467, %v3073
      %v3075 = vpop.f32.mrb[0].mxu0
      %3076 = vmatprep.mubr.bf16.mxu0 0
      %3077 = vmatmul.mubr.bf16.gmra.mrb[0].mxu0 %v2972
      %v3078 = vpop.f32.mrb[0].mxu0
      %v3079 = vadd.f32 %v467, %v3078
      %v3080 = vpop.f32.mrb[0].mxu0
      %v3081 = vpop.f32.mrb[0].mxu0
      %v3082 = vadd.f32 %v467, %v3081
      %v3083 = vpop.f32.mrb[0].mxu0
      %3084 = vmatprep.mubr.bf16.mxu0 0
      %3085 = vmatmul.mubr.bf16.gmra.mrb[0].mxu0 %v2975
      %v3086 = vpop.f32.mrb[0].mxu0
      %v3087 = vadd.f32 %v467, %v3086
      %v3088 = vpop.f32.mrb[0].mxu0
      %v3089 = vpop.f32.mrb[0].mxu0
      %v3090 = vadd.f32 %v467, %v3089
      %v3091 = vpop.f32.mrb[0].mxu0
      %3092 = vmatprep.mubr.bf16.mxu0 0
      %3093 = vmatmul.mubr.bf16.gmra.mrb[0].mxu0 %v2978
      %v3094 = vpop.f32.mrb[0].mxu0
      %v3095 = vadd.f32 %v467, %v3094
      %v3096 = vpop.f32.mrb[0].mxu0
      %v3097 = vpop.f32.mrb[0].mxu0
      %v3098 = vadd.f32 %v467, %v3097
      %v3099 = vpop.f32.mrb[0].mxu0
      %3100 = vdwg.mxu0
      %3101 = vmax.xlane.f32.xlu0 %v3039
      %v3102 = vpop.xlane.xlu0 %3101
      %3103 = vmax.xlane.f32.xlu0 %v3042
      %v3104 = vpop.xlane.xlu0 %3103
      %3105 = vmax.xlane.f32.xlu0 %v3047
      %v3106 = vpop.xlane.xlu0 %3105
      %3107 = vmax.xlane.f32.xlu0 %v3050
      %v3108 = vpop.xlane.xlu0 %3107
      %3109 = vmax.xlane.f32.xlu0 %v3055
      %v3110 = vpop.xlane.xlu0 %3109
      %3111 = vmax.xlane.f32.xlu0 %v3058
      %v3112 = vpop.xlane.xlu0 %3111
      %3113 = vmax.xlane.f32.xlu0 %v3063
      %v3114 = vpop.xlane.xlu0 %3113
      %3115 = vmax.xlane.f32.xlu0 %v3066
      %v3116 = vpop.xlane.xlu0 %3115
      %3117 = vmax.xlane.f32.xlu0 %v3071
      %v3118 = vpop.xlane.xlu0 %3117
      %3119 = vmax.xlane.f32.xlu0 %v3074
      %v3120 = vpop.xlane.xlu0 %3119
      %3121 = vmax.xlane.f32.xlu0 %v3079
      %v3122 = vpop.xlane.xlu0 %3121
      %3123 = vmax.xlane.f32.xlu0 %v3082
      %v3124 = vpop.xlane.xlu0 %3123
      %3125 = vmax.xlane.f32.xlu0 %v3087
      %v3126 = vpop.xlane.xlu0 %3125
      %3127 = vmax.xlane.f32.xlu0 %v3090
      %v3128 = vpop.xlane.xlu0 %3127
      %3129 = vmax.xlane.f32.xlu0 %v3095
      %v3130 = vpop.xlane.xlu0 %3129
      %3131 = vmax.xlane.f32.xlu0 %v3098
      %v3132 = vpop.xlane.xlu0 %3131
      %v3133 = vsub.f32 %v3039, %v3102
      %v3134 = vsub.f32 %v3042, %v3104
      %v3135 = vsub.f32 %v3047, %v3106
      %v3136 = vsub.f32 %v3050, %v3108
      %v3137 = vsub.f32 %v3055, %v3110
      %v3138 = vsub.f32 %v3058, %v3112
      %v3139 = vsub.f32 %v3063, %v3114
      %v3140 = vsub.f32 %v3066, %v3116
      %v3141 = vsub.f32 %v3071, %v3118
      %v3142 = vsub.f32 %v3074, %v3120
      %v3143 = vsub.f32 %v3079, %v3122
      %v3144 = vsub.f32 %v3082, %v3124
      %v3145 = vsub.f32 %v3087, %v3126
      %v3146 = vsub.f32 %v3090, %v3128
      %v3147 = vsub.f32 %v3095, %v3130
      %v3148 = vsub.f32 %v3098, %v3132
      %v3149 = vmul.f32 %v3133, 1.442695
      %v3150 = vpow.pop %v3149
      %v3151 = vmul.f32 %v3134, 1.442695
      %v3152 = vpow.pop %v3151
      %v3153 = vmul.f32 %v3135, 1.442695
      %v3154 = vpow.pop %v3153
      %v3155 = vmul.f32 %v3136, 1.442695
      %v3156 = vpow.pop %v3155
      %v3157 = vmul.f32 %v3137, 1.442695
      %v3158 = vpow.pop %v3157
      %v3159 = vmul.f32 %v3138, 1.442695
      %v3160 = vpow.pop %v3159
      %v3161 = vmul.f32 %v3139, 1.442695
      %v3162 = vpow.pop %v3161
      %v3163 = vmul.f32 %v3140, 1.442695
      %v3164 = vpow.pop %v3163
      %v3165 = vmul.f32 %v3141, 1.442695
      %v3166 = vpow.pop %v3165
      %v3167 = vmul.f32 %v3142, 1.442695
      %v3168 = vpow.pop %v3167
      %v3169 = vmul.f32 %v3143, 1.442695
      %v3170 = vpow.pop %v3169
      %v3171 = vmul.f32 %v3144, 1.442695
      %v3172 = vpow.pop %v3171
      %v3173 = vmul.f32 %v3145, 1.442695
      %v3174 = vpow.pop %v3173
      %v3175 = vmul.f32 %v3146, 1.442695
      %v3176 = vpow.pop %v3175
      %v3177 = vmul.f32 %v3147, 1.442695
      %v3178 = vpow.pop %v3177
      %v3179 = vmul.f32 %v3148, 1.442695
      %v3180 = vpow.pop %v3179
      %3181 = vadd.xlane.f32.xlu0 %v3150
      %v3182 = vpop.xlane.xlu0 %3181
      %3183 = vadd.xlane.f32.xlu0 %v3152
      %v3184 = vpop.xlane.xlu0 %3183
      %3185 = vadd.xlane.f32.xlu0 %v3154
      %v3186 = vpop.xlane.xlu0 %3185
      %3187 = vadd.xlane.f32.xlu0 %v3156
      %v3188 = vpop.xlane.xlu0 %3187
      %3189 = vadd.xlane.f32.xlu0 %v3158
      %v3190 = vpop.xlane.xlu0 %3189
      %3191 = vadd.xlane.f32.xlu0 %v3160
      %v3192 = vpop.xlane.xlu0 %3191
      %3193 = vadd.xlane.f32.xlu0 %v3162
      %v3194 = vpop.xlane.xlu0 %3193
      %3195 = vadd.xlane.f32.xlu0 %v3164
      %v3196 = vpop.xlane.xlu0 %3195
      %3197 = vadd.xlane.f32.xlu0 %v3166
      %v3198 = vpop.xlane.xlu0 %3197
      %3199 = vadd.xlane.f32.xlu0 %v3168
      %v3200 = vpop.xlane.xlu0 %3199
      %3201 = vadd.xlane.f32.xlu0 %v3170
      %v3202 = vpop.xlane.xlu0 %3201
      %3203 = vadd.xlane.f32.xlu0 %v3172
      %v3204 = vpop.xlane.xlu0 %3203
      %3205 = vadd.xlane.f32.xlu0 %v3174
      %v3206 = vpop.xlane.xlu0 %3205
      %3207 = vadd.xlane.f32.xlu0 %v3176
      %v3208 = vpop.xlane.xlu0 %3207
      %3209 = vadd.xlane.f32.xlu0 %v3178
      %v3210 = vpop.xlane.xlu0 %3209
      %3211 = vadd.xlane.f32.xlu0 %v3180
      %v3212 = vpop.xlane.xlu0 %3211
      %v3213 = vrcp.pop %v3182
      %v3214 = vrcp.pop %v3184
      %v3215 = vrcp.pop %v3186
      %v3216 = vrcp.pop %v3188
      %v3217 = vrcp.pop %v3190
      %v3218 = vrcp.pop %v3192
      %v3219 = vrcp.pop %v3194
      %v3220 = vrcp.pop %v3196
      %v3221 = vrcp.pop %v3198
      %v3222 = vrcp.pop %v3200
      %v3223 = vrcp.pop %v3202
      %v3224 = vrcp.pop %v3204
      %v3225 = vrcp.pop %v3206
      %v3226 = vrcp.pop %v3208
      %v3227 = vrcp.pop %v3210
      %v3228 = vrcp.pop %v3212
      %v3229 = vmul.f32 %v3150, %v3213
      %v3230 = vmul.f32 %v3152, %v3214
      %v3231 = vmul.f32 %v3154, %v3215
      %v3232 = vmul.f32 %v3156, %v3216
      %v3233 = vmul.f32 %v3158, %v3217
      %v3234 = vmul.f32 %v3160, %v3218
      %v3235 = vmul.f32 %v3162, %v3219
      %v3236 = vmul.f32 %v3164, %v3220
      %v3237 = vmul.f32 %v3166, %v3221
      %v3238 = vmul.f32 %v3168, %v3222
      %v3239 = vmul.f32 %v3170, %v3223
      %v3240 = vmul.f32 %v3172, %v3224
      %v3241 = vmul.f32 %v3174, %v3225
      %v3242 = vmul.f32 %v3176, %v3226
      %v3243 = vmul.f32 %v3178, %v3227
      %v3244 = vmul.f32 %v3180, %v3228
      %v3245 = vpack.c.bf16 %v3230, %v3229
      %v3246 = vpack.c.bf16 %v3232, %v3231
      %v3247 = vpack.c.bf16 %v3234, %v3233
      %v3248 = vpack.c.bf16 %v3236, %v3235
      %v3249 = vpack.c.bf16 %v3238, %v3237
      %v3250 = vpack.c.bf16 %v3240, %v3239
      %v3251 = vpack.c.bf16 %v3242, %v3241
      %v3252 = vpack.c.bf16 %v3244, %v3243
      %3253 = vrot.lane.b32.xlu0 %v454, 44
      %v3254 = vpop.permute.xlu0 %3253
      %3255 = vrot.lane.b32.xlu0 %v455, 44
      %v3256 = vpop.permute.xlu0 %3255
      %3257 = vrot.lane.b32.xlu0 %v456, 44
      %v3258 = vpop.permute.xlu0 %3257
      %3259 = vrot.lane.b32.xlu0 %v457, 44
      %v3260 = vpop.permute.xlu0 %3259
      %3261 = vrot.lane.b32.xlu0 %v458, 44
      %v3262 = vpop.permute.xlu0 %3261
      %3263 = vrot.lane.b32.xlu0 %v459, 44
      %v3264 = vpop.permute.xlu0 %3263
      %3265 = vrot.lane.b32.xlu0 %v460, 44
      %v3266 = vpop.permute.xlu0 %3265
      %3267 = vrot.lane.b32.xlu0 %v461, 44
      %v3268 = vpop.permute.xlu0 %3267
      %3277 = vmatprep.subr.bf16.mxu0 0
      %3278 = vmatpush1.bf16.msra.mxu0 %v3254
      %3279 = vmatprep.subr.bf16.mxu0 0
      %3280 = vmatpush1.bf16.msra.mxu0 %v3256
      %3281 = vmatprep.subr.bf16.mxu0 0
      %3282 = vmatpush1.bf16.msra.mxu0 %v3258
      %3283 = vmatprep.subr.bf16.mxu0 0
      %3284 = vmatpush1.bf16.msra.mxu0 %v3260
      %3285 = vmatprep.subr.bf16.mxu0 0
      %3286 = vmatpush1.bf16.msra.mxu0 %v3262
      %3287 = vmatprep.subr.bf16.mxu0 0
      %3288 = vmatpush1.bf16.msra.mxu0 %v3264
      %3289 = vmatprep.subr.bf16.mxu0 0
      %3290 = vmatpush1.bf16.msra.mxu0 %v3266
      %3291 = vmatprep.subr.bf16.mxu0 0
      %3292 = vmatpush1.bf16.msra.mxu0 %v3268
      %3293 = vmatprep.subr.bf16.mxu0 0
      %3294 = vmatpush1.bf16.msra.mxu0 0
      %3295 = vmatprep.subr.bf16.mxu0 0
      %3296 = vmatpush1.bf16.msra.mxu0 0
      %3297 = vmatprep.subr.bf16.mxu0 0
      %3298 = vmatpush1.bf16.msra.mxu0 0
      %3299 = vmatprep.subr.bf16.mxu0 0
      %3300 = vmatpush1.bf16.msra.mxu0 0
      %3301 = vmatprep.subr.bf16.mxu0 0
      %3302 = vmatpush1.bf16.msra.mxu0 0
      %3303 = vmatprep.subr.bf16.mxu0 0
      %3304 = vmatpush1.bf16.msra.mxu0 0
      %3305 = vmatprep.subr.bf16.mxu0 0
      %3306 = vmatpush1.bf16.msra.mxu0 0
      %3307 = vmatprep.subr.bf16.mxu0 0
      %3308 = vmatpush1.bf16.msra.mxu0 0
      %3309 = vmatprep.mubr.bf16.mxu0 0
      %3310 = vmatmul.mubr.bf16.gmra.mrb[0].mxu0 %v3245
      %v3311 = vpop.f32.mrb[0].mxu0
      %v3312 = vadd.f32 0.0, %v3311
      %v3313 = vpop.f32.mrb[0].mxu0
      %v3314 = vpop.f32.mrb[0].mxu0
      %v3315 = vadd.f32 0.0, %v3314
      %v3316 = vpop.f32.mrb[0].mxu0
      %3317 = vmatprep.mubr.bf16.mxu0 0
      %3318 = vmatmul.mubr.bf16.gmra.mrb[0].mxu0 %v3246
      %v3319 = vpop.f32.mrb[0].mxu0
      %v3320 = vadd.f32 0.0, %v3319
      %v3321 = vpop.f32.mrb[0].mxu0
      %v3322 = vpop.f32.mrb[0].mxu0
      %v3323 = vadd.f32 0.0, %v3322
      %v3324 = vpop.f32.mrb[0].mxu0
      %3325 = vmatprep.mubr.bf16.mxu0 0
      %3326 = vmatmul.mubr.bf16.gmra.mrb[0].mxu0 %v3247
      %v3327 = vpop.f32.mrb[0].mxu0
      %v3328 = vadd.f32 0.0, %v3327
      %v3329 = vpop.f32.mrb[0].mxu0
      %v3330 = vpop.f32.mrb[0].mxu0
      %v3331 = vadd.f32 0.0, %v3330
      %v3332 = vpop.f32.mrb[0].mxu0
      %3333 = vmatprep.mubr.bf16.mxu0 0
      %3334 = vmatmul.mubr.bf16.gmra.mrb[0].mxu0 %v3248
      %v3335 = vpop.f32.mrb[0].mxu0
      %v3336 = vadd.f32 0.0, %v3335
      %v3337 = vpop.f32.mrb[0].mxu0
      %v3338 = vpop.f32.mrb[0].mxu0
      %v3339 = vadd.f32 0.0, %v3338
      %v3340 = vpop.f32.mrb[0].mxu0
      %3341 = vmatprep.mubr.bf16.mxu0 0
      %3342 = vmatmul.mubr.bf16.gmra.mrb[0].mxu0 %v3249
      %v3343 = vpop.f32.mrb[0].mxu0
      %v3344 = vadd.f32 0.0, %v3343
      %v3345 = vpop.f32.mrb[0].mxu0
      %v3346 = vpop.f32.mrb[0].mxu0
      %v3347 = vadd.f32 0.0, %v3346
      %v3348 = vpop.f32.mrb[0].mxu0
      %3349 = vmatprep.mubr.bf16.mxu0 0
      %3350 = vmatmul.mubr.bf16.gmra.mrb[0].mxu0 %v3250
      %v3351 = vpop.f32.mrb[0].mxu0
      %v3352 = vadd.f32 0.0, %v3351
      %v3353 = vpop.f32.mrb[0].mxu0
      %v3354 = vpop.f32.mrb[0].mxu0
      %v3355 = vadd.f32 0.0, %v3354
      %v3356 = vpop.f32.mrb[0].mxu0
      %3357 = vmatprep.mubr.bf16.mxu0 0
      %3358 = vmatmul.mubr.bf16.gmra.mrb[0].mxu0 %v3251
      %v3359 = vpop.f32.mrb[0].mxu0
      %v3360 = vadd.f32 0.0, %v3359
      %v3361 = vpop.f32.mrb[0].mxu0
      %v3362 = vpop.f32.mrb[0].mxu0
      %v3363 = vadd.f32 0.0, %v3362
      %v3364 = vpop.f32.mrb[0].mxu0
      %3365 = vmatprep.mubr.bf16.mxu0 0
      %3366 = vmatmul.mubr.bf16.gmra.mrb[0].mxu0 %v3252
      %v3367 = vpop.f32.mrb[0].mxu0
      %v3368 = vadd.f32 0.0, %v3367
      %v3369 = vpop.f32.mrb[0].mxu0
      %v3370 = vpop.f32.mrb[0].mxu0
      %v3371 = vadd.f32 0.0, %v3370
      %v3372 = vpop.f32.mrb[0].mxu0
      %3373 = vdwg.mxu0
      %v3374 = vpack.c.bf16 %v3315, %v3312
      %v3375 = vpack.c.bf16 %v3323, %v3320
      %v3376 = vpack.c.bf16 %v3331, %v3328
      %v3377 = vpack.c.bf16 %v3339, %v3336
      %v3378 = vpack.c.bf16 %v3347, %v3344
      %v3379 = vpack.c.bf16 %v3355, %v3352
      %v3380 = vpack.c.bf16 %v3363, %v3360
      %v3381 = vpack.c.bf16 %v3371, %v3368
      %3390 = vrot.lane.b32.xlu0 %v3374, 20
      %v3391 = vpop.permute.xlu0 %3390
      %3392 = vrot.lane.b32.xlu0 %v3375, 20
      %v3393 = vpop.permute.xlu0 %3392
      %3394 = vrot.lane.b32.xlu0 %v3376, 20
      %v3395 = vpop.permute.xlu0 %3394
      %3396 = vrot.lane.b32.xlu0 %v3377, 20
      %v3397 = vpop.permute.xlu0 %3396
      %3398 = vrot.lane.b32.xlu0 %v3378, 20
      %v3399 = vpop.permute.xlu0 %3398
      %3400 = vrot.lane.b32.xlu0 %v3379, 20
      %v3401 = vpop.permute.xlu0 %3400
      %3402 = vrot.lane.b32.xlu0 %v3380, 20
      %v3403 = vpop.permute.xlu0 %3402
      %3404 = vrot.lane.b32.xlu0 %v3381, 20
      %v3405 = vpop.permute.xlu0 %3404
      %vm3414 = vcmask 195744
      %3415 = vst.msk [vmem:[#allocation2] sm:$0xff] %vm3414, %v3391
      %3416 = vst.msk [vmem:[#allocation2 + $0x8] sm:$0xff] %vm3414, %v3393
      %3417 = vst.msk [vmem:[#allocation2 + $0x10] sm:$0xff] %vm3414, %v3395
      %3418 = vst.msk [vmem:[#allocation2 + $0x18] sm:$0xff] %vm3414, %v3397
      %3419 = vst.msk [vmem:[#allocation2 + $0x20] sm:$0xff] %vm3414, %v3399
      %3420 = vst.msk [vmem:[#allocation2 + $0x28] sm:$0xff] %vm3414, %v3401
      %3421 = vst.msk [vmem:[#allocation2 + $0x30] sm:$0xff] %vm3414, %v3403
      %3422 = vst.msk [vmem:[#allocation2 + $0x38] sm:$0xff] %vm3414, %v3405
      %3423 = vrot.lane.b32.xlu0 %v454, 104
      %v3424 = vpop.permute.xlu0 %3423
      %3425 = vrot.lane.b32.xlu0 %v455, 104
      %v3426 = vpop.permute.xlu0 %3425
      %3427 = vrot.lane.b32.xlu0 %v456, 104
      %v3428 = vpop.permute.xlu0 %3427
      %3429 = vrot.lane.b32.xlu0 %v457, 104
      %v3430 = vpop.permute.xlu0 %3429
      %3431 = vrot.lane.b32.xlu0 %v458, 104
      %v3432 = vpop.permute.xlu0 %3431
      %3433 = vrot.lane.b32.xlu0 %v459, 104
      %v3434 = vpop.permute.xlu0 %3433
      %3435 = vrot.lane.b32.xlu0 %v460, 104
      %v3436 = vpop.permute.xlu0 %3435
      %3437 = vrot.lane.b32.xlu0 %v461, 104
      %v3438 = vpop.permute.xlu0 %3437
      %3439 = vrot.lane.b32.xlu0 %v454, 72
      %v3440 = vpop.permute.xlu0 %3439
      %3441 = vrot.lane.b32.xlu0 %v455, 72
      %v3442 = vpop.permute.xlu0 %3441
      %3443 = vrot.lane.b32.xlu0 %v456, 72
      %v3444 = vpop.permute.xlu0 %3443
      %3445 = vrot.lane.b32.xlu0 %v457, 72
      %v3446 = vpop.permute.xlu0 %3445
      %3447 = vrot.lane.b32.xlu0 %v458, 72
      %v3448 = vpop.permute.xlu0 %3447
      %3449 = vrot.lane.b32.xlu0 %v459, 72
      %v3450 = vpop.permute.xlu0 %3449
      %3451 = vrot.lane.b32.xlu0 %v460, 72
      %v3452 = vpop.permute.xlu0 %3451
      %3453 = vrot.lane.b32.xlu0 %v461, 72
      %v3454 = vpop.permute.xlu0 %3453
      %v3456 = vsel %vm493, %v3424, 0
      %v3459 = vsel %vm493, %v3426, 0
      %v3462 = vsel %vm493, %v3428, 0
      %v3465 = vsel %vm493, %v3430, 0
      %v3468 = vsel %vm493, %v3432, 0
      %v3471 = vsel %vm493, %v3434, 0
      %v3474 = vsel %vm493, %v3436, 0
      %v3477 = vsel %vm493, %v3438, 0
      %v3480 = vsel %vm493, %v3440, 0
      %v3483 = vsel %vm493, %v3442, 0
      %v3486 = vsel %vm493, %v3444, 0
      %v3489 = vsel %vm493, %v3446, 0
      %v3492 = vsel %vm493, %v3448, 0
      %v3495 = vsel %vm493, %v3450, 0
      %v3498 = vsel %vm493, %v3452, 0
      %v3501 = vsel %vm493, %v3454, 0
      %3503 = vmatprep.subr.bf16.mxu0 0
      %3504 = vmatpush1.bf16.xpose.msra.mxu0 %v3480
      %3505 = vmatprep.subr.bf16.mxu0 0
      %3506 = vmatpush1.bf16.xpose.msra.mxu0 %v3483
      %3507 = vmatprep.subr.bf16.mxu0 0
      %3508 = vmatpush1.bf16.xpose.msra.mxu0 %v3486
      %3509 = vmatprep.subr.bf16.mxu0 0
      %3510 = vmatpush1.bf16.xpose.msra.mxu0 %v3489
      %3511 = vmatprep.subr.bf16.mxu0 0
      %3512 = vmatpush1.bf16.xpose.msra.mxu0 %v3492
      %3513 = vmatprep.subr.bf16.mxu0 0
      %3514 = vmatpush1.bf16.xpose.msra.mxu0 %v3495
      %3515 = vmatprep.subr.bf16.mxu0 0
      %3516 = vmatpush1.bf16.xpose.msra.mxu0 %v3498
      %3517 = vmatprep.subr.bf16.mxu0 0
      %3518 = vmatpush1.bf16.xpose.msra.mxu0 %v3501
      %3519 = vmatprep.subr.bf16.mxu0 0
      %3520 = vmatpush1.bf16.xpose.msra.mxu0 0
      %3521 = vmatprep.subr.bf16.mxu0 0
      %3522 = vmatpush1.bf16.xpose.msra.mxu0 0
      %3523 = vmatprep.subr.bf16.mxu0 0
      %3524 = vmatpush1.bf16.xpose.msra.mxu0 0
      %3525 = vmatprep.subr.bf16.mxu0 0
      %3526 = vmatpush1.bf16.xpose.msra.mxu0 0
      %3527 = vmatprep.subr.bf16.mxu0 0
      %3528 = vmatpush1.bf16.xpose.msra.mxu0 0
      %3529 = vmatprep.subr.bf16.mxu0 0
      %3530 = vmatpush1.bf16.xpose.msra.mxu0 0
      %3531 = vmatprep.subr.bf16.mxu0 0
      %3532 = vmatpush1.bf16.xpose.msra.mxu0 0
      %3533 = vmatprep.subr.bf16.mxu0 0
      %3534 = vmatpush1.bf16.xpose.msra.mxu0 0
      %3535 = vmatprep.mubr.bf16.mxu0 0
      %3536 = vmatmul.mubr.bf16.gmra.mrb[0].mxu0 %v3456
      %v3537 = vpop.f32.mrb[0].mxu0
      %v3538 = vadd.f32 %v467, %v3537
      %v3539 = vpop.f32.mrb[0].mxu0
      %v3540 = vpop.f32.mrb[0].mxu0
      %v3541 = vadd.f32 %v467, %v3540
      %v3542 = vpop.f32.mrb[0].mxu0
      %3543 = vmatprep.mubr.bf16.mxu0 0
      %3544 = vmatmul.mubr.bf16.gmra.mrb[0].mxu0 %v3459
      %v3545 = vpop.f32.mrb[0].mxu0
      %v3546 = vadd.f32 %v467, %v3545
      %v3547 = vpop.f32.mrb[0].mxu0
      %v3548 = vpop.f32.mrb[0].mxu0
      %v3549 = vadd.f32 %v467, %v3548
      %v3550 = vpop.f32.mrb[0].mxu0
      %3551 = vmatprep.mubr.bf16.mxu0 0
      %3552 = vmatmul.mubr.bf16.gmra.mrb[0].mxu0 %v3462
      %v3553 = vpop.f32.mrb[0].mxu0
      %v3554 = vadd.f32 %v467, %v3553
      %v3555 = vpop.f32.mrb[0].mxu0
      %v3556 = vpop.f32.mrb[0].mxu0
      %v3557 = vadd.f32 %v467, %v3556
      %v3558 = vpop.f32.mrb[0].mxu0
      %3559 = vmatprep.mubr.bf16.mxu0 0
      %3560 = vmatmul.mubr.bf16.gmra.mrb[0].mxu0 %v3465
      %v3561 = vpop.f32.mrb[0].mxu0
      %v3562 = vadd.f32 %v467, %v3561
      %v3563 = vpop.f32.mrb[0].mxu0
      %v3564 = vpop.f32.mrb[0].mxu0
      %v3565 = vadd.f32 %v467, %v3564
      %v3566 = vpop.f32.mrb[0].mxu0
      %3567 = vmatprep.mubr.bf16.mxu0 0
      %3568 = vmatmul.mubr.bf16.gmra.mrb[0].mxu0 %v3468
      %v3569 = vpop.f32.mrb[0].mxu0
      %v3570 = vadd.f32 %v467, %v3569
      %v3571 = vpop.f32.mrb[0].mxu0
      %v3572 = vpop.f32.mrb[0].mxu0
      %v3573 = vadd.f32 %v467, %v3572
      %v3574 = vpop.f32.mrb[0].mxu0
      %3575 = vmatprep.mubr.bf16.mxu0 0
      %3576 = vmatmul.mubr.bf16.gmra.mrb[0].mxu0 %v3471
      %v3577 = vpop.f32.mrb[0].mxu0
      %v3578 = vadd.f32 %v467, %v3577
      %v3579 = vpop.f32.mrb[0].mxu0
      %v3580 = vpop.f32.mrb[0].mxu0
      %v3581 = vadd.f32 %v467, %v3580
      %v3582 = vpop.f32.mrb[0].mxu0
      %3583 = vmatprep.mubr.bf16.mxu0 0
      %3584 = vmatmul.mubr.bf16.gmra.mrb[0].mxu0 %v3474
      %v3585 = vpop.f32.mrb[0].mxu0
      %v3586 = vadd.f32 %v467, %v3585
      %v3587 = vpop.f32.mrb[0].mxu0
      %v3588 = vpop.f32.mrb[0].mxu0
      %v3589 = vadd.f32 %v467, %v3588
      %v3590 = vpop.f32.mrb[0].mxu0
      %3591 = vmatprep.mubr.bf16.mxu0 0
      %3592 = vmatmul.mubr.bf16.gmra.mrb[0].mxu0 %v3477
      %v3593 = vpop.f32.mrb[0].mxu0
      %v3594 = vadd.f32 %v467, %v3593
      %v3595 = vpop.f32.mrb[0].mxu0
      %v3596 = vpop.f32.mrb[0].mxu0
      %v3597 = vadd.f32 %v467, %v3596
      %v3598 = vpop.f32.mrb[0].mxu0
      %3599 = vdwg.mxu0
      %3600 = vmax.xlane.f32.xlu0 %v3538
      %v3601 = vpop.xlane.xlu0 %3600
      %3602 = vmax.xlane.f32.xlu0 %v3541
      %v3603 = vpop.xlane.xlu0 %3602
      %3604 = vmax.xlane.f32.xlu0 %v3546
      %v3605 = vpop.xlane.xlu0 %3604
      %3606 = vmax.xlane.f32.xlu0 %v3549
      %v3607 = vpop.xlane.xlu0 %3606
      %3608 = vmax.xlane.f32.xlu0 %v3554
      %v3609 = vpop.xlane.xlu0 %3608
      %3610 = vmax.xlane.f32.xlu0 %v3557
      %v3611 = vpop.xlane.xlu0 %3610
      %3612 = vmax.xlane.f32.xlu0 %v3562
      %v3613 = vpop.xlane.xlu0 %3612
      %3614 = vmax.xlane.f32.xlu0 %v3565
      %v3615 = vpop.xlane.xlu0 %3614
      %3616 = vmax.xlane.f32.xlu0 %v3570
      %v3617 = vpop.xlane.xlu0 %3616
      %3618 = vmax.xlane.f32.xlu0 %v3573
      %v3619 = vpop.xlane.xlu0 %3618
      %3620 = vmax.xlane.f32.xlu0 %v3578
      %v3621 = vpop.xlane.xlu0 %3620
      %3622 = vmax.xlane.f32.xlu0 %v3581
      %v3623 = vpop.xlane.xlu0 %3622
      %3624 = vmax.xlane.f32.xlu0 %v3586
      %v3625 = vpop.xlane.xlu0 %3624
      %3626 = vmax.xlane.f32.xlu0 %v3589
      %v3627 = vpop.xlane.xlu0 %3626
      %3628 = vmax.xlane.f32.xlu0 %v3594
      %v3629 = vpop.xlane.xlu0 %3628
      %3630 = vmax.xlane.f32.xlu0 %v3597
      %v3631 = vpop.xlane.xlu0 %3630
      %v3632 = vsub.f32 %v3538, %v3601
      %v3633 = vsub.f32 %v3541, %v3603
      %v3634 = vsub.f32 %v3546, %v3605
      %v3635 = vsub.f32 %v3549, %v3607
      %v3636 = vsub.f32 %v3554, %v3609
      %v3637 = vsub.f32 %v3557, %v3611
      %v3638 = vsub.f32 %v3562, %v3613
      %v3639 = vsub.f32 %v3565, %v3615
      %v3640 = vsub.f32 %v3570, %v3617
      %v3641 = vsub.f32 %v3573, %v3619
      %v3642 = vsub.f32 %v3578, %v3621
      %v3643 = vsub.f32 %v3581, %v3623
      %v3644 = vsub.f32 %v3586, %v3625
      %v3645 = vsub.f32 %v3589, %v3627
      %v3646 = vsub.f32 %v3594, %v3629
      %v3647 = vsub.f32 %v3597, %v3631
      %v3648 = vmul.f32 %v3632, 1.442695
      %v3649 = vpow.pop %v3648
      %v3650 = vmul.f32 %v3633, 1.442695
      %v3651 = vpow.pop %v3650
      %v3652 = vmul.f32 %v3634, 1.442695
      %v3653 = vpow.pop %v3652
      %v3654 = vmul.f32 %v3635, 1.442695
      %v3655 = vpow.pop %v3654
      %v3656 = vmul.f32 %v3636, 1.442695
      %v3657 = vpow.pop %v3656
      %v3658 = vmul.f32 %v3637, 1.442695
      %v3659 = vpow.pop %v3658
      %v3660 = vmul.f32 %v3638, 1.442695
      %v3661 = vpow.pop %v3660
      %v3662 = vmul.f32 %v3639, 1.442695
      %v3663 = vpow.pop %v3662
      %v3664 = vmul.f32 %v3640, 1.442695
      %v3665 = vpow.pop %v3664
      %v3666 = vmul.f32 %v3641, 1.442695
      %v3667 = vpow.pop %v3666
      %v3668 = vmul.f32 %v3642, 1.442695
      %v3669 = vpow.pop %v3668
      %v3670 = vmul.f32 %v3643, 1.442695
      %v3671 = vpow.pop %v3670
      %v3672 = vmul.f32 %v3644, 1.442695
      %v3673 = vpow.pop %v3672
      %v3674 = vmul.f32 %v3645, 1.442695
      %v3675 = vpow.pop %v3674
      %v3676 = vmul.f32 %v3646, 1.442695
      %v3677 = vpow.pop %v3676
      %v3678 = vmul.f32 %v3647, 1.442695
      %v3679 = vpow.pop %v3678
      %3680 = vadd.xlane.f32.xlu0 %v3649
      %v3681 = vpop.xlane.xlu0 %3680
      %3682 = vadd.xlane.f32.xlu0 %v3651
      %v3683 = vpop.xlane.xlu0 %3682
      %3684 = vadd.xlane.f32.xlu0 %v3653
      %v3685 = vpop.xlane.xlu0 %3684
      %3686 = vadd.xlane.f32.xlu0 %v3655
      %v3687 = vpop.xlane.xlu0 %3686
      %3688 = vadd.xlane.f32.xlu0 %v3657
      %v3689 = vpop.xlane.xlu0 %3688
      %3690 = vadd.xlane.f32.xlu0 %v3659
      %v3691 = vpop.xlane.xlu0 %3690
      %3692 = vadd.xlane.f32.xlu0 %v3661
      %v3693 = vpop.xlane.xlu0 %3692
      %3694 = vadd.xlane.f32.xlu0 %v3663
      %v3695 = vpop.xlane.xlu0 %3694
      %3696 = vadd.xlane.f32.xlu0 %v3665
      %v3697 = vpop.xlane.xlu0 %3696
      %3698 = vadd.xlane.f32.xlu0 %v3667
      %v3699 = vpop.xlane.xlu0 %3698
      %3700 = vadd.xlane.f32.xlu0 %v3669
      %v3701 = vpop.xlane.xlu0 %3700
      %3702 = vadd.xlane.f32.xlu0 %v3671
      %v3703 = vpop.xlane.xlu0 %3702
      %3704 = vadd.xlane.f32.xlu0 %v3673
      %v3705 = vpop.xlane.xlu0 %3704
      %3706 = vadd.xlane.f32.xlu0 %v3675
      %v3707 = vpop.xlane.xlu0 %3706
      %3708 = vadd.xlane.f32.xlu0 %v3677
      %v3709 = vpop.xlane.xlu0 %3708
      %3710 = vadd.xlane.f32.xlu0 %v3679
      %v3711 = vpop.xlane.xlu0 %3710
      %v3712 = vrcp.pop %v3681
      %v3713 = vrcp.pop %v3683
      %v3714 = vrcp.pop %v3685
      %v3715 = vrcp.pop %v3687
      %v3716 = vrcp.pop %v3689
      %v3717 = vrcp.pop %v3691
      %v3718 = vrcp.pop %v3693
      %v3719 = vrcp.pop %v3695
      %v3720 = vrcp.pop %v3697
      %v3721 = vrcp.pop %v3699
      %v3722 = vrcp.pop %v3701
      %v3723 = vrcp.pop %v3703
      %v3724 = vrcp.pop %v3705
      %v3725 = vrcp.pop %v3707
      %v3726 = vrcp.pop %v3709
      %v3727 = vrcp.pop %v3711
      %v3728 = vmul.f32 %v3649, %v3712
      %v3729 = vmul.f32 %v3651, %v3713
      %v3730 = vmul.f32 %v3653, %v3714
      %v3731 = vmul.f32 %v3655, %v3715
      %v3732 = vmul.f32 %v3657, %v3716
      %v3733 = vmul.f32 %v3659, %v3717
      %v3734 = vmul.f32 %v3661, %v3718
      %v3735 = vmul.f32 %v3663, %v3719
      %v3736 = vmul.f32 %v3665, %v3720
      %v3737 = vmul.f32 %v3667, %v3721
      %v3738 = vmul.f32 %v3669, %v3722
      %v3739 = vmul.f32 %v3671, %v3723
      %v3740 = vmul.f32 %v3673, %v3724
      %v3741 = vmul.f32 %v3675, %v3725
      %v3742 = vmul.f32 %v3677, %v3726
      %v3743 = vmul.f32 %v3679, %v3727
      %v3744 = vpack.c.bf16 %v3729, %v3728
      %v3745 = vpack.c.bf16 %v3731, %v3730
      %v3746 = vpack.c.bf16 %v3733, %v3732
      %v3747 = vpack.c.bf16 %v3735, %v3734
      %v3748 = vpack.c.bf16 %v3737, %v3736
      %v3749 = vpack.c.bf16 %v3739, %v3738
      %v3750 = vpack.c.bf16 %v3741, %v3740
      %v3751 = vpack.c.bf16 %v3743, %v3742
      %3752 = vrot.lane.b32.xlu0 %v454, 40
      %v3753 = vpop.permute.xlu0 %3752
      %3754 = vrot.lane.b32.xlu0 %v455, 40
      %v3755 = vpop.permute.xlu0 %3754
      %3756 = vrot.lane.b32.xlu0 %v456, 40
      %v3757 = vpop.permute.xlu0 %3756
      %3758 = vrot.lane.b32.xlu0 %v457, 40
      %v3759 = vpop.permute.xlu0 %3758
      %3760 = vrot.lane.b32.xlu0 %v458, 40
      %v3761 = vpop.permute.xlu0 %3760
      %3762 = vrot.lane.b32.xlu0 %v459, 40
      %v3763 = vpop.permute.xlu0 %3762
      %3764 = vrot.lane.b32.xlu0 %v460, 40
      %v3765 = vpop.permute.xlu0 %3764
      %3766 = vrot.lane.b32.xlu0 %v461, 40
      %v3767 = vpop.permute.xlu0 %3766
      %3776 = vmatprep.subr.bf16.mxu0 0
      %3777 = vmatpush1.bf16.msra.mxu0 %v3753
      %3778 = vmatprep.subr.bf16.mxu0 0
      %3779 = vmatpush1.bf16.msra.mxu0 %v3755
      %3780 = vmatprep.subr.bf16.mxu0 0
      %3781 = vmatpush1.bf16.msra.mxu0 %v3757
      %3782 = vmatprep.subr.bf16.mxu0 0
      %3783 = vmatpush1.bf16.msra.mxu0 %v3759
      %3784 = vmatprep.subr.bf16.mxu0 0
      %3785 = vmatpush1.bf16.msra.mxu0 %v3761
      %3786 = vmatprep.subr.bf16.mxu0 0
      %3787 = vmatpush1.bf16.msra.mxu0 %v3763
      %3788 = vmatprep.subr.bf16.mxu0 0
      %3789 = vmatpush1.bf16.msra.mxu0 %v3765
      %3790 = vmatprep.subr.bf16.mxu0 0
      %3791 = vmatpush1.bf16.msra.mxu0 %v3767
      %3792 = vmatprep.subr.bf16.mxu0 0
      %3793 = vmatpush1.bf16.msra.mxu0 0
      %3794 = vmatprep.subr.bf16.mxu0 0
      %3795 = vmatpush1.bf16.msra.mxu0 0
      %3796 = vmatprep.subr.bf16.mxu0 0
      %3797 = vmatpush1.bf16.msra.mxu0 0
      %3798 = vmatprep.subr.bf16.mxu0 0
      %3799 = vmatpush1.bf16.msra.mxu0 0
      %3800 = vmatprep.subr.bf16.mxu0 0
      %3801 = vmatpush1.bf16.msra.mxu0 0
      %3802 = vmatprep.subr.bf16.mxu0 0
      %3803 = vmatpush1.bf16.msra.mxu0 0
      %3804 = vmatprep.subr.bf16.mxu0 0
      %3805 = vmatpush1.bf16.msra.mxu0 0
      %3806 = vmatprep.subr.bf16.mxu0 0
      %3807 = vmatpush1.bf16.msra.mxu0 0
      %3808 = vmatprep.mubr.bf16.mxu0 0
      %3809 = vmatmul.mubr.bf16.gmra.mrb[0].mxu0 %v3744
      %v3810 = vpop.f32.mrb[0].mxu0
      %v3811 = vadd.f32 0.0, %v3810
      %v3812 = vpop.f32.mrb[0].mxu0
      %v3813 = vpop.f32.mrb[0].mxu0
      %v3814 = vadd.f32 0.0, %v3813
      %v3815 = vpop.f32.mrb[0].mxu0
      %3816 = vmatprep.mubr.bf16.mxu0 0
      %3817 = vmatmul.mubr.bf16.gmra.mrb[0].mxu0 %v3745
      %v3818 = vpop.f32.mrb[0].mxu0
      %v3819 = vadd.f32 0.0, %v3818
      %v3820 = vpop.f32.mrb[0].mxu0
      %v3821 = vpop.f32.mrb[0].mxu0
      %v3822 = vadd.f32 0.0, %v3821
      %v3823 = vpop.f32.mrb[0].mxu0
      %3824 = vmatprep.mubr.bf16.mxu0 0
      %3825 = vmatmul.mubr.bf16.gmra.mrb[0].mxu0 %v3746
      %v3826 = vpop.f32.mrb[0].mxu0
      %v3827 = vadd.f32 0.0, %v3826
      %v3828 = vpop.f32.mrb[0].mxu0
      %v3829 = vpop.f32.mrb[0].mxu0
      %v3830 = vadd.f32 0.0, %v3829
      %v3831 = vpop.f32.mrb[0].mxu0
      %3832 = vmatprep.mubr.bf16.mxu0 0
      %3833 = vmatmul.mubr.bf16.gmra.mrb[0].mxu0 %v3747
      %v3834 = vpop.f32.mrb[0].mxu0
      %v3835 = vadd.f32 0.0, %v3834
      %v3836 = vpop.f32.mrb[0].mxu0
      %v3837 = vpop.f32.mrb[0].mxu0
      %v3838 = vadd.f32 0.0, %v3837
      %v3839 = vpop.f32.mrb[0].mxu0
      %3840 = vmatprep.mubr.bf16.mxu0 0
      %3841 = vmatmul.mubr.bf16.gmra.mrb[0].mxu0 %v3748
      %v3842 = vpop.f32.mrb[0].mxu0
      %v3843 = vadd.f32 0.0, %v3842
      %v3844 = vpop.f32.mrb[0].mxu0
      %v3845 = vpop.f32.mrb[0].mxu0
      %v3846 = vadd.f32 0.0, %v3845
      %v3847 = vpop.f32.mrb[0].mxu0
      %3848 = vmatprep.mubr.bf16.mxu0 0
      %3849 = vmatmul.mubr.bf16.gmra.mrb[0].mxu0 %v3749
      %v3850 = vpop.f32.mrb[0].mxu0
      %v3851 = vadd.f32 0.0, %v3850
      %v3852 = vpop.f32.mrb[0].mxu0
      %v3853 = vpop.f32.mrb[0].mxu0
      %v3854 = vadd.f32 0.0, %v3853
      %v3855 = vpop.f32.mrb[0].mxu0
      %3856 = vmatprep.mubr.bf16.mxu0 0
      %3857 = vmatmul.mubr.bf16.gmra.mrb[0].mxu0 %v3750
      %v3858 = vpop.f32.mrb[0].mxu0
      %v3859 = vadd.f32 0.0, %v3858
      %v3860 = vpop.f32.mrb[0].mxu0
      %v3861 = vpop.f32.mrb[0].mxu0
      %v3862 = vadd.f32 0.0, %v3861
      %v3863 = vpop.f32.mrb[0].mxu0
      %3864 = vmatprep.mubr.bf16.mxu0 0
      %3865 = vmatmul.mubr.bf16.gmra.mrb[0].mxu0 %v3751
      %v3866 = vpop.f32.mrb[0].mxu0
      %v3867 = vadd.f32 0.0, %v3866
      %v3868 = vpop.f32.mrb[0].mxu0
      %v3869 = vpop.f32.mrb[0].mxu0
      %v3870 = vadd.f32 0.0, %v3869
      %v3871 = vpop.f32.mrb[0].mxu0
      %3872 = vdwg.mxu0
      %v3873 = vpack.c.bf16 %v3814, %v3811
      %v3874 = vpack.c.bf16 %v3822, %v3819
      %v3875 = vpack.c.bf16 %v3830, %v3827
      %v3876 = vpack.c.bf16 %v3838, %v3835
      %v3877 = vpack.c.bf16 %v3846, %v3843
      %v3878 = vpack.c.bf16 %v3854, %v3851
      %v3879 = vpack.c.bf16 %v3862, %v3859
      %v3880 = vpack.c.bf16 %v3870, %v3867
      %3889 = vrot.lane.b32.xlu0 %v3873, 24
      %v3890 = vpop.permute.xlu0 %3889
      %3891 = vrot.lane.b32.xlu0 %v3874, 24
      %v3892 = vpop.permute.xlu0 %3891
      %3893 = vrot.lane.b32.xlu0 %v3875, 24
      %v3894 = vpop.permute.xlu0 %3893
      %3895 = vrot.lane.b32.xlu0 %v3876, 24
      %v3896 = vpop.permute.xlu0 %3895
      %3897 = vrot.lane.b32.xlu0 %v3877, 24
      %v3898 = vpop.permute.xlu0 %3897
      %3899 = vrot.lane.b32.xlu0 %v3878, 24
      %v3900 = vpop.permute.xlu0 %3899
      %3901 = vrot.lane.b32.xlu0 %v3879, 24
      %v3902 = vpop.permute.xlu0 %3901
      %3903 = vrot.lane.b32.xlu0 %v3880, 24
      %v3904 = vpop.permute.xlu0 %3903
      %vm3913 = vcmask 228544
      %3914 = vst.msk [vmem:[#allocation2] sm:$0xff] %vm3913, %v3890
      %3915 = vst.msk [vmem:[#allocation2 + $0x8] sm:$0xff] %vm3913, %v3892
      %3916 = vst.msk [vmem:[#allocation2 + $0x10] sm:$0xff] %vm3913, %v3894
      %3917 = vst.msk [vmem:[#allocation2 + $0x18] sm:$0xff] %vm3913, %v3896
      %3918 = vst.msk [vmem:[#allocation2 + $0x20] sm:$0xff] %vm3913, %v3898
      %3919 = vst.msk [vmem:[#allocation2 + $0x28] sm:$0xff] %vm3913, %v3900
      %3920 = vst.msk [vmem:[#allocation2 + $0x30] sm:$0xff] %vm3913, %v3902
      %3921 = vst.msk [vmem:[#allocation2 + $0x38] sm:$0xff] %vm3913, %v3904
      %3922 = vrot.lane.b32.xlu0 %v454, 100
      %v3923 = vpop.permute.xlu0 %3922
      %3924 = vrot.lane.b32.xlu0 %v455, 100
      %v3925 = vpop.permute.xlu0 %3924
      %3926 = vrot.lane.b32.xlu0 %v456, 100
      %v3927 = vpop.permute.xlu0 %3926
      %3928 = vrot.lane.b32.xlu0 %v457, 100
      %v3929 = vpop.permute.xlu0 %3928
      %3930 = vrot.lane.b32.xlu0 %v458, 100
      %v3931 = vpop.permute.xlu0 %3930
      %3932 = vrot.lane.b32.xlu0 %v459, 100
      %v3933 = vpop.permute.xlu0 %3932
      %3934 = vrot.lane.b32.xlu0 %v460, 100
      %v3935 = vpop.permute.xlu0 %3934
      %3936 = vrot.lane.b32.xlu0 %v461, 100
      %v3937 = vpop.permute.xlu0 %3936
      %3938 = vrot.lane.b32.xlu0 %v454, 68
      %v3939 = vpop.permute.xlu0 %3938
      %3940 = vrot.lane.b32.xlu0 %v455, 68
      %v3941 = vpop.permute.xlu0 %3940
      %3942 = vrot.lane.b32.xlu0 %v456, 68
      %v3943 = vpop.permute.xlu0 %3942
      %3944 = vrot.lane.b32.xlu0 %v457, 68
      %v3945 = vpop.permute.xlu0 %3944
      %3946 = vrot.lane.b32.xlu0 %v458, 68
      %v3947 = vpop.permute.xlu0 %3946
      %3948 = vrot.lane.b32.xlu0 %v459, 68
      %v3949 = vpop.permute.xlu0 %3948
      %3950 = vrot.lane.b32.xlu0 %v460, 68
      %v3951 = vpop.permute.xlu0 %3950
      %3952 = vrot.lane.b32.xlu0 %v461, 68
      %v3953 = vpop.permute.xlu0 %3952
      %v3955 = vsel %vm493, %v3923, 0
      %v3958 = vsel %vm493, %v3925, 0
      %v3961 = vsel %vm493, %v3927, 0
      %v3964 = vsel %vm493, %v3929, 0
      %v3967 = vsel %vm493, %v3931, 0
      %v3970 = vsel %vm493, %v3933, 0
      %v3973 = vsel %vm493, %v3935, 0
      %v3976 = vsel %vm493, %v3937, 0
      %v3979 = vsel %vm493, %v3939, 0
      %v3982 = vsel %vm493, %v3941, 0
      %v3985 = vsel %vm493, %v3943, 0
      %v3988 = vsel %vm493, %v3945, 0
      %v3991 = vsel %vm493, %v3947, 0
      %v3994 = vsel %vm493, %v3949, 0
      %v3997 = vsel %vm493, %v3951, 0
      %v4000 = vsel %vm493, %v3953, 0
      %4002 = vmatprep.subr.bf16.mxu0 0
      %4003 = vmatpush1.bf16.xpose.msra.mxu0 %v3979
      %4004 = vmatprep.subr.bf16.mxu0 0
      %4005 = vmatpush1.bf16.xpose.msra.mxu0 %v3982
      %4006 = vmatprep.subr.bf16.mxu0 0
      %4007 = vmatpush1.bf16.xpose.msra.mxu0 %v3985
      %4008 = vmatprep.subr.bf16.mxu0 0
      %4009 = vmatpush1.bf16.xpose.msra.mxu0 %v3988
      %4010 = vmatprep.subr.bf16.mxu0 0
      %4011 = vmatpush1.bf16.xpose.msra.mxu0 %v3991
      %4012 = vmatprep.subr.bf16.mxu0 0
      %4013 = vmatpush1.bf16.xpose.msra.mxu0 %v3994
      %4014 = vmatprep.subr.bf16.mxu0 0
      %4015 = vmatpush1.bf16.xpose.msra.mxu0 %v3997
      %4016 = vmatprep.subr.bf16.mxu0 0
      %4017 = vmatpush1.bf16.xpose.msra.mxu0 %v4000
      %4018 = vmatprep.subr.bf16.mxu0 0
      %4019 = vmatpush1.bf16.xpose.msra.mxu0 0
      %4020 = vmatprep.subr.bf16.mxu0 0
      %4021 = vmatpush1.bf16.xpose.msra.mxu0 0
      %4022 = vmatprep.subr.bf16.mxu0 0
      %4023 = vmatpush1.bf16.xpose.msra.mxu0 0
      %4024 = vmatprep.subr.bf16.mxu0 0
      %4025 = vmatpush1.bf16.xpose.msra.mxu0 0
      %4026 = vmatprep.subr.bf16.mxu0 0
      %4027 = vmatpush1.bf16.xpose.msra.mxu0 0
      %4028 = vmatprep.subr.bf16.mxu0 0
      %4029 = vmatpush1.bf16.xpose.msra.mxu0 0
      %4030 = vmatprep.subr.bf16.mxu0 0
      %4031 = vmatpush1.bf16.xpose.msra.mxu0 0
      %4032 = vmatprep.subr.bf16.mxu0 0
      %4033 = vmatpush1.bf16.xpose.msra.mxu0 0
      %4034 = vmatprep.mubr.bf16.mxu0 0
      %4035 = vmatmul.mubr.bf16.gmra.mrb[0].mxu0 %v3955
      %v4036 = vpop.f32.mrb[0].mxu0
      %v4037 = vadd.f32 %v467, %v4036
      %v4038 = vpop.f32.mrb[0].mxu0
      %v4039 = vpop.f32.mrb[0].mxu0
      %v4040 = vadd.f32 %v467, %v4039
      %v4041 = vpop.f32.mrb[0].mxu0
      %4042 = vmatprep.mubr.bf16.mxu0 0
      %4043 = vmatmul.mubr.bf16.gmra.mrb[0].mxu0 %v3958
      %v4044 = vpop.f32.mrb[0].mxu0
      %v4045 = vadd.f32 %v467, %v4044
      %v4046 = vpop.f32.mrb[0].mxu0
      %v4047 = vpop.f32.mrb[0].mxu0
      %v4048 = vadd.f32 %v467, %v4047
      %v4049 = vpop.f32.mrb[0].mxu0
      %4050 = vmatprep.mubr.bf16.mxu0 0
      %4051 = vmatmul.mubr.bf16.gmra.mrb[0].mxu0 %v3961
      %v4052 = vpop.f32.mrb[0].mxu0
      %v4053 = vadd.f32 %v467, %v4052
      %v4054 = vpop.f32.mrb[0].mxu0
      %v4055 = vpop.f32.mrb[0].mxu0
      %v4056 = vadd.f32 %v467, %v4055
      %v4057 = vpop.f32.mrb[0].mxu0
      %4058 = vmatprep.mubr.bf16.mxu0 0
      %4059 = vmatmul.mubr.bf16.gmra.mrb[0].mxu0 %v3964
      %v4060 = vpop.f32.mrb[0].mxu0
      %v4061 = vadd.f32 %v467, %v4060
      %v4062 = vpop.f32.mrb[0].mxu0
      %v4063 = vpop.f32.mrb[0].mxu0
      %v4064 = vadd.f32 %v467, %v4063
      %v4065 = vpop.f32.mrb[0].mxu0
      %4066 = vmatprep.mubr.bf16.mxu0 0
      %4067 = vmatmul.mubr.bf16.gmra.mrb[0].mxu0 %v3967
      %v4068 = vpop.f32.mrb[0].mxu0
      %v4069 = vadd.f32 %v467, %v4068
      %v4070 = vpop.f32.mrb[0].mxu0
      %v4071 = vpop.f32.mrb[0].mxu0
      %v4072 = vadd.f32 %v467, %v4071
      %v4073 = vpop.f32.mrb[0].mxu0
      %4074 = vmatprep.mubr.bf16.mxu0 0
      %4075 = vmatmul.mubr.bf16.gmra.mrb[0].mxu0 %v3970
      %v4076 = vpop.f32.mrb[0].mxu0
      %v4077 = vadd.f32 %v467, %v4076
      %v4078 = vpop.f32.mrb[0].mxu0
      %v4079 = vpop.f32.mrb[0].mxu0
      %v4080 = vadd.f32 %v467, %v4079
      %v4081 = vpop.f32.mrb[0].mxu0
      %4082 = vmatprep.mubr.bf16.mxu0 0
      %4083 = vmatmul.mubr.bf16.gmra.mrb[0].mxu0 %v3973
      %v4084 = vpop.f32.mrb[0].mxu0
      %v4085 = vadd.f32 %v467, %v4084
      %v4086 = vpop.f32.mrb[0].mxu0
      %v4087 = vpop.f32.mrb[0].mxu0
      %v4088 = vadd.f32 %v467, %v4087
      %v4089 = vpop.f32.mrb[0].mxu0
      %4090 = vmatprep.mubr.bf16.mxu0 0
      %4091 = vmatmul.mubr.bf16.gmra.mrb[0].mxu0 %v3976
      %v4092 = vpop.f32.mrb[0].mxu0
      %v4093 = vadd.f32 %v467, %v4092
      %v4094 = vpop.f32.mrb[0].mxu0
      %v4095 = vpop.f32.mrb[0].mxu0
      %v4096 = vadd.f32 %v467, %v4095
      %v4097 = vpop.f32.mrb[0].mxu0
      %4098 = vdwg.mxu0
      %4099 = vmax.xlane.f32.xlu0 %v4037
      %v4100 = vpop.xlane.xlu0 %4099
      %4101 = vmax.xlane.f32.xlu0 %v4040
      %v4102 = vpop.xlane.xlu0 %4101
      %4103 = vmax.xlane.f32.xlu0 %v4045
      %v4104 = vpop.xlane.xlu0 %4103
      %4105 = vmax.xlane.f32.xlu0 %v4048
      %v4106 = vpop.xlane.xlu0 %4105
      %4107 = vmax.xlane.f32.xlu0 %v4053
      %v4108 = vpop.xlane.xlu0 %4107
      %4109 = vmax.xlane.f32.xlu0 %v4056
      %v4110 = vpop.xlane.xlu0 %4109
      %4111 = vmax.xlane.f32.xlu0 %v4061
      %v4112 = vpop.xlane.xlu0 %4111
      %4113 = vmax.xlane.f32.xlu0 %v4064
      %v4114 = vpop.xlane.xlu0 %4113
      %4115 = vmax.xlane.f32.xlu0 %v4069
      %v4116 = vpop.xlane.xlu0 %4115
      %4117 = vmax.xlane.f32.xlu0 %v4072
      %v4118 = vpop.xlane.xlu0 %4117
      %4119 = vmax.xlane.f32.xlu0 %v4077
      %v4120 = vpop.xlane.xlu0 %4119
      %4121 = vmax.xlane.f32.xlu0 %v4080
      %v4122 = vpop.xlane.xlu0 %4121
      %4123 = vmax.xlane.f32.xlu0 %v4085
      %v4124 = vpop.xlane.xlu0 %4123
      %4125 = vmax.xlane.f32.xlu0 %v4088
      %v4126 = vpop.xlane.xlu0 %4125
      %4127 = vmax.xlane.f32.xlu0 %v4093
      %v4128 = vpop.xlane.xlu0 %4127
      %4129 = vmax.xlane.f32.xlu0 %v4096
      %v4130 = vpop.xlane.xlu0 %4129
      %v4131 = vsub.f32 %v4037, %v4100
      %v4132 = vsub.f32 %v4040, %v4102
      %v4133 = vsub.f32 %v4045, %v4104
      %v4134 = vsub.f32 %v4048, %v4106
      %v4135 = vsub.f32 %v4053, %v4108
      %v4136 = vsub.f32 %v4056, %v4110
      %v4137 = vsub.f32 %v4061, %v4112
      %v4138 = vsub.f32 %v4064, %v4114
      %v4139 = vsub.f32 %v4069, %v4116
      %v4140 = vsub.f32 %v4072, %v4118
      %v4141 = vsub.f32 %v4077, %v4120
      %v4142 = vsub.f32 %v4080, %v4122
      %v4143 = vsub.f32 %v4085, %v4124
      %v4144 = vsub.f32 %v4088, %v4126
      %v4145 = vsub.f32 %v4093, %v4128
      %v4146 = vsub.f32 %v4096, %v4130
      %v4147 = vmul.f32 %v4131, 1.442695
      %v4148 = vpow.pop %v4147
      %v4149 = vmul.f32 %v4132, 1.442695
      %v4150 = vpow.pop %v4149
      %v4151 = vmul.f32 %v4133, 1.442695
      %v4152 = vpow.pop %v4151
      %v4153 = vmul.f32 %v4134, 1.442695
      %v4154 = vpow.pop %v4153
      %v4155 = vmul.f32 %v4135, 1.442695
      %v4156 = vpow.pop %v4155
      %v4157 = vmul.f32 %v4136, 1.442695
      %v4158 = vpow.pop %v4157
      %v4159 = vmul.f32 %v4137, 1.442695
      %v4160 = vpow.pop %v4159
      %v4161 = vmul.f32 %v4138, 1.442695
      %v4162 = vpow.pop %v4161
      %v4163 = vmul.f32 %v4139, 1.442695
      %v4164 = vpow.pop %v4163
      %v4165 = vmul.f32 %v4140, 1.442695
      %v4166 = vpow.pop %v4165
      %v4167 = vmul.f32 %v4141, 1.442695
      %v4168 = vpow.pop %v4167
      %v4169 = vmul.f32 %v4142, 1.442695
      %v4170 = vpow.pop %v4169
      %v4171 = vmul.f32 %v4143, 1.442695
      %v4172 = vpow.pop %v4171
      %v4173 = vmul.f32 %v4144, 1.442695
      %v4174 = vpow.pop %v4173
      %v4175 = vmul.f32 %v4145, 1.442695
      %v4176 = vpow.pop %v4175
      %v4177 = vmul.f32 %v4146, 1.442695
      %v4178 = vpow.pop %v4177
      %4179 = vadd.xlane.f32.xlu0 %v4148
      %v4180 = vpop.xlane.xlu0 %4179
      %4181 = vadd.xlane.f32.xlu0 %v4150
      %v4182 = vpop.xlane.xlu0 %4181
      %4183 = vadd.xlane.f32.xlu0 %v4152
      %v4184 = vpop.xlane.xlu0 %4183
      %4185 = vadd.xlane.f32.xlu0 %v4154
      %v4186 = vpop.xlane.xlu0 %4185
      %4187 = vadd.xlane.f32.xlu0 %v4156
      %v4188 = vpop.xlane.xlu0 %4187
      %4189 = vadd.xlane.f32.xlu0 %v4158
      %v4190 = vpop.xlane.xlu0 %4189
      %4191 = vadd.xlane.f32.xlu0 %v4160
      %v4192 = vpop.xlane.xlu0 %4191
      %4193 = vadd.xlane.f32.xlu0 %v4162
      %v4194 = vpop.xlane.xlu0 %4193
      %4195 = vadd.xlane.f32.xlu0 %v4164
      %v4196 = vpop.xlane.xlu0 %4195
      %4197 = vadd.xlane.f32.xlu0 %v4166
      %v4198 = vpop.xlane.xlu0 %4197
      %4199 = vadd.xlane.f32.xlu0 %v4168
      %v4200 = vpop.xlane.xlu0 %4199
      %4201 = vadd.xlane.f32.xlu0 %v4170
      %v4202 = vpop.xlane.xlu0 %4201
      %4203 = vadd.xlane.f32.xlu0 %v4172
      %v4204 = vpop.xlane.xlu0 %4203
      %4205 = vadd.xlane.f32.xlu0 %v4174
      %v4206 = vpop.xlane.xlu0 %4205
      %4207 = vadd.xlane.f32.xlu0 %v4176
      %v4208 = vpop.xlane.xlu0 %4207
      %4209 = vadd.xlane.f32.xlu0 %v4178
      %v4210 = vpop.xlane.xlu0 %4209
      %v4211 = vrcp.pop %v4180
      %v4212 = vrcp.pop %v4182
      %v4213 = vrcp.pop %v4184
      %v4214 = vrcp.pop %v4186
      %v4215 = vrcp.pop %v4188
      %v4216 = vrcp.pop %v4190
      %v4217 = vrcp.pop %v4192
      %v4218 = vrcp.pop %v4194
      %v4219 = vrcp.pop %v4196
      %v4220 = vrcp.pop %v4198
      %v4221 = vrcp.pop %v4200
      %v4222 = vrcp.pop %v4202
      %v4223 = vrcp.pop %v4204
      %v4224 = vrcp.pop %v4206
      %v4225 = vrcp.pop %v4208
      %v4226 = vrcp.pop %v4210
      %v4227 = vmul.f32 %v4148, %v4211
      %v4228 = vmul.f32 %v4150, %v4212
      %v4229 = vmul.f32 %v4152, %v4213
      %v4230 = vmul.f32 %v4154, %v4214
      %v4231 = vmul.f32 %v4156, %v4215
      %v4232 = vmul.f32 %v4158, %v4216
      %v4233 = vmul.f32 %v4160, %v4217
      %v4234 = vmul.f32 %v4162, %v4218
      %v4235 = vmul.f32 %v4164, %v4219
      %v4236 = vmul.f32 %v4166, %v4220
      %v4237 = vmul.f32 %v4168, %v4221
      %v4238 = vmul.f32 %v4170, %v4222
      %v4239 = vmul.f32 %v4172, %v4223
      %v4240 = vmul.f32 %v4174, %v4224
      %v4241 = vmul.f32 %v4176, %v4225
      %v4242 = vmul.f32 %v4178, %v4226
      %v4243 = vpack.c.bf16 %v4228, %v4227
      %v4244 = vpack.c.bf16 %v4230, %v4229
      %v4245 = vpack.c.bf16 %v4232, %v4231
      %v4246 = vpack.c.bf16 %v4234, %v4233
      %v4247 = vpack.c.bf16 %v4236, %v4235
      %v4248 = vpack.c.bf16 %v4238, %v4237
      %v4249 = vpack.c.bf16 %v4240, %v4239
      %v4250 = vpack.c.bf16 %v4242, %v4241
      %4251 = vrot.lane.b32.xlu0 %v454, 36
      %v4252 = vpop.permute.xlu0 %4251
      %4253 = vrot.lane.b32.xlu0 %v455, 36
      %v4254 = vpop.permute.xlu0 %4253
      %4255 = vrot.lane.b32.xlu0 %v456, 36
      %v4256 = vpop.permute.xlu0 %4255
      %4257 = vrot.lane.b32.xlu0 %v457, 36
      %v4258 = vpop.permute.xlu0 %4257
      %4259 = vrot.lane.b32.xlu0 %v458, 36
      %v4260 = vpop.permute.xlu0 %4259
      %4261 = vrot.lane.b32.xlu0 %v459, 36
      %v4262 = vpop.permute.xlu0 %4261
      %4263 = vrot.lane.b32.xlu0 %v460, 36
      %v4264 = vpop.permute.xlu0 %4263
      %4265 = vrot.lane.b32.xlu0 %v461, 36
      %v4266 = vpop.permute.xlu0 %4265
      %4275 = vmatprep.subr.bf16.mxu0 0
      %4276 = vmatpush1.bf16.msra.mxu0 %v4252
      %4277 = vmatprep.subr.bf16.mxu0 0
      %4278 = vmatpush1.bf16.msra.mxu0 %v4254
      %4279 = vmatprep.subr.bf16.mxu0 0
      %4280 = vmatpush1.bf16.msra.mxu0 %v4256
      %4281 = vmatprep.subr.bf16.mxu0 0
      %4282 = vmatpush1.bf16.msra.mxu0 %v4258
      %4283 = vmatprep.subr.bf16.mxu0 0
      %4284 = vmatpush1.bf16.msra.mxu0 %v4260
      %4285 = vmatprep.subr.bf16.mxu0 0
      %4286 = vmatpush1.bf16.msra.mxu0 %v4262
      %4287 = vmatprep.subr.bf16.mxu0 0
      %4288 = vmatpush1.bf16.msra.mxu0 %v4264
      %4289 = vmatprep.subr.bf16.mxu0 0
      %4290 = vmatpush1.bf16.msra.mxu0 %v4266
      %4291 = vmatprep.subr.bf16.mxu0 0
      %4292 = vmatpush1.bf16.msra.mxu0 0
      %4293 = vmatprep.subr.bf16.mxu0 0
      %4294 = vmatpush1.bf16.msra.mxu0 0
      %4295 = vmatprep.subr.bf16.mxu0 0
      %4296 = vmatpush1.bf16.msra.mxu0 0
      %4297 = vmatprep.subr.bf16.mxu0 0
      %4298 = vmatpush1.bf16.msra.mxu0 0
      %4299 = vmatprep.subr.bf16.mxu0 0
      %4300 = vmatpush1.bf16.msra.mxu0 0
      %4301 = vmatprep.subr.bf16.mxu0 0
      %4302 = vmatpush1.bf16.msra.mxu0 0
      %4303 = vmatprep.subr.bf16.mxu0 0
      %4304 = vmatpush1.bf16.msra.mxu0 0
      %4305 = vmatprep.subr.bf16.mxu0 0
      %4306 = vmatpush1.bf16.msra.mxu0 0
      %4307 = vmatprep.mubr.bf16.mxu0 0
      %4308 = vmatmul.mubr.bf16.gmra.mrb[0].mxu0 %v4243
      %v4309 = vpop.f32.mrb[0].mxu0
      %v4310 = vadd.f32 0.0, %v4309
      %v4311 = vpop.f32.mrb[0].mxu0
      %v4312 = vpop.f32.mrb[0].mxu0
      %v4313 = vadd.f32 0.0, %v4312
      %v4314 = vpop.f32.mrb[0].mxu0
      %4315 = vmatprep.mubr.bf16.mxu0 0
      %4316 = vmatmul.mubr.bf16.gmra.mrb[0].mxu0 %v4244
      %v4317 = vpop.f32.mrb[0].mxu0
      %v4318 = vadd.f32 0.0, %v4317
      %v4319 = vpop.f32.mrb[0].mxu0
      %v4320 = vpop.f32.mrb[0].mxu0
      %v4321 = vadd.f32 0.0, %v4320
      %v4322 = vpop.f32.mrb[0].mxu0
      %4323 = vmatprep.mubr.bf16.mxu0 0
      %4324 = vmatmul.mubr.bf16.gmra.mrb[0].mxu0 %v4245
      %v4325 = vpop.f32.mrb[0].mxu0
      %v4326 = vadd.f32 0.0, %v4325
      %v4327 = vpop.f32.mrb[0].mxu0
      %v4328 = vpop.f32.mrb[0].mxu0
      %v4329 = vadd.f32 0.0, %v4328
      %v4330 = vpop.f32.mrb[0].mxu0
      %4331 = vmatprep.mubr.bf16.mxu0 0
      %4332 = vmatmul.mubr.bf16.gmra.mrb[0].mxu0 %v4246
      %v4333 = vpop.f32.mrb[0].mxu0
      %v4334 = vadd.f32 0.0, %v4333
      %v4335 = vpop.f32.mrb[0].mxu0
      %v4336 = vpop.f32.mrb[0].mxu0
      %v4337 = vadd.f32 0.0, %v4336
      %v4338 = vpop.f32.mrb[0].mxu0
      %4339 = vmatprep.mubr.bf16.mxu0 0
      %4340 = vmatmul.mubr.bf16.gmra.mrb[0].mxu0 %v4247
      %v4341 = vpop.f32.mrb[0].mxu0
      %v4342 = vadd.f32 0.0, %v4341
      %v4343 = vpop.f32.mrb[0].mxu0
      %v4344 = vpop.f32.mrb[0].mxu0
      %v4345 = vadd.f32 0.0, %v4344
      %v4346 = vpop.f32.mrb[0].mxu0
      %4347 = vmatprep.mubr.bf16.mxu0 0
      %4348 = vmatmul.mubr.bf16.gmra.mrb[0].mxu0 %v4248
      %v4349 = vpop.f32.mrb[0].mxu0
      %v4350 = vadd.f32 0.0, %v4349
      %v4351 = vpop.f32.mrb[0].mxu0
      %v4352 = vpop.f32.mrb[0].mxu0
      %v4353 = vadd.f32 0.0, %v4352
      %v4354 = vpop.f32.mrb[0].mxu0
      %4355 = vmatprep.mubr.bf16.mxu0 0
      %4356 = vmatmul.mubr.bf16.gmra.mrb[0].mxu0 %v4249
      %v4357 = vpop.f32.mrb[0].mxu0
      %v4358 = vadd.f32 0.0, %v4357
      %v4359 = vpop.f32.mrb[0].mxu0
      %v4360 = vpop.f32.mrb[0].mxu0
      %v4361 = vadd.f32 0.0, %v4360
      %v4362 = vpop.f32.mrb[0].mxu0
      %4363 = vmatprep.mubr.bf16.mxu0 0
      %4364 = vmatmul.mubr.bf16.gmra.mrb[0].mxu0 %v4250
      %v4365 = vpop.f32.mrb[0].mxu0
      %v4366 = vadd.f32 0.0, %v4365
      %v4367 = vpop.f32.mrb[0].mxu0
      %v4368 = vpop.f32.mrb[0].mxu0
      %v4369 = vadd.f32 0.0, %v4368
      %v4370 = vpop.f32.mrb[0].mxu0
      %4371 = vdwg.mxu0
      %v4372 = vpack.c.bf16 %v4313, %v4310
      %v4373 = vpack.c.bf16 %v4321, %v4318
      %v4374 = vpack.c.bf16 %v4329, %v4326
      %v4375 = vpack.c.bf16 %v4337, %v4334
      %v4376 = vpack.c.bf16 %v4345, %v4342
      %v4377 = vpack.c.bf16 %v4353, %v4350
      %v4378 = vpack.c.bf16 %v4361, %v4358
      %v4379 = vpack.c.bf16 %v4369, %v4366
      %4388 = vrot.lane.b32.xlu0 %v4372, 28
      %v4389 = vpop.permute.xlu0 %4388
      %4390 = vrot.lane.b32.xlu0 %v4373, 28
      %v4391 = vpop.permute.xlu0 %4390
      %4392 = vrot.lane.b32.xlu0 %v4374, 28
      %v4393 = vpop.permute.xlu0 %4392
      %4394 = vrot.lane.b32.xlu0 %v4375, 28
      %v4395 = vpop.permute.xlu0 %4394
      %4396 = vrot.lane.b32.xlu0 %v4376, 28
      %v4397 = vpop.permute.xlu0 %4396
      %4398 = vrot.lane.b32.xlu0 %v4377, 28
      %v4399 = vpop.permute.xlu0 %4398
      %4400 = vrot.lane.b32.xlu0 %v4378, 28
      %v4401 = vpop.permute.xlu0 %4400
      %4402 = vrot.lane.b32.xlu0 %v4379, 28
      %v4403 = vpop.permute.xlu0 %4402
      %vm4412 = vcmask 261344
      %4413 = vst.msk [vmem:[#allocation2] sm:$0xff] %vm4412, %v4389
      %4414 = vst.msk [vmem:[#allocation2 + $0x8] sm:$0xff] %vm4412, %v4391
      %4415 = vst.msk [vmem:[#allocation2 + $0x10] sm:$0xff] %vm4412, %v4393
      %4416 = vst.msk [vmem:[#allocation2 + $0x18] sm:$0xff] %vm4412, %v4395
      %4417 = vst.msk [vmem:[#allocation2 + $0x20] sm:$0xff] %vm4412, %v4397
      %4418 = vst.msk [vmem:[#allocation2 + $0x28] sm:$0xff] %vm4412, %v4399
      %4419 = vst.msk [vmem:[#allocation2 + $0x30] sm:$0xff] %vm4412, %v4401
      %4420 = vst.msk [vmem:[#allocation2 + $0x38] sm:$0xff] %vm4412, %v4403
      %v4421 = vld [vmem:[#allocation2] sm:$0xff]
      %v4422 = vld [vmem:[#allocation2 + $0x8] sm:$0xff]
      %v4423 = vld [vmem:[#allocation2 + $0x10] sm:$0xff]
      %v4424 = vld [vmem:[#allocation2 + $0x18] sm:$0xff]
      %v4425 = vld [vmem:[#allocation2 + $0x20] sm:$0xff]
      %v4426 = vld [vmem:[#allocation2 + $0x28] sm:$0xff]
      %v4427 = vld [vmem:[#allocation2 + $0x30] sm:$0xff]
      %v4428 = vld [vmem:[#allocation2 + $0x38] sm:$0xff]
      %v4429 = vld [vmem:[%s3] sm:$0xf]
      %v4430 = vld [vmem:[%s3 + $0x4] sm:$0xf]
      %v4431 = vld [vmem:[%s3 + $0x8] sm:$0xf]
      %v4432 = vld [vmem:[%s3 + $0xc] sm:$0xf]
      %v4433 = vld [vmem:[%s4] sm:$0x1]
      %v4435 = vlaneseq
      %v4436 = vshrl.u32 %v4435, 7
      %v4437 = vsub.s32 0, %v4436
      %v4438 = vrot.slane %v4433, %v4437
      %v4444 = vunpack.c.l.b16 %v4429
      %v4445 = vunpack.c.l.b16 %v4430
      %v4446 = vunpack.c.l.b16 %v4431
      %v4447 = vunpack.c.l.b16 %v4432
      %v4448 = vpack.c.b16 %v4445, %v4444
      %v4449 = vpack.c.b16 %v4447, %v4446
      %v4453 = vsel %vm332, %v4421, 0
      %v4456 = vsel %vm332, %v4422, 0
      %v4459 = vsel %vm332, %v4423, 0
      %v4462 = vsel %vm332, %v4424, 0
      %v4465 = vsel %vm332, %v4425, 0
      %v4468 = vsel %vm332, %v4426, 0
      %v4471 = vsel %vm332, %v4427, 0
      %v4474 = vsel %vm332, %v4428, 0
      %4476 = vmatprep.subr.bf16.mxu0 0
      %4477 = vmatpush1.bf16.msra.mxu0 %v4448
      %4478 = vmatprep.subr.bf16.mxu0 0
      %4479 = vmatpush1.bf16.msra.mxu0 %v4449
      %4480 = vmatprep.subr.bf16.mxu0 0
      %4481 = vmatpush1.bf16.msra.mxu0 0
      %4482 = vmatprep.subr.bf16.mxu0 0
      %4483 = vmatpush1.bf16.msra.mxu0 0
      %4484 = vmatprep.subr.bf16.mxu0 0
      %4485 = vmatpush1.bf16.msra.mxu0 0
      %4486 = vmatprep.subr.bf16.mxu0 0
      %4487 = vmatpush1.bf16.msra.mxu0 0
      %4488 = vmatprep.subr.bf16.mxu0 0
      %4489 = vmatpush1.bf16.msra.mxu0 0
      %4490 = vmatprep.subr.bf16.mxu0 0
      %4491 = vmatpush1.bf16.msra.mxu0 0
      %4492 = vmatprep.subr.bf16.mxu0 0
      %4493 = vmatpush1.bf16.msra.mxu0 0
      %4494 = vmatprep.subr.bf16.mxu0 0
      %4495 = vmatpush1.bf16.msra.mxu0 0
      %4496 = vmatprep.subr.bf16.mxu0 0
      %4497 = vmatpush1.bf16.msra.mxu0 0
      %4498 = vmatprep.subr.bf16.mxu0 0
      %4499 = vmatpush1.bf16.msra.mxu0 0
      %4500 = vmatprep.subr.bf16.mxu0 0
      %4501 = vmatpush1.bf16.msra.mxu0 0
      %4502 = vmatprep.subr.bf16.mxu0 0
      %4503 = vmatpush1.bf16.msra.mxu0 0
      %4504 = vmatprep.subr.bf16.mxu0 0
      %4505 = vmatpush1.bf16.msra.mxu0 0
      %4506 = vmatprep.subr.bf16.mxu0 0
      %4507 = vmatpush1.bf16.msra.mxu0 0
      %4508 = vmatprep.mubr.bf16.mxu0 0
      %4509 = vmatmul.mubr.bf16.gmra.mrb[0].mxu0 %v4453
      %v4510 = vpop.f32.mrb[0].mxu0
      %v4511 = vadd.f32 %v4438, %v4510
      %v4512 = vpop.f32.mrb[0].mxu0
      %v4513 = vpop.f32.mrb[0].mxu0
      %v4514 = vadd.f32 %v4438, %v4513
      %v4515 = vpop.f32.mrb[0].mxu0
      %4516 = vmatprep.mubr.bf16.mxu0 0
      %4517 = vmatmul.mubr.bf16.gmra.mrb[0].mxu0 %v4456
      %v4518 = vpop.f32.mrb[0].mxu0
      %v4519 = vadd.f32 %v4438, %v4518
      %v4520 = vpop.f32.mrb[0].mxu0
      %v4521 = vpop.f32.mrb[0].mxu0
      %v4522 = vadd.f32 %v4438, %v4521
      %v4523 = vpop.f32.mrb[0].mxu0
      %4524 = vmatprep.mubr.bf16.mxu0 0
      %4525 = vmatmul.mubr.bf16.gmra.mrb[0].mxu0 %v4459
      %v4526 = vpop.f32.mrb[0].mxu0
      %v4527 = vadd.f32 %v4438, %v4526
      %v4528 = vpop.f32.mrb[0].mxu0
      %v4529 = vpop.f32.mrb[0].mxu0
      %v4530 = vadd.f32 %v4438, %v4529
      %v4531 = vpop.f32.mrb[0].mxu0
      %4532 = vmatprep.mubr.bf16.mxu0 0
      %4533 = vmatmul.mubr.bf16.gmra.mrb[0].mxu0 %v4462
      %v4534 = vpop.f32.mrb[0].mxu0
      %v4535 = vadd.f32 %v4438, %v4534
      %v4536 = vpop.f32.mrb[0].mxu0
      %v4537 = vpop.f32.mrb[0].mxu0
      %v4538 = vadd.f32 %v4438, %v4537
      %v4539 = vpop.f32.mrb[0].mxu0
      %4540 = vmatprep.mubr.bf16.mxu0 0
      %4541 = vmatmul.mubr.bf16.gmra.mrb[0].mxu0 %v4465
      %v4542 = vpop.f32.mrb[0].mxu0
      %v4543 = vadd.f32 %v4438, %v4542
      %v4544 = vpop.f32.mrb[0].mxu0
      %v4545 = vpop.f32.mrb[0].mxu0
      %v4546 = vadd.f32 %v4438, %v4545
      %v4547 = vpop.f32.mrb[0].mxu0
      %4548 = vmatprep.mubr.bf16.mxu0 0
      %4549 = vmatmul.mubr.bf16.gmra.mrb[0].mxu0 %v4468
      %v4550 = vpop.f32.mrb[0].mxu0
      %v4551 = vadd.f32 %v4438, %v4550
      %v4552 = vpop.f32.mrb[0].mxu0
      %v4553 = vpop.f32.mrb[0].mxu0
      %v4554 = vadd.f32 %v4438, %v4553
      %v4555 = vpop.f32.mrb[0].mxu0
      %4556 = vmatprep.mubr.bf16.mxu0 0
      %4557 = vmatmul.mubr.bf16.gmra.mrb[0].mxu0 %v4471
      %v4558 = vpop.f32.mrb[0].mxu0
      %v4559 = vadd.f32 %v4438, %v4558
      %v4560 = vpop.f32.mrb[0].mxu0
      %v4561 = vpop.f32.mrb[0].mxu0
      %v4562 = vadd.f32 %v4438, %v4561
      %v4563 = vpop.f32.mrb[0].mxu0
      %4564 = vmatprep.mubr.bf16.mxu0 0
      %4565 = vmatmul.mubr.bf16.gmra.mrb[0].mxu0 %v4474
      %v4566 = vpop.f32.mrb[0].mxu0
      %v4567 = vadd.f32 %v4438, %v4566
      %v4568 = vpop.f32.mrb[0].mxu0
      %v4569 = vpop.f32.mrb[0].mxu0
      %v4570 = vadd.f32 %v4438, %v4569
      %v4571 = vpop.f32.mrb[0].mxu0
      %4572 = vdwg.mxu0
      %4573 = vst.msk [vmem:[%s251] sm:$0xff] %vm332, %v4511
      %4574 = vst.msk [vmem:[%s251 + $0x8] sm:$0xff] %vm332, %v4514
      %4575 = vst.msk [vmem:[%s251 + $0x10] sm:$0xff] %vm332, %v4519
      %4576 = vst.msk [vmem:[%s251 + $0x18] sm:$0xff] %vm332, %v4522
      %4577 = vst.msk [vmem:[%s251 + $0x20] sm:$0xff] %vm332, %v4527
      %4578 = vst.msk [vmem:[%s251 + $0x28] sm:$0xff] %vm332, %v4530
      %4579 = vst.msk [vmem:[%s251 + $0x30] sm:$0xff] %vm332, %v4535
      %4580 = vst.msk [vmem:[%s251 + $0x38] sm:$0xff] %vm332, %v4538
      %4581 = vst.msk [vmem:[%s251 + $0x40] sm:$0xff] %vm332, %v4543
      %4582 = vst.msk [vmem:[%s251 + $0x48] sm:$0xff] %vm332, %v4546
      %4583 = vst.msk [vmem:[%s251 + $0x50] sm:$0xff] %vm332, %v4551
      %4584 = vst.msk [vmem:[%s251 + $0x58] sm:$0xff] %vm332, %v4554
      %4585 = vst.msk [vmem:[%s251 + $0x60] sm:$0xff] %vm332, %v4559
      %4586 = vst.msk [vmem:[%s251 + $0x68] sm:$0xff] %vm332, %v4562
      %4587 = vst.msk [vmem:[%s251 + $0x70] sm:$0xff] %vm332, %v4567
      %4588 = vst.msk [vmem:[%s251 + $0x78] sm:$0xff] %vm332, %v4570
      %p4589 = scmp.lt.s32.totalorder %s17, 1
      %s4590 = scalar_select %p4589, %s17, 1
      %s4591 = smul.addr %s4590, 16
      %s4592 = smul.addr %s4591, 8
      %s4593 = scalar_lea.vmem %s6, %s4592
      // Predicated region
      $region45: #{tpu_custom_call.1} parent=43 // pred_check
        %p4594 = pneg %p166
      $region46: #{tpu_custom_call.1} parent=43 // pred_check_branch
        %4596 = sbr.rel (%p4594) target = $region48
      $region47: #{tpu_custom_call.1} parent=43 // pred_region
        _
      $region48: #{tpu_custom_call.1} parent=43 // pred_fallthru
        _
    $region44: #{tpu_custom_call.1} parent=5 // pred_fallthru
      _
    %p4597 = scmp.le.s32.totalorder 2, %s12
    // Predicated region
    $region49: #{tpu_custom_call.1} parent=5 // pred_check
      %p4598 = pneg %p4597
    $region50: #{tpu_custom_call.1} parent=5 // pred_check_branch
      %4600 = sbr.rel (%p4598) target = $region52
    $region51: #{tpu_custom_call.1} parent=5 // pred_region
      %s4601 = ssub.s32 %s12, 2
      // Predicated region
      $region53: #{tpu_custom_call.1} parent=51 // pred_check
        %p4602 = pneg %p172
      $region54: #{tpu_custom_call.1} parent=51 // pred_check_branch
        %4604 = sbr.rel (%p4602) target = $region56
      $region55: #{tpu_custom_call.1} parent=51 // pred_region
        %p4605 = scmp.lt.s32.totalorder %s18, 1
        %s4606 = scalar_select %p4605, %s18, 1
        %s4607 = smul.addr %s4606, 16
        %s4608 = smul.addr %s4607, 8
        %s4609 = scalar_lea.vmem %s6, %s4608
      $region56: #{tpu_custom_call.1} parent=51 // pred_fallthru
        _
    $region52: #{tpu_custom_call.1} parent=5 // pred_fallthru
      _
  $region6: #{tpu_custom_call.1} parent=0 // loop_footer
    %s16 = sadd.s32 1, %s12
  $region7: #{tpu_custom_call.1} parent=0 // loop_footer_branch
    %11 = sbr.rel target = $region3
  $region8: #{tpu_custom_call.1} parent=0 // loop_exit
    _

</llo_original>
